<compile_context>
chip_gen: v7x
topology: tpu7x:2x2x1
jax: 0.10.0
libtpu: 0.0.40
codegen_flags: <defaults>
</compile_context>

<pallas_src>
import functools

import jax
import jax.numpy as jnp
from jax.experimental import pallas as pl
from jax.experimental.pallas import tpu as pltpu


def _round_up(x, m):
    return (x + m - 1) // m * m


def _vmem_limit_bytes():
    cap = 64 * 1024 * 1024                       # conservative default (v7x per-TC)
    try:
        info = pltpu.get_tpu_info()
        cap = getattr(info, "vmem_capacity_bytes", None) or cap
    except Exception:
        pass
    return int(min(cap * 3 // 4, 112 * 1024 * 1024))


def _halo_block(d_halo):
    """Smallest power-of-two block (>=8 rows) covering the largest tap shift."""
    tb = 8
    while tb < d_halo:
        tb *= 2
    return tb


def _pick_ts(cin_p, c_pad, taps, d_halo, m_dense, budget):
    """Largest power-of-two row tile whose per-pass footprint fits the budget."""
    lane_cin = _round_up(cin_p, 128)
    tb = _halo_block(d_halo)

    def footprint(ts):
        pass1 = (2 * ts * lane_cin * 2            # x main view (bf16, double-buffered)
                 + 2 * tb * lane_cin * 2          # x halo view
                 + 2 * taps * _round_up(cin_p, 16) * c_pad * 2   # weight (resident)
                 + 2 * ts * 128 * 4               # valid-row mask (lane-padded)
                 + 2 * ts * c_pad * 2             # y out (bf16)
                 + (ts + tb) * lane_cin * 2       # stitched window value
                 + 2 * ts * c_pad * 4)            # f32 accumulator + dot temporaries
        pass2 = (2 * ts * c_pad * 2               # y in (bf16)
                 + 2 * ts * c_pad * 4             # out (f32)
                 + ts * c_pad * 4)                # temporaries
        return max(pass1, pass2)

    ts = 4096
    while ts > 128 and footprint(ts) > budget:
        ts //= 2
    while ts > 128 and ts >= m_dense:             # don't oversize tiles on tiny problems
        ts //= 2
    return max(ts, 128, tb)                       # halo must fit in one extra block


# ---------------------------------------------------------------------------
# Pass 1: in-kernel im2col-free conv (per-tap MXU matmuls) + masked channel stats
# ---------------------------------------------------------------------------
def _conv_stats_kernel(xa_ref, xb_ref, w_ref, mask_ref, y_ref, sum_ref, sumsq_ref,
                       *, tap_offsets, ts):
    # xa_ref:   [TS, Cin]          bf16 main input row-tile (flattened padded NHWC)
    # xb_ref:   [TB, Cin]          bf16 halo rows (the next TB flat rows)
    # w_ref:    [taps, Cin, Cpad]  bf16 per-tap weight (resident)
    # mask_ref: [TS, 1]            f32  1.0 on valid conv-output rows, else 0.0
    # y_ref:    [TS, Cpad]         bf16 conv output tile
    # sum_ref / sumsq_ref: [1, 1, Cpad] f32 per-core resident accumulators
    r = pl.program_id(1)

    # Stitch main tile + halo; each tap is a static sublane slice (no reshape).
    window = jnp.concatenate([xa_ref[...], xb_ref[...]], axis=0)

    acc = None
    for t, d in enumerate(tap_offsets):
        a = window[d:d + ts, :]
        part = jnp.dot(a, w_ref[t], preferred_element_type=jnp.float32)
        acc = part if acc is None else acc + part

    # bf16 round trip for the conv intermediate (halves y HBM traffic).
    y_ref[...] = acc.astype(y_ref.dtype)

    @pl.when(r == 0)
    def _init():
        sum_ref[...] = jnp.zeros_like(sum_ref)
        sumsq_ref[...] = jnp.zeros_like(sumsq_ref)

    # Stats from the f32 accumulator, masked to valid (non-padding) rows.
    ym = acc * mask_ref[...]
    sum_ref[...] += jnp.sum(ym, axis=0, keepdims=True)[None]
    sumsq_ref[...] += jnp.sum(ym * acc, axis=0, keepdims=True)[None]


# ---------------------------------------------------------------------------
# Pass 2: pure streaming scale/shift + ReLU (scale/shift hoisted out of the loop)
# ---------------------------------------------------------------------------
def _bn_relu_kernel(scale_ref, shift_ref, y_ref, o_ref):
    y = y_ref[...].astype(jnp.float32)
    o_ref[...] = jnp.maximum(y * scale_ref[...] + shift_ref[...], 0.0).astype(o_ref.dtype)


# ---------------------------------------------------------------------------
# Host wrapper
# ---------------------------------------------------------------------------
def conv_block_forward(x, conv_w, conv_b, bn_gamma, bn_beta, *,
                       stride=1, padding=1, eps=1e-5, ts=None):
    """ConvBlock forward. x: [N, Cin, H, W] (NCHW). Returns [N, Cout, Ho, Wo] f32."""
    n, c_in, h, w = x.shape
    c_out, _, kh, kw = conv_w.shape
    st, p = stride, padding

    # Conv bias is exactly cancelled by training-mode BN (mean shift, var unchanged).
    del conv_b

    hp, wp = h + 2 * p, w + 2 * p
    ho = (h + 2 * p - kh) // st + 1
    wo = (w + 2 * p - kw) // st + 1

    cin_p = _round_up(c_in, 8)            # sublane-aligned contraction dim
    c_pad = _round_up(c_out, 128)         # lane-dense output channels
    taps = kh * kw
    d_halo = (kh - 1) * wp + (kw - 1)     # largest flat-row tap shift

    vmem_limit = _vmem_limit_bytes()
    if ts is None:
        ts = _pick_ts(cin_p, c_pad, taps, d_halo, n * hp * wp,
                      budget=int(vmem_limit * 0.7))
    tb = _halo_block(d_halo)
    ts = max(ts, tb)
    assert ts & (ts - 1) == 0 and ts % tb == 0, "tile size must be a power of two >= halo"

    # ---- host prep: ONE light pass over the input (no 9x im2col blow-up) ----
    x_nhwc = jnp.transpose(x.astype(jnp.bfloat16), (0, 2, 3, 1))
    x_pad = jnp.pad(x_nhwc, ((0, 0), (p, p), (p, p), (0, cin_p - c_in)))
    m_dense = n * hp * wp
    x_flat = x_pad.reshape(m_dense, cin_p)

    n_tiles = _round_up(pl.cdiv(m_dense, ts), 2)   # even -> one half per TC on v7x
    n_half = n_tiles // 2
    m_pad = n_tiles * ts
    x_flat = jnp.pad(x_flat, ((0, m_pad + ts - m_dense), (0, 0)))   # +TS tail for the halo view

    # Weight: [taps, Cin, Cpad] bf16; tap t = (i, j) has flat-row shift i*Wp + j.
    w_mat = jnp.transpose(conv_w, (2, 3, 1, 0)).reshape(taps, c_in, c_out)
    w_mat = jnp.pad(w_mat, ((0, 0), (0, cin_p - c_in), (0, c_pad - c_out)))
    w_mat = w_mat.astype(jnp.bfloat16)
    tap_offsets = tuple(i * wp + j for i in range(kh) for j in range(kw))

    # Valid-row mask over the dense (padded-layout) output rows.
    hi = jnp.arange(hp)
    wi = jnp.arange(wp)
    vh = (hi % st == 0) & (hi < (ho - 1) * st + 1)
    vw = (wi % st == 0) & (wi < (wo - 1) * st + 1)
    mask2d = (vh[:, None] & vw[None, :]).astype(jnp.float32)
    mask = jnp.tile(mask2d.reshape(1, hp * wp), (n, 1)).reshape(m_dense, 1)
    mask = jnp.pad(mask, ((0, m_pad - m_dense), (0, 0)))

    tsb = ts // tb

    # ---- pass 1: conv (shift-and-accumulate matmuls) + per-core channel stats ----
    y_flat, ch_sum, ch_sumsq = pl.pallas_call(
        functools.partial(_conv_stats_kernel, tap_offsets=tap_offsets, ts=ts),
        out_shape=(jax.ShapeDtypeStruct((m_pad, c_pad), jnp.bfloat16),
                   jax.ShapeDtypeStruct((2, 1, c_pad), jnp.float32),
                   jax.ShapeDtypeStruct((2, 1, c_pad), jnp.float32)),
        grid_spec=pltpu.PrefetchScalarGridSpec(
            num_scalar_prefetch=0,
            grid=(2, n_half),
            in_specs=[
                pl.BlockSpec((ts, cin_p), lambda c, r: (c * n_half + r, 0)),
                pl.BlockSpec((tb, cin_p), lambda c, r: ((c * n_half + r + 1) * tsb, 0)),
                pl.BlockSpec((taps, cin_p, c_pad), lambda c, r: (0, 0, 0)),
                pl.BlockSpec((ts, 1), lambda c, r: (c * n_half + r, 0)),
            ],
            out_specs=(
                pl.BlockSpec((ts, c_pad), lambda c, r: (c * n_half + r, 0)),
                pl.BlockSpec((1, 1, c_pad), lambda c, r: (c, 0, 0)),
                pl.BlockSpec((1, 1, c_pad), lambda c, r: (c, 0, 0)),
            )),
        compiler_params=pltpu.CompilerParams(
            dimension_semantics=("parallel", "arbitrary"),
            vmem_limit_bytes=vmem_limit),
    )(x_flat, x_flat, w_mat, mask)

    # ---- tiny host epilogue: fold per-core partial stats into scale/shift once ----
    m_valid = float(n * ho * wo)
    mean = ch_sum.sum(axis=0) / m_valid                              # [1, Cpad]
    var = jnp.maximum(ch_sumsq.sum(axis=0) / m_valid - mean * mean, 0.0)
    inv_std = jax.lax.rsqrt(var + eps)
    gamma_row = jnp.pad(bn_gamma.astype(jnp.float32).reshape(1, c_out),
                        ((0, 0), (0, c_pad - c_out)))
    beta_row = jnp.pad(bn_beta.astype(jnp.float32).reshape(1, c_out),
                       ((0, 0), (0, c_pad - c_out)))
    scale = gamma_row * inv_std
    shift = beta_row - mean * scale

    # ---- pass 2: streaming BN + ReLU ----
    out_flat = pl.pallas_call(
        _bn_relu_kernel,
        out_shape=jax.ShapeDtypeStruct((m_pad, c_pad), jnp.float32),
        grid_spec=pltpu.PrefetchScalarGridSpec(
            num_scalar_prefetch=0,
            grid=(n_tiles,),
            in_specs=[
                pl.BlockSpec((1, c_pad), lambda i: (0, 0)),
                pl.BlockSpec((1, c_pad), lambda i: (0, 0)),
                pl.BlockSpec((ts, c_pad), lambda i: (i, 0)),
            ],
            out_specs=pl.BlockSpec((ts, c_pad), lambda i: (i, 0))),
        compiler_params=pltpu.CompilerParams(
            dimension_semantics=("parallel",),
            vmem_limit_bytes=vmem_limit),
    )(scale, shift, y_flat)

    # TODO(synk): keep NHWC (and bf16) and fuse this un-pad + transpose into the
    # consumer to save an HBM round trip; NCHW kept to match the PyTorch module.
    out = out_flat[:m_dense].reshape(n, hp, wp, c_pad)
    out = out[:, :(ho - 1) * st + 1:st, :(wo - 1) * st + 1:st, :c_out]
    return jnp.transpose(out, (0, 3, 1, 2))


# ---------------------------------------------------------------------------
# Pure-JAX reference
# ---------------------------------------------------------------------------
def _reference(x, conv_w, conv_b, bn_gamma, bn_beta, *, stride=1, padding=1, eps=1e-5):
    y = jax.lax.conv_general_dilated(
        x, conv_w, window_strides=(stride, stride),
        padding=[(padding, padding), (padding, padding)],
        dimension_numbers=("NCHW", "OIHW", "NCHW"))
    y = y + conv_b.reshape(1, -1, 1, 1)
    mean = jnp.mean(y, axis=(0, 2, 3), keepdims=True)
    var = jnp.mean((y - mean) ** 2, axis=(0, 2, 3), keepdims=True)
    y = (y - mean) * jax.lax.rsqrt(var + eps)
    y = y * bn_gamma.reshape(1, -1, 1, 1) + bn_beta.reshape(1, -1, 1, 1)
    return jnp.maximum(y, 0.0)


if __name__ == "__main__":
    key = jax.random.PRNGKey(0)
    k_x, k_w, k_b = jax.random.split(key, 3)

    # ConvBlock(in_channels=4, out_channels=8, kernel_size=3, padding=1)
    N, C_IN, H, W = 2, 4, 16, 16
    C_OUT, KH, KW = 8, 3, 3

    x = jax.random.normal(k_x, (N, C_IN, H, W), dtype=jnp.float32)
    conv_w = jax.random.normal(k_w, (C_OUT, C_IN, KH, KW), dtype=jnp.float32) * 0.1
    conv_b = jax.random.normal(k_b, (C_OUT,), dtype=jnp.float32) * 0.1
    bn_gamma = jnp.ones((C_OUT,), dtype=jnp.float32)    # PyTorch BatchNorm2d default init
    bn_beta = jnp.zeros((C_OUT,), dtype=jnp.float32)

    ref = _reference(x, conv_w, conv_b, bn_gamma, bn_beta, stride=1, padding=1)

    # Small explicit tile (4 M-tiles, 2 per core-half): exercises halo stitching
    # and multi-tile masked-stats accumulation.
    out = conv_block_forward(x, conv_w, conv_b, bn_gamma, bn_beta,
                             stride=1, padding=1, ts=256)
    jax.block_until_ready(out)
    assert out.shape == (N, C_OUT, H, W)
    assert jnp.allclose(out, ref, rtol=2e-2, atol=2e-2)

    # Default (auto-sized) tile path.
    out2 = conv_block_forward(x, conv_w, conv_b, bn_gamma, bn_beta,
                              stride=1, padding=1)
    jax.block_until_ready(out2)
    assert jnp.allclose(out2, ref, rtol=2e-2, atol=2e-2)

    print("KERNEL_OK")
</pallas_src>

<mosaic_0001>
module attributes {stable_mosaic.version = 11 : i64} {
  func.func @_conv_stats_kernel(%arg0: i32, %arg1: i32, %arg2: memref<256x8xbf16, #tpu.memory_space<vmem>>, %arg3: memref<64x8xbf16, #tpu.memory_space<vmem>>, %arg4: memref<9x8x128xbf16, #tpu.memory_space<vmem>>, %arg5: memref<256x1xf32, #tpu.memory_space<vmem>>, %arg6: memref<256x128xbf16, #tpu.memory_space<vmem>>, %arg7: memref<1x1x128xf32, #tpu.memory_space<vmem>>, %arg8: memref<1x1x128xf32, #tpu.memory_space<vmem>>) attributes {dimension_semantics = [#tpu.dimension_semantics<parallel>, #tpu.dimension_semantics<arbitrary>], iteration_bounds = array<i64: 2, 2>, scalar_prefetch = 0 : i64, scratch_operands = 0 : i64, tpu.core_type = #tpu.core_type<tc>, window_params = [{transform_indices = @transform_0, window_bounds = array<i64: 256, 8>}, {transform_indices = @transform_1, window_bounds = array<i64: 64, 8>}, {pipeline_mode = #tpu.pipeline_mode<synchronous>, transform_indices = @transform_2, window_bounds = array<i64: 9, 8, 128>}, {transform_indices = @transform_3, window_bounds = array<i64: 256, 1>}, {transform_indices = @transform_4, window_bounds = array<i64: 256, 128>}, {transform_indices = @transform_5, window_bounds = array<i64: 1, 1, 128>}, {transform_indices = @transform_6, window_bounds = array<i64: 1, 1, 128>}]} {
    %c0 = arith.constant 0 : index
    %c0_0 = arith.constant 0 : index
    %0 = vector.load %arg2[%c0, %c0_0] : memref<256x8xbf16, #tpu.memory_space<vmem>>, vector<256x8xbf16>
    %c0_1 = arith.constant 0 : index
    %c0_2 = arith.constant 0 : index
    %1 = vector.load %arg3[%c0_1, %c0_2] : memref<64x8xbf16, #tpu.memory_space<vmem>>, vector<64x8xbf16>
    %2 = tpu.concatenate %0, %1 in 0 : vector<256x8xbf16>, vector<64x8xbf16> -> vector<320x8xbf16>
    %3 = vector.extract_strided_slice %2 {offsets = [0, 0], sizes = [256, 8], strides = [1, 1]} : vector<320x8xbf16> to vector<256x8xbf16>
    %c0_3 = arith.constant 0 : index
    %c0_4 = arith.constant 0 : index
    %c0_5 = arith.constant 0 : index
    %4 = vector.load %arg4[%c0_3, %c0_4, %c0_5] : memref<9x8x128xbf16, #tpu.memory_space<vmem>>, vector<1x8x128xbf16>
    %5 = vector.shape_cast %4 : vector<1x8x128xbf16> to vector<8x128xbf16>
    %cst = arith.constant dense<0.000000e+00> : vector<256x128xf32>
    %6 = tpu.matmul %3, %5, %cst {dimension_numbers = #tpu.dot_dimension_numbers<[1], [0], [0], [1], [0, 0, 1, 1], [], []>} : vector<256x8xbf16>, vector<8x128xbf16>, vector<256x128xf32> -> vector<256x128xf32>
    %7 = vector.extract_strided_slice %2 {offsets = [1, 0], sizes = [256, 8], strides = [1, 1]} : vector<320x8xbf16> to vector<256x8xbf16>
    %c1 = arith.constant 1 : index
    %c0_6 = arith.constant 0 : index
    %c0_7 = arith.constant 0 : index
    %8 = vector.load %arg4[%c1, %c0_6, %c0_7] : memref<9x8x128xbf16, #tpu.memory_space<vmem>>, vector<1x8x128xbf16>
    %9 = vector.shape_cast %8 : vector<1x8x128xbf16> to vector<8x128xbf16>
    %cst_8 = arith.constant dense<0.000000e+00> : vector<256x128xf32>
    %10 = tpu.matmul %7, %9, %cst_8 {dimension_numbers = #tpu.dot_dimension_numbers<[1], [0], [0], [1], [0, 0, 1, 1], [], []>} : vector<256x8xbf16>, vector<8x128xbf16>, vector<256x128xf32> -> vector<256x128xf32>
    %11 = arith.addf %6, %10 : vector<256x128xf32>
    %12 = vector.extract_strided_slice %2 {offsets = [2, 0], sizes = [256, 8], strides = [1, 1]} : vector<320x8xbf16> to vector<256x8xbf16>
    %c2 = arith.constant 2 : index
    %c0_9 = arith.constant 0 : index
    %c0_10 = arith.constant 0 : index
    %13 = vector.load %arg4[%c2, %c0_9, %c0_10] : memref<9x8x128xbf16, #tpu.memory_space<vmem>>, vector<1x8x128xbf16>
    %14 = vector.shape_cast %13 : vector<1x8x128xbf16> to vector<8x128xbf16>
    %cst_11 = arith.constant dense<0.000000e+00> : vector<256x128xf32>
    %15 = tpu.matmul %12, %14, %cst_11 {dimension_numbers = #tpu.dot_dimension_numbers<[1], [0], [0], [1], [0, 0, 1, 1], [], []>} : vector<256x8xbf16>, vector<8x128xbf16>, vector<256x128xf32> -> vector<256x128xf32>
    %16 = arith.addf %11, %15 : vector<256x128xf32>
    %17 = vector.extract_strided_slice %2 {offsets = [18, 0], sizes = [256, 8], strides = [1, 1]} : vector<320x8xbf16> to vector<256x8xbf16>
    %c3 = arith.constant 3 : index
    %c0_12 = arith.constant 0 : index
    %c0_13 = arith.constant 0 : index
    %18 = vector.load %arg4[%c3, %c0_12, %c0_13] : memref<9x8x128xbf16, #tpu.memory_space<vmem>>, vector<1x8x128xbf16>
    %19 = vector.shape_cast %18 : vector<1x8x128xbf16> to vector<8x128xbf16>
    %cst_14 = arith.constant dense<0.000000e+00> : vector<256x128xf32>
    %20 = tpu.matmul %17, %19, %cst_14 {dimension_numbers = #tpu.dot_dimension_numbers<[1], [0], [0], [1], [0, 0, 1, 1], [], []>} : vector<256x8xbf16>, vector<8x128xbf16>, vector<256x128xf32> -> vector<256x128xf32>
    %21 = arith.addf %16, %20 : vector<256x128xf32>
    %22 = vector.extract_strided_slice %2 {offsets = [19, 0], sizes = [256, 8], strides = [1, 1]} : vector<320x8xbf16> to vector<256x8xbf16>
    %c4 = arith.constant 4 : index
    %c0_15 = arith.constant 0 : index
    %c0_16 = arith.constant 0 : index
    %23 = vector.load %arg4[%c4, %c0_15, %c0_16] : memref<9x8x128xbf16, #tpu.memory_space<vmem>>, vector<1x8x128xbf16>
    %24 = vector.shape_cast %23 : vector<1x8x128xbf16> to vector<8x128xbf16>
    %cst_17 = arith.constant dense<0.000000e+00> : vector<256x128xf32>
    %25 = tpu.matmul %22, %24, %cst_17 {dimension_numbers = #tpu.dot_dimension_numbers<[1], [0], [0], [1], [0, 0, 1, 1], [], []>} : vector<256x8xbf16>, vector<8x128xbf16>, vector<256x128xf32> -> vector<256x128xf32>
    %26 = arith.addf %21, %25 : vector<256x128xf32>
    %27 = vector.extract_strided_slice %2 {offsets = [20, 0], sizes = [256, 8], strides = [1, 1]} : vector<320x8xbf16> to vector<256x8xbf16>
    %c5 = arith.constant 5 : index
    %c0_18 = arith.constant 0 : index
    %c0_19 = arith.constant 0 : index
    %28 = vector.load %arg4[%c5, %c0_18, %c0_19] : memref<9x8x128xbf16, #tpu.memory_space<vmem>>, vector<1x8x128xbf16>
    %29 = vector.shape_cast %28 : vector<1x8x128xbf16> to vector<8x128xbf16>
    %cst_20 = arith.constant dense<0.000000e+00> : vector<256x128xf32>
    %30 = tpu.matmul %27, %29, %cst_20 {dimension_numbers = #tpu.dot_dimension_numbers<[1], [0], [0], [1], [0, 0, 1, 1], [], []>} : vector<256x8xbf16>, vector<8x128xbf16>, vector<256x128xf32> -> vector<256x128xf32>
    %31 = arith.addf %26, %30 : vector<256x128xf32>
    %32 = vector.extract_strided_slice %2 {offsets = [36, 0], sizes = [256, 8], strides = [1, 1]} : vector<320x8xbf16> to vector<256x8xbf16>
    %c6 = arith.constant 6 : index
    %c0_21 = arith.constant 0 : index
    %c0_22 = arith.constant 0 : index
    %33 = vector.load %arg4[%c6, %c0_21, %c0_22] : memref<9x8x128xbf16, #tpu.memory_space<vmem>>, vector<1x8x128xbf16>
    %34 = vector.shape_cast %33 : vector<1x8x128xbf16> to vector<8x128xbf16>
    %cst_23 = arith.constant dense<0.000000e+00> : vector<256x128xf32>
    %35 = tpu.matmul %32, %34, %cst_23 {dimension_numbers = #tpu.dot_dimension_numbers<[1], [0], [0], [1], [0, 0, 1, 1], [], []>} : vector<256x8xbf16>, vector<8x128xbf16>, vector<256x128xf32> -> vector<256x128xf32>
    %36 = arith.addf %31, %35 : vector<256x128xf32>
    %37 = vector.extract_strided_slice %2 {offsets = [37, 0], sizes = [256, 8], strides = [1, 1]} : vector<320x8xbf16> to vector<256x8xbf16>
    %c7 = arith.constant 7 : index
    %c0_24 = arith.constant 0 : index
    %c0_25 = arith.constant 0 : index
    %38 = vector.load %arg4[%c7, %c0_24, %c0_25] : memref<9x8x128xbf16, #tpu.memory_space<vmem>>, vector<1x8x128xbf16>
    %39 = vector.shape_cast %38 : vector<1x8x128xbf16> to vector<8x128xbf16>
    %cst_26 = arith.constant dense<0.000000e+00> : vector<256x128xf32>
    %40 = tpu.matmul %37, %39, %cst_26 {dimension_numbers = #tpu.dot_dimension_numbers<[1], [0], [0], [1], [0, 0, 1, 1], [], []>} : vector<256x8xbf16>, vector<8x128xbf16>, vector<256x128xf32> -> vector<256x128xf32>
    %41 = arith.addf %36, %40 : vector<256x128xf32>
    %42 = vector.extract_strided_slice %2 {offsets = [38, 0], sizes = [256, 8], strides = [1, 1]} : vector<320x8xbf16> to vector<256x8xbf16>
    %c8 = arith.constant 8 : index
    %c0_27 = arith.constant 0 : index
    %c0_28 = arith.constant 0 : index
    %43 = vector.load %arg4[%c8, %c0_27, %c0_28] : memref<9x8x128xbf16, #tpu.memory_space<vmem>>, vector<1x8x128xbf16>
    %44 = vector.shape_cast %43 : vector<1x8x128xbf16> to vector<8x128xbf16>
    %cst_29 = arith.constant dense<0.000000e+00> : vector<256x128xf32>
    %45 = tpu.matmul %42, %44, %cst_29 {dimension_numbers = #tpu.dot_dimension_numbers<[1], [0], [0], [1], [0, 0, 1, 1], [], []>} : vector<256x8xbf16>, vector<8x128xbf16>, vector<256x128xf32> -> vector<256x128xf32>
    %46 = arith.addf %41, %45 : vector<256x128xf32>
    %47 = arith.truncf %46 : vector<256x128xf32> to vector<256x128xbf16>
    %c0_30 = arith.constant 0 : index
    %c0_31 = arith.constant 0 : index
    %48 = vector.load %arg6[%c0_30, %c0_31] : memref<256x128xbf16, #tpu.memory_space<vmem>>, vector<256x128xbf16>
    tpu.vector_store %arg6[%c0_30, %c0_31], %47 {strides = array<i32>} : memref<256x128xbf16, #tpu.memory_space<vmem>>, vector<256x128xbf16>,
    %c0_i32 = arith.constant 0 : i32
    %49 = arith.cmpi eq, %arg1, %c0_i32 : i32
    %50 = arith.extui %49 : i1 to i32
    %c0_i32_32 = arith.constant 0 : i32
    %51 = arith.cmpi ne, %50, %c0_i32_32 : i32
    scf.if %51 {
      %cst_49 = arith.constant 0.000000e+00 : f32
      %68 = vector.broadcast %cst_49 : f32 to vector<1x1x128xf32>
      %c0_50 = arith.constant 0 : index
      %c0_51 = arith.constant 0 : index
      %c0_52 = arith.constant 0 : index
      %69 = vector.load %arg7[%c0_50, %c0_51, %c0_52] : memref<1x1x128xf32, #tpu.memory_space<vmem>>, vector<1x1x128xf32>
      tpu.vector_store %arg7[%c0_50, %c0_51, %c0_52], %68 {strides = array<i32>} : memref<1x1x128xf32, #tpu.memory_space<vmem>>, vector<1x1x128xf32>,
      %cst_53 = arith.constant 0.000000e+00 : f32
      %70 = vector.broadcast %cst_53 : f32 to vector<1x1x128xf32>
      %c0_54 = arith.constant 0 : index
      %c0_55 = arith.constant 0 : index
      %c0_56 = arith.constant 0 : index
      %71 = vector.load %arg8[%c0_54, %c0_55, %c0_56] : memref<1x1x128xf32, #tpu.memory_space<vmem>>, vector<1x1x128xf32>
      tpu.vector_store %arg8[%c0_54, %c0_55, %c0_56], %70 {strides = array<i32>} : memref<1x1x128xf32, #tpu.memory_space<vmem>>, vector<1x1x128xf32>,
    } else {
    }
    %c0_33 = arith.constant 0 : index
    %c0_34 = arith.constant 0 : index
    %52 = vector.load %arg5[%c0_33, %c0_34] : memref<256x1xf32, #tpu.memory_space<vmem>>, vector<256x1xf32>
    %53 = vector.broadcast %52 : vector<256x1xf32> to vector<256x128xf32>
    %54 = arith.mulf %46, %53 : vector<256x128xf32>
    %c0_35 = arith.constant 0 : index
    %c0_36 = arith.constant 0 : index
    %c0_37 = arith.constant 0 : index
    %55 = vector.load %arg7[%c0_35, %c0_36, %c0_37] : memref<1x1x128xf32, #tpu.memory_space<vmem>>, vector<1x1x128xf32>
    %cst_38 = arith.constant dense<0.000000e+00> : vector<128xf32>
    %56 = vector.multi_reduction <add>, %54, %cst_38 [0] : vector<256x128xf32> to vector<128xf32>
    %57 = vector.shape_cast %56 : vector<128xf32> to vector<1x128xf32>
    %58 = vector.shape_cast %57 : vector<1x128xf32> to vector<1x1x128xf32>
    %59 = arith.addf %55, %58 : vector<1x1x128xf32>
    %c0_39 = arith.constant 0 : index
    %c0_40 = arith.constant 0 : index
    %c0_41 = arith.constant 0 : index
    %60 = vector.load %arg7[%c0_39, %c0_40, %c0_41] : memref<1x1x128xf32, #tpu.memory_space<vmem>>, vector<1x1x128xf32>
    tpu.vector_store %arg7[%c0_39, %c0_40, %c0_41], %59 {strides = array<i32>} : memref<1x1x128xf32, #tpu.memory_space<vmem>>, vector<1x1x128xf32>,
    %c0_42 = arith.constant 0 : index
    %c0_43 = arith.constant 0 : index
    %c0_44 = arith.constant 0 : index
    %61 = vector.load %arg8[%c0_42, %c0_43, %c0_44] : memref<1x1x128xf32, #tpu.memory_space<vmem>>, vector<1x1x128xf32>
    %62 = arith.mulf %54, %46 : vector<256x128xf32>
    %cst_45 = arith.constant dense<0.000000e+00> : vector<128xf32>
    %63 = vector.multi_reduction <add>, %62, %cst_45 [0] : vector<256x128xf32> to vector<128xf32>
    %64 = vector.shape_cast %63 : vector<128xf32> to vector<1x128xf32>
    %65 = vector.shape_cast %64 : vector<1x128xf32> to vector<1x1x128xf32>
    %66 = arith.addf %61, %65 : vector<1x1x128xf32>
    %c0_46 = arith.constant 0 : index
    %c0_47 = arith.constant 0 : index
    %c0_48 = arith.constant 0 : index
    %67 = vector.load %arg8[%c0_46, %c0_47, %c0_48] : memref<1x1x128xf32, #tpu.memory_space<vmem>>, vector<1x1x128xf32>
    tpu.vector_store %arg8[%c0_46, %c0_47, %c0_48], %66 {strides = array<i32>} : memref<1x1x128xf32, #tpu.memory_space<vmem>>, vector<1x1x128xf32>,
    return
  }
  func.func @transform_0(%arg0: i32, %arg1: i32) -> (i32, i32) {
    %c2_i32 = arith.constant 2 : i32
    %0 = arith.muli %arg0, %c2_i32 : i32
    %1 = arith.addi %0, %arg1 : i32
    %c0_i32 = arith.constant 0 : i32
    %c0_i32_0 = arith.constant 0 : i32
    return %1, %c0_i32 : i32, i32
  }
  func.func @transform_1(%arg0: i32, %arg1: i32) -> (i32, i32) {
    %c2_i32 = arith.constant 2 : i32
    %0 = arith.muli %arg0, %c2_i32 : i32
    %1 = arith.addi %0, %arg1 : i32
    %c1_i32 = arith.constant 1 : i32
    %2 = arith.addi %1, %c1_i32 : i32
    %c4_i32 = arith.constant 4 : i32
    %3 = arith.muli %2, %c4_i32 : i32
    %c0_i32 = arith.constant 0 : i32
    %c0_i32_0 = arith.constant 0 : i32
    return %3, %c0_i32 : i32, i32
  }
  func.func @transform_2(%arg0: i32, %arg1: i32) -> (i32, i32, i32) {
    %c0_i32 = arith.constant 0 : i32
    %c0_i32_0 = arith.constant 0 : i32
    %c0_i32_1 = arith.constant 0 : i32
    %c0_i32_2 = arith.constant 0 : i32
    return %c0_i32, %c0_i32_0, %c0_i32_1 : i32, i32, i32
  }
  func.func @transform_3(%arg0: i32, %arg1: i32) -> (i32, i32) {
    %c2_i32 = arith.constant 2 : i32
    %0 = arith.muli %arg0, %c2_i32 : i32
    %1 = arith.addi %0, %arg1 : i32
    %c0_i32 = arith.constant 0 : i32
    %c0_i32_0 = arith.constant 0 : i32
    return %1, %c0_i32 : i32, i32
  }
  func.func @transform_4(%arg0: i32, %arg1: i32) -> (i32, i32) {
    %c2_i32 = arith.constant 2 : i32
    %0 = arith.muli %arg0, %c2_i32 : i32
    %1 = arith.addi %0, %arg1 : i32
    %c0_i32 = arith.constant 0 : i32
    %c0_i32_0 = arith.constant 0 : i32
    return %1, %c0_i32 : i32, i32
  }
  func.func @transform_5(%arg0: i32, %arg1: i32) -> (i32, i32, i32) {
    %c0_i32 = arith.constant 0 : i32
    %c0_i32_0 = arith.constant 0 : i32
    %c0_i32_1 = arith.constant 0 : i32
    return %arg0, %c0_i32, %c0_i32_0 : i32, i32, i32
  }
  func.func @transform_6(%arg0: i32, %arg1: i32) -> (i32, i32, i32) {
    %c0_i32 = arith.constant 0 : i32
    %c0_i32_0 = arith.constant 0 : i32
    %c0_i32_1 = arith.constant 0 : i32
    return %arg0, %c0_i32, %c0_i32_0 : i32, i32, i32
  }
}

</mosaic_0001>

<llo_original>
// kernel: tpu_custom_call.1
$region0: #{tpu_custom_call.1}
  #allocation0 [shape = 'u32[]', space=smem, size = 0x4, offset = 0x4, fixed_abs, tag = 'smem constant byte address 0x4 - core index']
  #allocation1 [shape = 'u32[144,128]{1,0:T(1,128)}', space=vmem, size = 0x12000, scoped, tag = 'internal scratch']
  %s0 = inlined_call_operand.vmem [shape: bf16[1280,8], index: 0, kind: input, shape index: {}]
  %s1 = inlined_call_operand.vmem [shape: bf16[1280,8], index: 1, kind: input, shape index: {}]
  %s2 = inlined_call_operand.vmem [shape: bf16[9,8,128], index: 2, kind: input, shape index: {}]
  %s3 = inlined_call_operand.vmem [shape: f32[1024,1], index: 3, kind: input, shape index: {}]
  %s4 = inlined_call_operand.hbm [shape: bf16[1024,128], index: 4, kind: output, shape index: {0}]
  %s5 = inlined_call_operand.hbm [shape: f32[2,1,128], index: 5, kind: output, shape index: {1}]
  %s6 = inlined_call_operand.hbm [shape: f32[2,1,128], index: 6, kind: output, shape index: {2}]
  %7 = xla_tuple %s4, %s5, %s6
  %s8 = sld [smem:[#allocation0]]
  $region69: #{tpu_custom_call.1} parent=0
    _
  %s10 = ssub.s32 1, %s8
  %s11 = scalar_select 0, %s10, %s8
  $region1: #{tpu_custom_call.1} parent=0
    #allocation2 [shape = 'u8[131072]{0}', space=vmem, size = 0x20000, scoped, tag = 'output window, operand 0']
    #allocation3 [shape = 's32[2]{0}', space=sflag, size = 0x8, scoped, tag = 'scoped memory for tpu_custom_call.1']
    #allocation4 [shape = 'u8[1024]{0}', space=vmem, size = 0x400, scoped, tag = 'output window, operand 1']
    #allocation5 [shape = 's32[2]{0}', space=sflag, size = 0x8, scoped, tag = 'scoped memory for tpu_custom_call.1']
    #allocation6 [shape = 'u8[1024]{0}', space=vmem, size = 0x400, scoped, tag = 'output window, operand 2']
    %12 = vsyncpa [#allocation3], 0
    %s13 = scalar_lea.sflag [#allocation3], 1
    %14 = vsyncpa %s13, 0
    %15 = vsyncpa [#allocation5], 0
    %s16 = scalar_lea.sflag [#allocation5], 1
    %17 = vsyncpa %s16, 0
    loop: start=0, step=1, limit=6
    $region2: #{tpu_custom_call.1} parent=1 // loop_pre_header
      _
    $region3: #{tpu_custom_call.1} parent=1 // loop_header
      %s19 = sphi 0, %s23
      %p20 = scmp.ge.s32.totalorder %s19, 6
      %s26 = sphi 0, %s38
      %s27 = sphi 0, %s34
      %s28 = sphi 0, %s26
      %s29 = sphi 0, %s27
      %s30 = sphi 0, %s28
      %s31 = sphi 0, %s29
      %s45 = sphi 0, %s47
      %s48 = sphi 0, %s45
      %s49 = sphi 0, %s48
      %s65 = sphi 0, %s49
      %s79 = sphi 0, %s81
      %s82 = sphi 0, %s79
      %s83 = sphi 0, %s82
      %s99 = sphi 0, %s83
      %s103 = sphi 0, %s103
      %s105 = sphi 0, %s103
      %s106 = sphi 0, %s105
      %s120 = sphi 0, %s106
      %s130 = sphi 0, %s132
      %s133 = sphi 0, %s130
      %s134 = sphi 0, %s133
      %s150 = sphi 0, %s134
      %s160 = sphi 0, %s162
      %s163 = sphi 0, %s160
      %s164 = sphi 0, %s163
      %s180 = sphi 0, %s164
      %s186 = sphi 0, %s188
      %s189 = sphi 0, %s186
      %s190 = sphi 0, %s189
      %s206 = sphi 0, %s190
      %s212 = sphi 0, %s214
      %s215 = sphi 0, %s212
      %s216 = sphi 0, %s215
      %s232 = sphi 0, %s216
    $region4: #{tpu_custom_call.1} parent=1 // loop_header_branch
      %22 = sbr.rel (%p20) target = $region8
    $region5: #{tpu_custom_call.1} parent=1 // loop_body
      %s24 = ssub.s32 %s19, 1
      %s25 = ssub.s32 %s19, 2
      %s32 = sadd.s32 1, %s27
      %p33 = scmp.ge.s32.totalorder %s32, 2
      %s34 = scalar_select %p33, 0, %s32
      %s35 = sadd.s32 1, %s26
      %s36 = scalar_select %p33, %s35, %s26
      %p37 = scmp.ge.s32.totalorder %s36, 2
      %s38 = scalar_select %p37, 0, %s36
      %s39 = smul.u32 %s26, 2
      %s40 = sadd.s32 %s39, %s27
      %s41 = smul.u32 %s38, 2
      %s42 = sadd.s32 %s41, %s34
      %s43 = ssub.s32 %s40, %s42
      %p44 = scmp.eq.s32.totalorder %s43, 0
      %s46 = sadd.s32 %s45, 1
      %s47 = scalar_select %p44, %s45, %s46
      %p50 = pneg %p44
      %p51 = scmp.eq.s32.totalorder %s19, 3
      %p52 = por %p50, %p51
      %p53 = scmp.ne.s32.totalorder %s45, %s48
      %p54 = scmp.eq.s32.totalorder %s19, 0
      %p55 = por %p53, %p54
      %p56 = scmp.ne.s32.totalorder %s45, %s48
      %p57 = scmp.eq.s32.totalorder %s24, 3
      %p58 = por %p56, %p57
      %p59 = scmp.ne.s32.totalorder %s48, %s49
      %p60 = scmp.eq.s32.totalorder %s24, 0
      %p61 = por %p59, %p60
      %p62 = scmp.ne.s32.totalorder %s48, %s49
      %p63 = scmp.eq.s32.totalorder %s25, 3
      %p64 = por %p62, %p63
      %p66 = scmp.ne.s32.totalorder %s49, %s65
      %p67 = scmp.eq.s32.totalorder %s25, 0
      %p68 = por %p66, %p67
      %s69 = smul.u32 %s26, 2
      %s70 = sadd.s32 %s69, %s27
      %s71 = sadd.s32 %s70, 1
      %s72 = smul.u32 %s71, 4
      %s73 = smul.u32 %s38, 2
      %s74 = sadd.s32 %s73, %s34
      %s75 = sadd.s32 %s74, 1
      %s76 = smul.u32 %s75, 4
      %s77 = ssub.s32 %s72, %s76
      %p78 = scmp.eq.s32.totalorder %s77, 0
      %s80 = sadd.s32 %s79, 1
      %s81 = scalar_select %p78, %s79, %s80
      %p84 = pneg %p78
      %p85 = scmp.eq.s32.totalorder %s19, 3
      %p86 = por %p84, %p85
      %p87 = scmp.ne.s32.totalorder %s79, %s82
      %p88 = scmp.eq.s32.totalorder %s19, 0
      %p89 = por %p87, %p88
      %p90 = scmp.ne.s32.totalorder %s79, %s82
      %p91 = scmp.eq.s32.totalorder %s24, 3
      %p92 = por %p90, %p91
      %p93 = scmp.ne.s32.totalorder %s82, %s83
      %p94 = scmp.eq.s32.totalorder %s24, 0
      %p95 = por %p93, %p94
      %p96 = scmp.ne.s32.totalorder %s82, %s83
      %p97 = scmp.eq.s32.totalorder %s25, 3
      %p98 = por %p96, %p97
      %p100 = scmp.ne.s32.totalorder %s83, %s99
      %p101 = scmp.eq.s32.totalorder %s25, 0
      %p102 = por %p100, %p101
      %s104 = sadd.s32 %s103, 1
      %p107 = scmp.eq.s32.totalorder %s19, 3
      %p108 = scmp.ne.s32.totalorder %s103, %s105
      %p109 = scmp.eq.s32.totalorder %s19, 0
      %p110 = por %p108, %p109
      %p111 = scmp.ne.s32.totalorder %s103, %s105
      %p112 = scmp.eq.s32.totalorder %s24, 3
      %p113 = por %p111, %p112
      %p114 = scmp.ne.s32.totalorder %s105, %s106
      %p115 = scmp.eq.s32.totalorder %s24, 0
      %p116 = por %p114, %p115
      %p117 = scmp.ne.s32.totalorder %s105, %s106
      %p118 = scmp.eq.s32.totalorder %s25, 3
      %p119 = por %p117, %p118
      %p121 = scmp.ne.s32.totalorder %s106, %s120
      %p122 = scmp.eq.s32.totalorder %s25, 0
      %p123 = por %p121, %p122
      %s124 = smul.u32 %s26, 2
      %s125 = sadd.s32 %s124, %s27
      %s126 = smul.u32 %s38, 2
      %s127 = sadd.s32 %s126, %s34
      %s128 = ssub.s32 %s125, %s127
      %p129 = scmp.eq.s32.totalorder %s128, 0
      %s131 = sadd.s32 %s130, 1
      %s132 = scalar_select %p129, %s130, %s131
      %p135 = pneg %p129
      %p136 = scmp.eq.s32.totalorder %s19, 3
      %p137 = por %p135, %p136
      %p138 = scmp.ne.s32.totalorder %s130, %s133
      %p139 = scmp.eq.s32.totalorder %s19, 0
      %p140 = por %p138, %p139
      %p141 = scmp.ne.s32.totalorder %s130, %s133
      %p142 = scmp.eq.s32.totalorder %s24, 3
      %p143 = por %p141, %p142
      %p144 = scmp.ne.s32.totalorder %s133, %s134
      %p145 = scmp.eq.s32.totalorder %s24, 0
      %p146 = por %p144, %p145
      %p147 = scmp.ne.s32.totalorder %s133, %s134
      %p148 = scmp.eq.s32.totalorder %s25, 3
      %p149 = por %p147, %p148
      %p151 = scmp.ne.s32.totalorder %s134, %s150
      %p152 = scmp.eq.s32.totalorder %s25, 0
      %p153 = por %p151, %p152
      %s154 = smul.u32 %s26, 2
      %s155 = sadd.s32 %s154, %s27
      %s156 = smul.u32 %s38, 2
      %s157 = sadd.s32 %s156, %s34
      %s158 = ssub.s32 %s155, %s157
      %p159 = scmp.eq.s32.totalorder %s158, 0
      %s161 = sadd.s32 %s160, 1
      %s162 = scalar_select %p159, %s160, %s161
      %p165 = pneg %p159
      %p166 = scmp.eq.s32.totalorder %s19, 3
      %p167 = por %p165, %p166
      %p168 = scmp.ne.s32.totalorder %s160, %s163
      %p169 = scmp.eq.s32.totalorder %s19, 0
      %p170 = por %p168, %p169
      %p171 = scmp.ne.s32.totalorder %s160, %s163
      %p172 = scmp.eq.s32.totalorder %s24, 3
      %p173 = por %p171, %p172
      %p174 = scmp.ne.s32.totalorder %s163, %s164
      %p175 = scmp.eq.s32.totalorder %s24, 0
      %p176 = por %p174, %p175
      %p177 = scmp.ne.s32.totalorder %s163, %s164
      %p178 = scmp.eq.s32.totalorder %s25, 3
      %p179 = por %p177, %p178
      %p181 = scmp.ne.s32.totalorder %s164, %s180
      %p182 = scmp.eq.s32.totalorder %s25, 0
      %p183 = por %p181, %p182
      %s184 = ssub.s32 %s26, %s38
      %p185 = scmp.eq.s32.totalorder %s184, 0
      %s187 = sadd.s32 %s186, 1
      %s188 = scalar_select %p185, %s186, %s187
      %p191 = pneg %p185
      %p192 = scmp.eq.s32.totalorder %s19, 3
      %p193 = por %p191, %p192
      %p194 = scmp.ne.s32.totalorder %s186, %s189
      %p195 = scmp.eq.s32.totalorder %s19, 0
      %p196 = por %p194, %p195
      %p197 = scmp.ne.s32.totalorder %s186, %s189
      %p198 = scmp.eq.s32.totalorder %s24, 3
      %p199 = por %p197, %p198
      %p200 = scmp.ne.s32.totalorder %s189, %s190
      %p201 = scmp.eq.s32.totalorder %s24, 0
      %p202 = por %p200, %p201
      %p203 = scmp.ne.s32.totalorder %s189, %s190
      %p204 = scmp.eq.s32.totalorder %s25, 3
      %p205 = por %p203, %p204
      %p207 = scmp.ne.s32.totalorder %s190, %s206
      %p208 = scmp.eq.s32.totalorder %s25, 0
      %p209 = por %p207, %p208
      %s210 = ssub.s32 %s26, %s38
      %p211 = scmp.eq.s32.totalorder %s210, 0
      %s213 = sadd.s32 %s212, 1
      %s214 = scalar_select %p211, %s212, %s213
      %p217 = pneg %p211
      %p218 = scmp.eq.s32.totalorder %s19, 3
      %p219 = por %p217, %p218
      %p220 = scmp.ne.s32.totalorder %s212, %s215
      %p221 = scmp.eq.s32.totalorder %s19, 0
      %p222 = por %p220, %p221
      %p223 = scmp.ne.s32.totalorder %s212, %s215
      %p224 = scmp.eq.s32.totalorder %s24, 3
      %p225 = por %p223, %p224
      %p226 = scmp.ne.s32.totalorder %s215, %s216
      %p227 = scmp.eq.s32.totalorder %s24, 0
      %p228 = por %p226, %p227
      %p229 = scmp.ne.s32.totalorder %s215, %s216
      %p230 = scmp.eq.s32.totalorder %s25, 3
      %p231 = por %p229, %p230
      %p233 = scmp.ne.s32.totalorder %s216, %s232
      %p234 = scmp.eq.s32.totalorder %s25, 0
      %p235 = por %p233, %p234
      %p236 = scmp.le.s32.totalorder 1, %s19
      %p237 = scmp.lt.s32.totalorder %s19, 5
      %p238 = pnand %p236, %p237
      %p239 = pneg %p238
      // Predicated region
      $region9: #{tpu_custom_call.1} parent=5 // pred_check
        _
      $region10: #{tpu_custom_call.1} parent=5 // pred_check_branch
        %241 = sbr.rel (%p238) target = $region12
      $region11: #{tpu_custom_call.1} parent=5 // pred_region
        %s242 = ssub.s32 %s19, 1
        // Predicated region
        $region13: #{tpu_custom_call.1} parent=11 // pred_check
          %p243 = pneg %p116
        $region14: #{tpu_custom_call.1} parent=11 // pred_check_branch
          %245 = sbr.rel (%p243) target = $region16
        $region15: #{tpu_custom_call.1} parent=11 // pred_region
          _
        $region16: #{tpu_custom_call.1} parent=11 // pred_fallthru
          _
      $region12: #{tpu_custom_call.1} parent=5 // pred_fallthru
        _
      %p246 = scmp.lt.s32.totalorder %s19, 4
      // Predicated region
      $region17: #{tpu_custom_call.1} parent=5 // pred_check
        %p247 = pneg %p246
      $region18: #{tpu_custom_call.1} parent=5 // pred_check_branch
        %249 = sbr.rel (%p247) target = $region20
      $region19: #{tpu_custom_call.1} parent=5 // pred_region
        // Predicated region
        $region21: #{tpu_custom_call.1} parent=19 // pred_check
          %p250 = pneg %p55
        $region22: #{tpu_custom_call.1} parent=19 // pred_check_branch
          %252 = sbr.rel (%p250) target = $region24
        $region23: #{tpu_custom_call.1} parent=19 // pred_region
          %s253 = smul.u32 %s26, 2
          %s254 = sadd.s32 %s253, %s27
          %s255 = smul.u32 32, %s254
          %p256 = scmp.lt.s32.totalorder %s255, 159
          %s257 = scalar_select %p256, %s255, 159
          %s258 = smul.addr %s257, 4
          %s259 = scalar_lea.vmem %s0, %s258
          %s260 = smul.u32 %s26, 2
          %s261 = sadd.s32 %s260, %s27
          %s262 = smul.u32 32, %s261
        $region24: #{tpu_custom_call.1} parent=19 // pred_fallthru
          _
        // Predicated region
        $region25: #{tpu_custom_call.1} parent=19 // pred_check
          %p263 = pneg %p89
        $region26: #{tpu_custom_call.1} parent=19 // pred_check_branch
          %265 = sbr.rel (%p263) target = $region28
        $region27: #{tpu_custom_call.1} parent=19 // pred_region
          %s266 = smul.u32 %s26, 2
          %s267 = sadd.s32 %s266, %s27
          %s268 = sadd.s32 %s267, 1
          %s269 = smul.u32 %s268, 4
          %s270 = smul.u32 8, %s269
          %p271 = scmp.lt.s32.totalorder %s270, 159
          %s272 = scalar_select %p271, %s270, 159
          %s273 = smul.addr %s272, 4
          %s274 = scalar_lea.vmem %s1, %s273
          %s275 = smul.u32 %s26, 2
          %s276 = sadd.s32 %s275, %s27
          %s277 = sadd.s32 %s276, 1
          %s278 = smul.u32 %s277, 4
          %s279 = smul.u32 8, %s278
        $region28: #{tpu_custom_call.1} parent=19 // pred_fallthru
          _
        // Predicated region
        $region29: #{tpu_custom_call.1} parent=19 // pred_check
          %p280 = pneg %p140
        $region30: #{tpu_custom_call.1} parent=19 // pred_check_branch
          %282 = sbr.rel (%p280) target = $region32
        $region31: #{tpu_custom_call.1} parent=19 // pred_region
          %s283 = smul.u32 %s26, 2
          %s284 = sadd.s32 %s283, %s27
          %s285 = smul.u32 32, %s284
          %p286 = scmp.lt.s32.totalorder %s285, 127
          %s287 = scalar_select %p286, %s285, 127
          %s288 = smul.addr %s287, 8
          %s289 = scalar_lea.vmem %s3, %s288
          %s290 = smul.u32 %s26, 2
          %s291 = sadd.s32 %s290, %s27
          %s292 = smul.u32 32, %s291
        $region32: #{tpu_custom_call.1} parent=19 // pred_fallthru
          _
      $region20: #{tpu_custom_call.1} parent=5 // pred_fallthru
        _
      %p293 = scmp.le.s32.totalorder 1, %s19
      %p294 = scmp.lt.s32.totalorder %s19, 5
      %p295 = pnand %p293, %p294
      %p296 = pneg %p295
      // Predicated region
      $region33: #{tpu_custom_call.1} parent=5 // pred_check
        _
      $region34: #{tpu_custom_call.1} parent=5 // pred_check_branch
        %298 = sbr.rel (%p295) target = $region36
      $region35: #{tpu_custom_call.1} parent=5 // pred_region
        %s299 = ssub.s32 %s19, 1
        %s300 = smul.u32 %s28, 2
        %s301 = sadd.s32 %s300, %s29
        %s302 = smul.u32 32, %s301
        %p303 = scmp.lt.s32.totalorder %s302, 159
        %s304 = scalar_select %p303, %s302, 159
        %s305 = smul.addr %s304, 4
        %s306 = scalar_lea.vmem %s0, %s305
        %p307 = pneg %p61
        %p308 = pneg %p58
        %s309 = smul.u32 %s28, 2
        %s310 = sadd.s32 %s309, %s29
        %s311 = sadd.s32 %s310, 1
        %s312 = smul.u32 %s311, 4
        %s313 = smul.u32 8, %s312
        %p314 = scmp.lt.s32.totalorder %s313, 159
        %s315 = scalar_select %p314, %s313, 159
        %s316 = smul.addr %s315, 4
        %s317 = scalar_lea.vmem %s1, %s316
        %p318 = pneg %p95
        %p319 = pneg %p92
        %p320 = pneg %p116
        %p321 = pneg %p113
        %s322 = smul.u32 %s28, 2
        %s323 = sadd.s32 %s322, %s29
        %s324 = smul.u32 32, %s323
        %p325 = scmp.lt.s32.totalorder %s324, 127
        %s326 = scalar_select %p325, %s324, 127
        %s327 = smul.addr %s326, 8
        %s328 = scalar_lea.vmem %s3, %s327
        %p329 = pneg %p146
        %p330 = pneg %p143
        %p331 = pneg %p176
        %p332 = pneg %p173
        %s333 = sand.u32 %s163, 1
        %s334 = scalar_lea.sflag [#allocation3], %s333
        %s335 = sand.u32 %s163, 1
        %s336 = smul.addr %s335, 128
        %s337 = scalar_lea.vmem [#allocation2], %s336
        %p338 = pneg %p202
        %p339 = pneg %p199
        %s340 = sand.u32 %s24, 1
        %s341 = scalar_lea.sflag [#allocation5], %s340
        %s342 = sand.u32 %s189, 1
        %s343 = scalar_lea.vmem [#allocation4], %s342
        %p344 = pneg %p228
        %p345 = pneg %p225
        %s346 = sand.u32 %s24, 1
        %s347 = scalar_lea.sflag [#allocation5], %s346
        %s348 = sand.u32 %s215, 1
        %s349 = scalar_lea.vmem [#allocation6], %s348
        %s350 = smul.u32 %s28, 2
        %s351 = sadd.s32 %s350, %s29
        %s352 = smul.u32 32, %s351
        %p353 = scmp.lt.s32.totalorder %s352, 159
        %s354 = scalar_select %p353, %s352, 159
        %s355 = smul.addr %s354, 4
        %s356 = scalar_lea.vmem %s0, %s355
        %s357 = smul.u32 %s28, 2
        %s358 = sadd.s32 %s357, %s29
        %s359 = smul.u32 32, %s358
        %s360 = smul.u32 %s28, 2
        %s361 = sadd.s32 %s360, %s29
        %s362 = sadd.s32 %s361, 1
        %s363 = smul.u32 %s362, 4
        %s364 = smul.u32 8, %s363
        %p365 = scmp.lt.s32.totalorder %s364, 159
        %s366 = scalar_select %p365, %s364, 159
        %s367 = smul.addr %s366, 4
        %s368 = scalar_lea.vmem %s1, %s367
        %s369 = smul.u32 %s28, 2
        %s370 = sadd.s32 %s369, %s29
        %s371 = sadd.s32 %s370, 1
        %s372 = smul.u32 %s371, 4
        %s373 = smul.u32 8, %s372
        %s374 = smul.u32 %s28, 2
        %s375 = sadd.s32 %s374, %s29
        %s376 = smul.u32 32, %s375
        %p377 = scmp.lt.s32.totalorder %s376, 127
        %s378 = scalar_select %p377, %s376, 127
        %s379 = smul.addr %s378, 8
        %s380 = scalar_lea.vmem %s3, %s379
        %s381 = smul.u32 %s28, 2
        %s382 = sadd.s32 %s381, %s29
        %s383 = smul.u32 32, %s382
        %s384 = smul.u32 %s28, 2
        %s385 = sadd.s32 %s384, %s29
        %s386 = smul.u32 32, %s385
        %v388 = vld [vmem:[%s356] sm:$0xf]
        %v389 = vld [vmem:[%s356 + $0x4] sm:$0xf]
        %v390 = vld [vmem:[%s356 + $0x8] sm:$0xf]
        %v391 = vld [vmem:[%s356 + $0xc] sm:$0xf]
        %v392 = vld [vmem:[%s356 + $0x10] sm:$0xf]
        %v393 = vld [vmem:[%s356 + $0x14] sm:$0xf]
        %v394 = vld [vmem:[%s356 + $0x18] sm:$0xf]
        %v395 = vld [vmem:[%s356 + $0x1c] sm:$0xf]
        %v396 = vld [vmem:[%s356 + $0x20] sm:$0xf]
        %v397 = vld [vmem:[%s356 + $0x24] sm:$0xf]
        %v398 = vld [vmem:[%s356 + $0x28] sm:$0xf]
        %v399 = vld [vmem:[%s356 + $0x2c] sm:$0xf]
        %v400 = vld [vmem:[%s356 + $0x30] sm:$0xf]
        %v401 = vld [vmem:[%s356 + $0x34] sm:$0xf]
        %v402 = vld [vmem:[%s356 + $0x38] sm:$0xf]
        %v403 = vld [vmem:[%s356 + $0x3c] sm:$0xf]
        %v404 = vld [vmem:[%s356 + $0x40] sm:$0xf]
        %v405 = vld [vmem:[%s356 + $0x44] sm:$0xf]
        %v406 = vld [vmem:[%s356 + $0x48] sm:$0xf]
        %v407 = vld [vmem:[%s356 + $0x4c] sm:$0xf]
        %v408 = vld [vmem:[%s356 + $0x50] sm:$0xf]
        %v409 = vld [vmem:[%s356 + $0x54] sm:$0xf]
        %v410 = vld [vmem:[%s356 + $0x58] sm:$0xf]
        %v411 = vld [vmem:[%s356 + $0x5c] sm:$0xf]
        %v412 = vld [vmem:[%s356 + $0x60] sm:$0xf]
        %v413 = vld [vmem:[%s356 + $0x64] sm:$0xf]
        %v414 = vld [vmem:[%s356 + $0x68] sm:$0xf]
        %v415 = vld [vmem:[%s356 + $0x6c] sm:$0xf]
        %v416 = vld [vmem:[%s356 + $0x70] sm:$0xf]
        %v417 = vld [vmem:[%s356 + $0x74] sm:$0xf]
        %v418 = vld [vmem:[%s356 + $0x78] sm:$0xf]
        %v419 = vld [vmem:[%s356 + $0x7c] sm:$0xf]
        %v420 = vld [vmem:[%s368] sm:$0xf]
        %v421 = vld [vmem:[%s368 + $0x4] sm:$0xf]
        %v422 = vld [vmem:[%s368 + $0x8] sm:$0xf]
        %v423 = vld [vmem:[%s368 + $0xc] sm:$0xf]
        %v424 = vld [vmem:[%s368 + $0x10] sm:$0xf]
        %v425 = vld [vmem:[%s368 + $0x14] sm:$0xf]
        %v458 = vunpack.c.l.b16 %v388
        %v459 = vunpack.c.l.b16 %v389
        %v460 = vunpack.c.l.b16 %v390
        %v461 = vunpack.c.l.b16 %v391
        %v462 = vunpack.c.l.b16 %v392
        %v463 = vunpack.c.l.b16 %v393
        %v464 = vunpack.c.l.b16 %v394
        %v465 = vunpack.c.l.b16 %v395
        %v466 = vunpack.c.l.b16 %v396
        %v467 = vunpack.c.l.b16 %v397
        %v468 = vunpack.c.l.b16 %v398
        %v469 = vunpack.c.l.b16 %v399
        %v470 = vunpack.c.l.b16 %v400
        %v471 = vunpack.c.l.b16 %v401
        %v472 = vunpack.c.l.b16 %v402
        %v473 = vunpack.c.l.b16 %v403
        %v474 = vunpack.c.l.b16 %v404
        %v475 = vunpack.c.l.b16 %v405
        %v476 = vunpack.c.l.b16 %v406
        %v477 = vunpack.c.l.b16 %v407
        %v478 = vunpack.c.l.b16 %v408
        %v479 = vunpack.c.l.b16 %v409
        %v480 = vunpack.c.l.b16 %v410
        %v481 = vunpack.c.l.b16 %v411
        %v482 = vunpack.c.l.b16 %v412
        %v483 = vunpack.c.l.b16 %v413
        %v484 = vunpack.c.l.b16 %v414
        %v485 = vunpack.c.l.b16 %v415
        %v486 = vunpack.c.l.b16 %v416
        %v487 = vunpack.c.l.b16 %v417
        %v488 = vunpack.c.l.b16 %v418
        %v489 = vunpack.c.l.b16 %v419
        %v490 = vpack.c.b16 %v459, %v458
        %v491 = vpack.c.b16 %v461, %v460
        %v492 = vpack.c.b16 %v463, %v462
        %v493 = vpack.c.b16 %v465, %v464
        %v494 = vpack.c.b16 %v467, %v466
        %v495 = vpack.c.b16 %v469, %v468
        %v496 = vpack.c.b16 %v471, %v470
        %v497 = vpack.c.b16 %v473, %v472
        %v498 = vpack.c.b16 %v475, %v474
        %v499 = vpack.c.b16 %v477, %v476
        %v500 = vpack.c.b16 %v479, %v478
        %v501 = vpack.c.b16 %v481, %v480
        %v502 = vpack.c.b16 %v483, %v482
        %v503 = vpack.c.b16 %v485, %v484
        %v504 = vpack.c.b16 %v487, %v486
        %v505 = vpack.c.b16 %v489, %v488
        %v512 = vunpack.c.l.b16 %v420
        %v513 = vunpack.c.l.b16 %v421
        %v514 = vunpack.c.l.b16 %v422
        %v515 = vunpack.c.l.b16 %v423
        %v516 = vunpack.c.l.b16 %v424
        %v517 = vunpack.c.l.b16 %v425
        %v518 = vpack.c.b16 %v513, %v512
        %v519 = vpack.c.b16 %v515, %v514
        %v520 = vpack.c.b16 %v517, %v516
        %v521 = vld [vmem:[%s2] sm:$0xf]
        %s522 = scalar_lea.vmem %s2, 4
        %v523 = vld [vmem:[%s522] sm:$0xf]
        %vm524 = vsmask.f32 7424
        %v526 = vshrl.u32 %v490, 16
        %v528 = vshll.u32 %v490, 16
        %v530 = vrot.slane %v528, 1
        %v531 = vor.u32 %v526, %v530
        %v533 = vshll.u32 %v491, 16
        %v535 = vrot.slane %v533, 1
        %v536 = vsel %vm524, %v531, %v535
        %v537 = vshrl.u32 %v491, 16
        %v539 = vor.u32 %v537, %v535
        %v541 = vshll.u32 %v492, 16
        %v543 = vrot.slane %v541, 1
        %v544 = vsel %vm524, %v539, %v543
        %v545 = vshrl.u32 %v492, 16
        %v547 = vor.u32 %v545, %v543
        %v549 = vshll.u32 %v493, 16
        %v551 = vrot.slane %v549, 1
        %v552 = vsel %vm524, %v547, %v551
        %v553 = vshrl.u32 %v493, 16
        %v555 = vor.u32 %v553, %v551
        %v557 = vshll.u32 %v494, 16
        %v559 = vrot.slane %v557, 1
        %v560 = vsel %vm524, %v555, %v559
        %v561 = vshrl.u32 %v494, 16
        %v563 = vor.u32 %v561, %v559
        %v565 = vshll.u32 %v495, 16
        %v567 = vrot.slane %v565, 1
        %v568 = vsel %vm524, %v563, %v567
        %v569 = vshrl.u32 %v495, 16
        %v571 = vor.u32 %v569, %v567
        %v573 = vshll.u32 %v496, 16
        %v575 = vrot.slane %v573, 1
        %v576 = vsel %vm524, %v571, %v575
        %v577 = vshrl.u32 %v496, 16
        %v579 = vor.u32 %v577, %v575
        %v581 = vshll.u32 %v497, 16
        %v583 = vrot.slane %v581, 1
        %v584 = vsel %vm524, %v579, %v583
        %v585 = vshrl.u32 %v497, 16
        %v587 = vor.u32 %v585, %v583
        %v589 = vshll.u32 %v498, 16
        %v591 = vrot.slane %v589, 1
        %v592 = vsel %vm524, %v587, %v591
        %v593 = vshrl.u32 %v498, 16
        %v595 = vor.u32 %v593, %v591
        %v597 = vshll.u32 %v499, 16
        %v599 = vrot.slane %v597, 1
        %v600 = vsel %vm524, %v595, %v599
        %v601 = vshrl.u32 %v499, 16
        %v603 = vor.u32 %v601, %v599
        %v605 = vshll.u32 %v500, 16
        %v607 = vrot.slane %v605, 1
        %v608 = vsel %vm524, %v603, %v607
        %v609 = vshrl.u32 %v500, 16
        %v611 = vor.u32 %v609, %v607
        %v613 = vshll.u32 %v501, 16
        %v615 = vrot.slane %v613, 1
        %v616 = vsel %vm524, %v611, %v615
        %v617 = vshrl.u32 %v501, 16
        %v619 = vor.u32 %v617, %v615
        %v621 = vshll.u32 %v502, 16
        %v623 = vrot.slane %v621, 1
        %v624 = vsel %vm524, %v619, %v623
        %v625 = vshrl.u32 %v502, 16
        %v627 = vor.u32 %v625, %v623
        %v629 = vshll.u32 %v503, 16
        %v631 = vrot.slane %v629, 1
        %v632 = vsel %vm524, %v627, %v631
        %v633 = vshrl.u32 %v503, 16
        %v635 = vor.u32 %v633, %v631
        %v637 = vshll.u32 %v504, 16
        %v639 = vrot.slane %v637, 1
        %v640 = vsel %vm524, %v635, %v639
        %v641 = vshrl.u32 %v504, 16
        %v643 = vor.u32 %v641, %v639
        %v645 = vshll.u32 %v505, 16
        %v647 = vrot.slane %v645, 1
        %v648 = vsel %vm524, %v643, %v647
        %v649 = vshrl.u32 %v505, 16
        %v651 = vor.u32 %v649, %v647
        %v653 = vshll.u32 %v518, 16
        %v655 = vrot.slane %v653, 1
        %v656 = vsel %vm524, %v651, %v655
        %vm657 = vcmask 64512
        %v659 = vsel %vm657, %v536, 0
        %v662 = vsel %vm657, %v544, 0
        %v665 = vsel %vm657, %v552, 0
        %v668 = vsel %vm657, %v560, 0
        %v671 = vsel %vm657, %v568, 0
        %v674 = vsel %vm657, %v576, 0
        %v677 = vsel %vm657, %v584, 0
        %v680 = vsel %vm657, %v592, 0
        %v683 = vsel %vm657, %v600, 0
        %v686 = vsel %vm657, %v608, 0
        %v689 = vsel %vm657, %v616, 0
        %v692 = vsel %vm657, %v624, 0
        %v695 = vsel %vm657, %v632, 0
        %v698 = vsel %vm657, %v640, 0
        %v701 = vsel %vm657, %v648, 0
        %v704 = vsel %vm657, %v656, 0
        %vm706 = vcmask 1043456
        %v708 = vsel %vm706, %v523, 0
        %710 = vmatprep.subr.bf16.mxu0 0
        %711 = vmatpush1.bf16.msra.mxu0 %v708
        %712 = vmatprep.subr.bf16.mxu0 0
        %713 = vmatpush1.bf16.msra.mxu0 0
        %714 = vmatprep.subr.bf16.mxu0 0
        %715 = vmatpush1.bf16.msra.mxu0 0
        %716 = vmatprep.subr.bf16.mxu0 0
        %717 = vmatpush1.bf16.msra.mxu0 0
        %718 = vmatprep.subr.bf16.mxu0 0
        %719 = vmatpush1.bf16.msra.mxu0 0
        %720 = vmatprep.subr.bf16.mxu0 0
        %721 = vmatpush1.bf16.msra.mxu0 0
        %722 = vmatprep.subr.bf16.mxu0 0
        %723 = vmatpush1.bf16.msra.mxu0 0
        %724 = vmatprep.subr.bf16.mxu0 0
        %725 = vmatpush1.bf16.msra.mxu0 0
        %726 = vmatprep.subr.bf16.mxu0 0
        %727 = vmatpush1.bf16.msra.mxu0 0
        %728 = vmatprep.subr.bf16.mxu0 0
        %729 = vmatpush1.bf16.msra.mxu0 0
        %730 = vmatprep.subr.bf16.mxu0 0
        %731 = vmatpush1.bf16.msra.mxu0 0
        %732 = vmatprep.subr.bf16.mxu0 0
        %733 = vmatpush1.bf16.msra.mxu0 0
        %734 = vmatprep.subr.bf16.mxu0 0
        %735 = vmatpush1.bf16.msra.mxu0 0
        %736 = vmatprep.subr.bf16.mxu0 0
        %737 = vmatpush1.bf16.msra.mxu0 0
        %738 = vmatprep.subr.bf16.mxu0 0
        %739 = vmatpush1.bf16.msra.mxu0 0
        %740 = vmatprep.subr.bf16.mxu0 0
        %741 = vmatpush1.bf16.msra.mxu0 0
        %742 = vmatprep.mubr.bf16.mxu0 0
        %743 = vmatmul.mubr.bf16.gmra.mrb[0].mxu0 %v659
        %v744 = vpop.f32.mrb[0].mxu0
        %v745 = vadd.f32 0.0, %v744
        %v746 = vpop.f32.mrb[0].mxu0
        %v747 = vpop.f32.mrb[0].mxu0
        %v748 = vadd.f32 0.0, %v747
        %v749 = vpop.f32.mrb[0].mxu0
        %750 = vmatprep.mubr.bf16.mxu0 0
        %751 = vmatmul.mubr.bf16.gmra.mrb[0].mxu0 %v662
        %v752 = vpop.f32.mrb[0].mxu0
        %v753 = vadd.f32 0.0, %v752
        %v754 = vpop.f32.mrb[0].mxu0
        %v755 = vpop.f32.mrb[0].mxu0
        %v756 = vadd.f32 0.0, %v755
        %v757 = vpop.f32.mrb[0].mxu0
        %758 = vmatprep.mubr.bf16.mxu0 0
        %759 = vmatmul.mubr.bf16.gmra.mrb[0].mxu0 %v665
        %v760 = vpop.f32.mrb[0].mxu0
        %v761 = vadd.f32 0.0, %v760
        %v762 = vpop.f32.mrb[0].mxu0
        %v763 = vpop.f32.mrb[0].mxu0
        %v764 = vadd.f32 0.0, %v763
        %v765 = vpop.f32.mrb[0].mxu0
        %766 = vmatprep.mubr.bf16.mxu0 0
        %767 = vmatmul.mubr.bf16.gmra.mrb[0].mxu0 %v668
        %v768 = vpop.f32.mrb[0].mxu0
        %v769 = vadd.f32 0.0, %v768
        %v770 = vpop.f32.mrb[0].mxu0
        %v771 = vpop.f32.mrb[0].mxu0
        %v772 = vadd.f32 0.0, %v771
        %v773 = vpop.f32.mrb[0].mxu0
        %774 = vmatprep.mubr.bf16.mxu0 0
        %775 = vmatmul.mubr.bf16.gmra.mrb[0].mxu0 %v671
        %v776 = vpop.f32.mrb[0].mxu0
        %v777 = vadd.f32 0.0, %v776
        %v778 = vpop.f32.mrb[0].mxu0
        %v779 = vpop.f32.mrb[0].mxu0
        %v780 = vadd.f32 0.0, %v779
        %v781 = vpop.f32.mrb[0].mxu0
        %782 = vmatprep.mubr.bf16.mxu0 0
        %783 = vmatmul.mubr.bf16.gmra.mrb[0].mxu0 %v674
        %v784 = vpop.f32.mrb[0].mxu0
        %v785 = vadd.f32 0.0, %v784
        %v786 = vpop.f32.mrb[0].mxu0
        %v787 = vpop.f32.mrb[0].mxu0
        %v788 = vadd.f32 0.0, %v787
        %v789 = vpop.f32.mrb[0].mxu0
        %790 = vmatprep.mubr.bf16.mxu0 0
        %791 = vmatmul.mubr.bf16.gmra.mrb[0].mxu0 %v677
        %v792 = vpop.f32.mrb[0].mxu0
        %v793 = vadd.f32 0.0, %v792
        %v794 = vpop.f32.mrb[0].mxu0
        %v795 = vpop.f32.mrb[0].mxu0
        %v796 = vadd.f32 0.0, %v795
        %v797 = vpop.f32.mrb[0].mxu0
        %798 = vmatprep.mubr.bf16.mxu0 0
        %799 = vmatmul.mubr.bf16.gmra.mrb[0].mxu0 %v680
        %v800 = vpop.f32.mrb[0].mxu0
        %v801 = vadd.f32 0.0, %v800
        %v802 = vpop.f32.mrb[0].mxu0
        %v803 = vpop.f32.mrb[0].mxu0
        %v804 = vadd.f32 0.0, %v803
        %v805 = vpop.f32.mrb[0].mxu0
        %806 = vmatprep.mubr.bf16.mxu0 0
        %807 = vmatmul.mubr.bf16.gmra.mrb[0].mxu0 %v683
        %v808 = vpop.f32.mrb[0].mxu0
        %v809 = vadd.f32 0.0, %v808
        %v810 = vpop.f32.mrb[0].mxu0
        %v811 = vpop.f32.mrb[0].mxu0
        %v812 = vadd.f32 0.0, %v811
        %v813 = vpop.f32.mrb[0].mxu0
        %814 = vmatprep.mubr.bf16.mxu0 0
        %815 = vmatmul.mubr.bf16.gmra.mrb[0].mxu0 %v686
        %v816 = vpop.f32.mrb[0].mxu0
        %v817 = vadd.f32 0.0, %v816
        %v818 = vpop.f32.mrb[0].mxu0
        %v819 = vpop.f32.mrb[0].mxu0
        %v820 = vadd.f32 0.0, %v819
        %v821 = vpop.f32.mrb[0].mxu0
        %822 = vmatprep.mubr.bf16.mxu0 0
        %823 = vmatmul.mubr.bf16.gmra.mrb[0].mxu0 %v689
        %v824 = vpop.f32.mrb[0].mxu0
        %v825 = vadd.f32 0.0, %v824
        %v826 = vpop.f32.mrb[0].mxu0
        %v827 = vpop.f32.mrb[0].mxu0
        %v828 = vadd.f32 0.0, %v827
        %v829 = vpop.f32.mrb[0].mxu0
        %830 = vmatprep.mubr.bf16.mxu0 0
        %831 = vmatmul.mubr.bf16.gmra.mrb[0].mxu0 %v692
        %v832 = vpop.f32.mrb[0].mxu0
        %v833 = vadd.f32 0.0, %v832
        %v834 = vpop.f32.mrb[0].mxu0
        %v835 = vpop.f32.mrb[0].mxu0
        %v836 = vadd.f32 0.0, %v835
        %v837 = vpop.f32.mrb[0].mxu0
        %838 = vmatprep.mubr.bf16.mxu0 0
        %839 = vmatmul.mubr.bf16.gmra.mrb[0].mxu0 %v695
        %v840 = vpop.f32.mrb[0].mxu0
        %v841 = vadd.f32 0.0, %v840
        %v842 = vpop.f32.mrb[0].mxu0
        %v843 = vpop.f32.mrb[0].mxu0
        %v844 = vadd.f32 0.0, %v843
        %v845 = vpop.f32.mrb[0].mxu0
        %846 = vmatprep.mubr.bf16.mxu0 0
        %847 = vmatmul.mubr.bf16.gmra.mrb[0].mxu0 %v698
        %v848 = vpop.f32.mrb[0].mxu0
        %v849 = vadd.f32 0.0, %v848
        %v850 = vpop.f32.mrb[0].mxu0
        %v851 = vpop.f32.mrb[0].mxu0
        %v852 = vadd.f32 0.0, %v851
        %v853 = vpop.f32.mrb[0].mxu0
        %854 = vmatprep.mubr.bf16.mxu0 0
        %855 = vmatmul.mubr.bf16.gmra.mrb[0].mxu0 %v701
        %v856 = vpop.f32.mrb[0].mxu0
        %v857 = vadd.f32 0.0, %v856
        %v858 = vpop.f32.mrb[0].mxu0
        %v859 = vpop.f32.mrb[0].mxu0
        %v860 = vadd.f32 0.0, %v859
        %v861 = vpop.f32.mrb[0].mxu0
        %862 = vmatprep.mubr.bf16.mxu0 0
        %863 = vmatmul.mubr.bf16.gmra.mrb[0].mxu0 %v704
        %v864 = vpop.f32.mrb[0].mxu0
        %v865 = vadd.f32 0.0, %v864
        %v866 = vpop.f32.mrb[0].mxu0
        %v867 = vpop.f32.mrb[0].mxu0
        %v868 = vadd.f32 0.0, %v867
        %v869 = vpop.f32.mrb[0].mxu0
        %870 = vdwg.mxu0
        %v871 = vsel %vm657, %v490, 0
        %v873 = vsel %vm657, %v491, 0
        %v875 = vsel %vm657, %v492, 0
        %v877 = vsel %vm657, %v493, 0
        %v879 = vsel %vm657, %v494, 0
        %v881 = vsel %vm657, %v495, 0
        %v883 = vsel %vm657, %v496, 0
        %v885 = vsel %vm657, %v497, 0
        %v887 = vsel %vm657, %v498, 0
        %v889 = vsel %vm657, %v499, 0
        %v891 = vsel %vm657, %v500, 0
        %v893 = vsel %vm657, %v501, 0
        %v895 = vsel %vm657, %v502, 0
        %v897 = vsel %vm657, %v503, 0
        %v899 = vsel %vm657, %v504, 0
        %v901 = vsel %vm657, %v505, 0
        %v904 = vsel %vm706, %v521, 0
        %906 = vmatprep.subr.bf16.mxu0 0
        %907 = vmatpush1.bf16.msra.mxu0 %v904
        %908 = vmatprep.subr.bf16.mxu0 0
        %909 = vmatpush1.bf16.msra.mxu0 0
        %910 = vmatprep.subr.bf16.mxu0 0
        %911 = vmatpush1.bf16.msra.mxu0 0
        %912 = vmatprep.subr.bf16.mxu0 0
        %913 = vmatpush1.bf16.msra.mxu0 0
        %914 = vmatprep.subr.bf16.mxu0 0
        %915 = vmatpush1.bf16.msra.mxu0 0
        %916 = vmatprep.subr.bf16.mxu0 0
        %917 = vmatpush1.bf16.msra.mxu0 0
        %918 = vmatprep.subr.bf16.mxu0 0
        %919 = vmatpush1.bf16.msra.mxu0 0
        %920 = vmatprep.subr.bf16.mxu0 0
        %921 = vmatpush1.bf16.msra.mxu0 0
        %922 = vmatprep.subr.bf16.mxu0 0
        %923 = vmatpush1.bf16.msra.mxu0 0
        %924 = vmatprep.subr.bf16.mxu0 0
        %925 = vmatpush1.bf16.msra.mxu0 0
        %926 = vmatprep.subr.bf16.mxu0 0
        %927 = vmatpush1.bf16.msra.mxu0 0
        %928 = vmatprep.subr.bf16.mxu0 0
        %929 = vmatpush1.bf16.msra.mxu0 0
        %930 = vmatprep.subr.bf16.mxu0 0
        %931 = vmatpush1.bf16.msra.mxu0 0
        %932 = vmatprep.subr.bf16.mxu0 0
        %933 = vmatpush1.bf16.msra.mxu0 0
        %934 = vmatprep.subr.bf16.mxu0 0
        %935 = vmatpush1.bf16.msra.mxu0 0
        %936 = vmatprep.subr.bf16.mxu0 0
        %937 = vmatpush1.bf16.msra.mxu0 0
        %938 = vmatprep.mubr.bf16.mxu0 0
        %939 = vmatmul.mubr.bf16.gmra.mrb[0].mxu0 %v871
        %v940 = vpop.f32.mrb[0].mxu0
        %v941 = vadd.f32 %v745, %v940
        %v942 = vpop.f32.mrb[0].mxu0
        %v943 = vpop.f32.mrb[0].mxu0
        %v944 = vadd.f32 %v748, %v943
        %v945 = vpop.f32.mrb[0].mxu0
        %946 = vmatprep.mubr.bf16.mxu0 0
        %947 = vmatmul.mubr.bf16.gmra.mrb[0].mxu0 %v873
        %v948 = vpop.f32.mrb[0].mxu0
        %v949 = vadd.f32 %v753, %v948
        %v950 = vpop.f32.mrb[0].mxu0
        %v951 = vpop.f32.mrb[0].mxu0
        %v952 = vadd.f32 %v756, %v951
        %v953 = vpop.f32.mrb[0].mxu0
        %954 = vmatprep.mubr.bf16.mxu0 0
        %955 = vmatmul.mubr.bf16.gmra.mrb[0].mxu0 %v875
        %v956 = vpop.f32.mrb[0].mxu0
        %v957 = vadd.f32 %v761, %v956
        %v958 = vpop.f32.mrb[0].mxu0
        %v959 = vpop.f32.mrb[0].mxu0
        %v960 = vadd.f32 %v764, %v959
        %v961 = vpop.f32.mrb[0].mxu0
        %962 = vmatprep.mubr.bf16.mxu0 0
        %963 = vmatmul.mubr.bf16.gmra.mrb[0].mxu0 %v877
        %v964 = vpop.f32.mrb[0].mxu0
        %v965 = vadd.f32 %v769, %v964
        %v966 = vpop.f32.mrb[0].mxu0
        %v967 = vpop.f32.mrb[0].mxu0
        %v968 = vadd.f32 %v772, %v967
        %v969 = vpop.f32.mrb[0].mxu0
        %970 = vmatprep.mubr.bf16.mxu0 0
        %971 = vmatmul.mubr.bf16.gmra.mrb[0].mxu0 %v879
        %v972 = vpop.f32.mrb[0].mxu0
        %v973 = vadd.f32 %v777, %v972
        %v974 = vpop.f32.mrb[0].mxu0
        %v975 = vpop.f32.mrb[0].mxu0
        %v976 = vadd.f32 %v780, %v975
        %v977 = vpop.f32.mrb[0].mxu0
        %978 = vmatprep.mubr.bf16.mxu0 0
        %979 = vmatmul.mubr.bf16.gmra.mrb[0].mxu0 %v881
        %v980 = vpop.f32.mrb[0].mxu0
        %v981 = vadd.f32 %v785, %v980
        %v982 = vpop.f32.mrb[0].mxu0
        %v983 = vpop.f32.mrb[0].mxu0
        %v984 = vadd.f32 %v788, %v983
        %v985 = vpop.f32.mrb[0].mxu0
        %986 = vmatprep.mubr.bf16.mxu0 0
        %987 = vmatmul.mubr.bf16.gmra.mrb[0].mxu0 %v883
        %v988 = vpop.f32.mrb[0].mxu0
        %v989 = vadd.f32 %v793, %v988
        %v990 = vpop.f32.mrb[0].mxu0
        %v991 = vpop.f32.mrb[0].mxu0
        %v992 = vadd.f32 %v796, %v991
        %v993 = vpop.f32.mrb[0].mxu0
        %994 = vmatprep.mubr.bf16.mxu0 0
        %995 = vmatmul.mubr.bf16.gmra.mrb[0].mxu0 %v885
        %v996 = vpop.f32.mrb[0].mxu0
        %v997 = vadd.f32 %v801, %v996
        %v998 = vpop.f32.mrb[0].mxu0
        %v999 = vpop.f32.mrb[0].mxu0
        %v1000 = vadd.f32 %v804, %v999
        %v1001 = vpop.f32.mrb[0].mxu0
        %1002 = vmatprep.mubr.bf16.mxu0 0
        %1003 = vmatmul.mubr.bf16.gmra.mrb[0].mxu0 %v887
        %v1004 = vpop.f32.mrb[0].mxu0
        %v1005 = vadd.f32 %v809, %v1004
        %v1006 = vpop.f32.mrb[0].mxu0
        %v1007 = vpop.f32.mrb[0].mxu0
        %v1008 = vadd.f32 %v812, %v1007
        %v1009 = vpop.f32.mrb[0].mxu0
        %1010 = vmatprep.mubr.bf16.mxu0 0
        %1011 = vmatmul.mubr.bf16.gmra.mrb[0].mxu0 %v889
        %v1012 = vpop.f32.mrb[0].mxu0
        %v1013 = vadd.f32 %v817, %v1012
        %v1014 = vpop.f32.mrb[0].mxu0
        %v1015 = vpop.f32.mrb[0].mxu0
        %v1016 = vadd.f32 %v820, %v1015
        %v1017 = vpop.f32.mrb[0].mxu0
        %1018 = vmatprep.mubr.bf16.mxu0 0
        %1019 = vmatmul.mubr.bf16.gmra.mrb[0].mxu0 %v891
        %v1020 = vpop.f32.mrb[0].mxu0
        %v1021 = vadd.f32 %v825, %v1020
        %v1022 = vpop.f32.mrb[0].mxu0
        %v1023 = vpop.f32.mrb[0].mxu0
        %v1024 = vadd.f32 %v828, %v1023
        %v1025 = vpop.f32.mrb[0].mxu0
        %1026 = vmatprep.mubr.bf16.mxu0 0
        %1027 = vmatmul.mubr.bf16.gmra.mrb[0].mxu0 %v893
        %v1028 = vpop.f32.mrb[0].mxu0
        %v1029 = vadd.f32 %v833, %v1028
        %v1030 = vpop.f32.mrb[0].mxu0
        %v1031 = vpop.f32.mrb[0].mxu0
        %v1032 = vadd.f32 %v836, %v1031
        %v1033 = vpop.f32.mrb[0].mxu0
        %1034 = vmatprep.mubr.bf16.mxu0 0
        %1035 = vmatmul.mubr.bf16.gmra.mrb[0].mxu0 %v895
        %v1036 = vpop.f32.mrb[0].mxu0
        %v1037 = vadd.f32 %v841, %v1036
        %v1038 = vpop.f32.mrb[0].mxu0
        %v1039 = vpop.f32.mrb[0].mxu0
        %v1040 = vadd.f32 %v844, %v1039
        %v1041 = vpop.f32.mrb[0].mxu0
        %1042 = vmatprep.mubr.bf16.mxu0 0
        %1043 = vmatmul.mubr.bf16.gmra.mrb[0].mxu0 %v897
        %v1044 = vpop.f32.mrb[0].mxu0
        %v1045 = vadd.f32 %v849, %v1044
        %v1046 = vpop.f32.mrb[0].mxu0
        %v1047 = vpop.f32.mrb[0].mxu0
        %v1048 = vadd.f32 %v852, %v1047
        %v1049 = vpop.f32.mrb[0].mxu0
        %1050 = vmatprep.mubr.bf16.mxu0 0
        %1051 = vmatmul.mubr.bf16.gmra.mrb[0].mxu0 %v899
        %v1052 = vpop.f32.mrb[0].mxu0
        %v1053 = vadd.f32 %v857, %v1052
        %v1054 = vpop.f32.mrb[0].mxu0
        %v1055 = vpop.f32.mrb[0].mxu0
        %v1056 = vadd.f32 %v860, %v1055
        %v1057 = vpop.f32.mrb[0].mxu0
        %1058 = vmatprep.mubr.bf16.mxu0 0
        %1059 = vmatmul.mubr.bf16.gmra.mrb[0].mxu0 %v901
        %v1060 = vpop.f32.mrb[0].mxu0
        %v1061 = vadd.f32 %v865, %v1060
        %v1062 = vpop.f32.mrb[0].mxu0
        %v1063 = vpop.f32.mrb[0].mxu0
        %v1064 = vadd.f32 %v868, %v1063
        %v1065 = vpop.f32.mrb[0].mxu0
        %1066 = vdwg.mxu0
        %s1067 = scalar_lea.vmem %s2, 8
        %v1068 = vld [vmem:[%s1067] sm:$0xf]
        %vm1069 = vcmask 1046528
        %v1070 = vrot.slane %v490, 1
        %v1071 = vrot.slane %v491, 1
        %v1072 = vsel %vm1069, %v1070, %v1071
        %v1073 = vrot.slane %v492, 1
        %v1074 = vsel %vm1069, %v1071, %v1073
        %v1075 = vrot.slane %v493, 1
        %v1076 = vsel %vm1069, %v1073, %v1075
        %v1077 = vrot.slane %v494, 1
        %v1078 = vsel %vm1069, %v1075, %v1077
        %v1079 = vrot.slane %v495, 1
        %v1080 = vsel %vm1069, %v1077, %v1079
        %v1081 = vrot.slane %v496, 1
        %v1082 = vsel %vm1069, %v1079, %v1081
        %v1083 = vrot.slane %v497, 1
        %v1084 = vsel %vm1069, %v1081, %v1083
        %v1085 = vrot.slane %v498, 1
        %v1086 = vsel %vm1069, %v1083, %v1085
        %v1087 = vrot.slane %v499, 1
        %v1088 = vsel %vm1069, %v1085, %v1087
        %v1089 = vrot.slane %v500, 1
        %v1090 = vsel %vm1069, %v1087, %v1089
        %v1091 = vrot.slane %v501, 1
        %v1092 = vsel %vm1069, %v1089, %v1091
        %v1093 = vrot.slane %v502, 1
        %v1094 = vsel %vm1069, %v1091, %v1093
        %v1095 = vrot.slane %v503, 1
        %v1096 = vsel %vm1069, %v1093, %v1095
        %v1097 = vrot.slane %v504, 1
        %v1098 = vsel %vm1069, %v1095, %v1097
        %v1099 = vrot.slane %v505, 1
        %v1100 = vsel %vm1069, %v1097, %v1099
        %v1101 = vrot.slane %v518, 1
        %v1102 = vsel %vm1069, %v1099, %v1101
        %v1104 = vsel %vm657, %v1072, 0
        %v1107 = vsel %vm657, %v1074, 0
        %v1110 = vsel %vm657, %v1076, 0
        %v1113 = vsel %vm657, %v1078, 0
        %v1116 = vsel %vm657, %v1080, 0
        %v1119 = vsel %vm657, %v1082, 0
        %v1122 = vsel %vm657, %v1084, 0
        %v1125 = vsel %vm657, %v1086, 0
        %v1128 = vsel %vm657, %v1088, 0
        %v1131 = vsel %vm657, %v1090, 0
        %v1134 = vsel %vm657, %v1092, 0
        %v1137 = vsel %vm657, %v1094, 0
        %v1140 = vsel %vm657, %v1096, 0
        %v1143 = vsel %vm657, %v1098, 0
        %v1146 = vsel %vm657, %v1100, 0
        %v1149 = vsel %vm657, %v1102, 0
        %v1152 = vsel %vm706, %v1068, 0
        %1154 = vmatprep.subr.bf16.mxu0 0
        %1155 = vmatpush1.bf16.msra.mxu0 %v1152
        %1156 = vmatprep.subr.bf16.mxu0 0
        %1157 = vmatpush1.bf16.msra.mxu0 0
        %1158 = vmatprep.subr.bf16.mxu0 0
        %1159 = vmatpush1.bf16.msra.mxu0 0
        %1160 = vmatprep.subr.bf16.mxu0 0
        %1161 = vmatpush1.bf16.msra.mxu0 0
        %1162 = vmatprep.subr.bf16.mxu0 0
        %1163 = vmatpush1.bf16.msra.mxu0 0
        %1164 = vmatprep.subr.bf16.mxu0 0
        %1165 = vmatpush1.bf16.msra.mxu0 0
        %1166 = vmatprep.subr.bf16.mxu0 0
        %1167 = vmatpush1.bf16.msra.mxu0 0
        %1168 = vmatprep.subr.bf16.mxu0 0
        %1169 = vmatpush1.bf16.msra.mxu0 0
        %1170 = vmatprep.subr.bf16.mxu0 0
        %1171 = vmatpush1.bf16.msra.mxu0 0
        %1172 = vmatprep.subr.bf16.mxu0 0
        %1173 = vmatpush1.bf16.msra.mxu0 0
        %1174 = vmatprep.subr.bf16.mxu0 0
        %1175 = vmatpush1.bf16.msra.mxu0 0
        %1176 = vmatprep.subr.bf16.mxu0 0
        %1177 = vmatpush1.bf16.msra.mxu0 0
        %1178 = vmatprep.subr.bf16.mxu0 0
        %1179 = vmatpush1.bf16.msra.mxu0 0
        %1180 = vmatprep.subr.bf16.mxu0 0
        %1181 = vmatpush1.bf16.msra.mxu0 0
        %1182 = vmatprep.subr.bf16.mxu0 0
        %1183 = vmatpush1.bf16.msra.mxu0 0
        %1184 = vmatprep.subr.bf16.mxu0 0
        %1185 = vmatpush1.bf16.msra.mxu0 0
        %1186 = vmatprep.mubr.bf16.mxu0 0
        %1187 = vmatmul.mubr.bf16.gmra.mrb[0].mxu0 %v1104
        %v1188 = vpop.f32.mrb[0].mxu0
        %v1189 = vadd.f32 0.0, %v1188
        %v1190 = vpop.f32.mrb[0].mxu0
        %v1191 = vpop.f32.mrb[0].mxu0
        %v1192 = vadd.f32 0.0, %v1191
        %v1193 = vpop.f32.mrb[0].mxu0
        %1194 = vmatprep.mubr.bf16.mxu0 0
        %1195 = vmatmul.mubr.bf16.gmra.mrb[0].mxu0 %v1107
        %v1196 = vpop.f32.mrb[0].mxu0
        %v1197 = vadd.f32 0.0, %v1196
        %v1198 = vpop.f32.mrb[0].mxu0
        %v1199 = vpop.f32.mrb[0].mxu0
        %v1200 = vadd.f32 0.0, %v1199
        %v1201 = vpop.f32.mrb[0].mxu0
        %1202 = vmatprep.mubr.bf16.mxu0 0
        %1203 = vmatmul.mubr.bf16.gmra.mrb[0].mxu0 %v1110
        %v1204 = vpop.f32.mrb[0].mxu0
        %v1205 = vadd.f32 0.0, %v1204
        %v1206 = vpop.f32.mrb[0].mxu0
        %v1207 = vpop.f32.mrb[0].mxu0
        %v1208 = vadd.f32 0.0, %v1207
        %v1209 = vpop.f32.mrb[0].mxu0
        %1210 = vmatprep.mubr.bf16.mxu0 0
        %1211 = vmatmul.mubr.bf16.gmra.mrb[0].mxu0 %v1113
        %v1212 = vpop.f32.mrb[0].mxu0
        %v1213 = vadd.f32 0.0, %v1212
        %v1214 = vpop.f32.mrb[0].mxu0
        %v1215 = vpop.f32.mrb[0].mxu0
        %v1216 = vadd.f32 0.0, %v1215
        %v1217 = vpop.f32.mrb[0].mxu0
        %1218 = vmatprep.mubr.bf16.mxu0 0
        %1219 = vmatmul.mubr.bf16.gmra.mrb[0].mxu0 %v1116
        %v1220 = vpop.f32.mrb[0].mxu0
        %v1221 = vadd.f32 0.0, %v1220
        %v1222 = vpop.f32.mrb[0].mxu0
        %v1223 = vpop.f32.mrb[0].mxu0
        %v1224 = vadd.f32 0.0, %v1223
        %v1225 = vpop.f32.mrb[0].mxu0
        %1226 = vmatprep.mubr.bf16.mxu0 0
        %1227 = vmatmul.mubr.bf16.gmra.mrb[0].mxu0 %v1119
        %v1228 = vpop.f32.mrb[0].mxu0
        %v1229 = vadd.f32 0.0, %v1228
        %v1230 = vpop.f32.mrb[0].mxu0
        %v1231 = vpop.f32.mrb[0].mxu0
        %v1232 = vadd.f32 0.0, %v1231
        %v1233 = vpop.f32.mrb[0].mxu0
        %1234 = vmatprep.mubr.bf16.mxu0 0
        %1235 = vmatmul.mubr.bf16.gmra.mrb[0].mxu0 %v1122
        %v1236 = vpop.f32.mrb[0].mxu0
        %v1237 = vadd.f32 0.0, %v1236
        %v1238 = vpop.f32.mrb[0].mxu0
        %v1239 = vpop.f32.mrb[0].mxu0
        %v1240 = vadd.f32 0.0, %v1239
        %v1241 = vpop.f32.mrb[0].mxu0
        %1242 = vmatprep.mubr.bf16.mxu0 0
        %1243 = vmatmul.mubr.bf16.gmra.mrb[0].mxu0 %v1125
        %v1244 = vpop.f32.mrb[0].mxu0
        %v1245 = vadd.f32 0.0, %v1244
        %v1246 = vpop.f32.mrb[0].mxu0
        %v1247 = vpop.f32.mrb[0].mxu0
        %v1248 = vadd.f32 0.0, %v1247
        %v1249 = vpop.f32.mrb[0].mxu0
        %1250 = vmatprep.mubr.bf16.mxu0 0
        %1251 = vmatmul.mubr.bf16.gmra.mrb[0].mxu0 %v1128
        %v1252 = vpop.f32.mrb[0].mxu0
        %v1253 = vadd.f32 0.0, %v1252
        %v1254 = vpop.f32.mrb[0].mxu0
        %v1255 = vpop.f32.mrb[0].mxu0
        %v1256 = vadd.f32 0.0, %v1255
        %v1257 = vpop.f32.mrb[0].mxu0
        %1258 = vmatprep.mubr.bf16.mxu0 0
        %1259 = vmatmul.mubr.bf16.gmra.mrb[0].mxu0 %v1131
        %v1260 = vpop.f32.mrb[0].mxu0
        %v1261 = vadd.f32 0.0, %v1260
        %v1262 = vpop.f32.mrb[0].mxu0
        %v1263 = vpop.f32.mrb[0].mxu0
        %v1264 = vadd.f32 0.0, %v1263
        %v1265 = vpop.f32.mrb[0].mxu0
        %1266 = vmatprep.mubr.bf16.mxu0 0
        %1267 = vmatmul.mubr.bf16.gmra.mrb[0].mxu0 %v1134
        %v1268 = vpop.f32.mrb[0].mxu0
        %v1269 = vadd.f32 0.0, %v1268
        %v1270 = vpop.f32.mrb[0].mxu0
        %v1271 = vpop.f32.mrb[0].mxu0
        %v1272 = vadd.f32 0.0, %v1271
        %v1273 = vpop.f32.mrb[0].mxu0
        %1274 = vmatprep.mubr.bf16.mxu0 0
        %1275 = vmatmul.mubr.bf16.gmra.mrb[0].mxu0 %v1137
        %v1276 = vpop.f32.mrb[0].mxu0
        %v1277 = vadd.f32 0.0, %v1276
        %v1278 = vpop.f32.mrb[0].mxu0
        %v1279 = vpop.f32.mrb[0].mxu0
        %v1280 = vadd.f32 0.0, %v1279
        %v1281 = vpop.f32.mrb[0].mxu0
        %1282 = vmatprep.mubr.bf16.mxu0 0
        %1283 = vmatmul.mubr.bf16.gmra.mrb[0].mxu0 %v1140
        %v1284 = vpop.f32.mrb[0].mxu0
        %v1285 = vadd.f32 0.0, %v1284
        %v1286 = vpop.f32.mrb[0].mxu0
        %v1287 = vpop.f32.mrb[0].mxu0
        %v1288 = vadd.f32 0.0, %v1287
        %v1289 = vpop.f32.mrb[0].mxu0
        %1290 = vmatprep.mubr.bf16.mxu0 0
        %1291 = vmatmul.mubr.bf16.gmra.mrb[0].mxu0 %v1143
        %v1292 = vpop.f32.mrb[0].mxu0
        %v1293 = vadd.f32 0.0, %v1292
        %v1294 = vpop.f32.mrb[0].mxu0
        %v1295 = vpop.f32.mrb[0].mxu0
        %v1296 = vadd.f32 0.0, %v1295
        %v1297 = vpop.f32.mrb[0].mxu0
        %1298 = vmatprep.mubr.bf16.mxu0 0
        %1299 = vmatmul.mubr.bf16.gmra.mrb[0].mxu0 %v1146
        %v1300 = vpop.f32.mrb[0].mxu0
        %v1301 = vadd.f32 0.0, %v1300
        %v1302 = vpop.f32.mrb[0].mxu0
        %v1303 = vpop.f32.mrb[0].mxu0
        %v1304 = vadd.f32 0.0, %v1303
        %v1305 = vpop.f32.mrb[0].mxu0
        %1306 = vmatprep.mubr.bf16.mxu0 0
        %1307 = vmatmul.mubr.bf16.gmra.mrb[0].mxu0 %v1149
        %v1308 = vpop.f32.mrb[0].mxu0
        %v1309 = vadd.f32 0.0, %v1308
        %v1310 = vpop.f32.mrb[0].mxu0
        %v1311 = vpop.f32.mrb[0].mxu0
        %v1312 = vadd.f32 0.0, %v1311
        %v1313 = vpop.f32.mrb[0].mxu0
        %1314 = vdwg.mxu0
        %v1315 = vadd.f32 %v941, %v1189
        %v1316 = vadd.f32 %v944, %v1192
        %v1317 = vadd.f32 %v949, %v1197
        %v1318 = vadd.f32 %v952, %v1200
        %v1319 = vadd.f32 %v957, %v1205
        %v1320 = vadd.f32 %v960, %v1208
        %v1321 = vadd.f32 %v965, %v1213
        %v1322 = vadd.f32 %v968, %v1216
        %v1323 = vadd.f32 %v973, %v1221
        %v1324 = vadd.f32 %v976, %v1224
        %v1325 = vadd.f32 %v981, %v1229
        %v1326 = vadd.f32 %v984, %v1232
        %v1327 = vadd.f32 %v989, %v1237
        %v1328 = vadd.f32 %v992, %v1240
        %v1329 = vadd.f32 %v997, %v1245
        %v1330 = vadd.f32 %v1000, %v1248
        %v1331 = vadd.f32 %v1005, %v1253
        %v1332 = vadd.f32 %v1008, %v1256
        %v1333 = vadd.f32 %v1013, %v1261
        %v1334 = vadd.f32 %v1016, %v1264
        %v1335 = vadd.f32 %v1021, %v1269
        %v1336 = vadd.f32 %v1024, %v1272
        %v1337 = vadd.f32 %v1029, %v1277
        %v1338 = vadd.f32 %v1032, %v1280
        %v1339 = vadd.f32 %v1037, %v1285
        %v1340 = vadd.f32 %v1040, %v1288
        %v1341 = vadd.f32 %v1045, %v1293
        %v1342 = vadd.f32 %v1048, %v1296
        %v1343 = vadd.f32 %v1053, %v1301
        %v1344 = vadd.f32 %v1056, %v1304
        %v1345 = vadd.f32 %v1061, %v1309
        %v1346 = vadd.f32 %v1064, %v1312
        %s1347 = scalar_lea.vmem %s2, 12
        %v1348 = vld [vmem:[%s1347] sm:$0xf]
        %v1349 = vrot.slane %v519, 1
        %v1350 = vsel %vm1069, %v1101, %v1349
        %v1352 = vsel %vm657, %v1350, 0
        %v1355 = vsel %vm706, %v1348, 0
        %1357 = vmatprep.subr.bf16.mxu0 0
        %1358 = vmatpush1.bf16.msra.mxu0 %v1355
        %1359 = vmatprep.subr.bf16.mxu0 0
        %1360 = vmatpush1.bf16.msra.mxu0 0
        %1361 = vmatprep.subr.bf16.mxu0 0
        %1362 = vmatpush1.bf16.msra.mxu0 0
        %1363 = vmatprep.subr.bf16.mxu0 0
        %1364 = vmatpush1.bf16.msra.mxu0 0
        %1365 = vmatprep.subr.bf16.mxu0 0
        %1366 = vmatpush1.bf16.msra.mxu0 0
        %1367 = vmatprep.subr.bf16.mxu0 0
        %1368 = vmatpush1.bf16.msra.mxu0 0
        %1369 = vmatprep.subr.bf16.mxu0 0
        %1370 = vmatpush1.bf16.msra.mxu0 0
        %1371 = vmatprep.subr.bf16.mxu0 0
        %1372 = vmatpush1.bf16.msra.mxu0 0
        %1373 = vmatprep.subr.bf16.mxu0 0
        %1374 = vmatpush1.bf16.msra.mxu0 0
        %1375 = vmatprep.subr.bf16.mxu0 0
        %1376 = vmatpush1.bf16.msra.mxu0 0
        %1377 = vmatprep.subr.bf16.mxu0 0
        %1378 = vmatpush1.bf16.msra.mxu0 0
        %1379 = vmatprep.subr.bf16.mxu0 0
        %1380 = vmatpush1.bf16.msra.mxu0 0
        %1381 = vmatprep.subr.bf16.mxu0 0
        %1382 = vmatpush1.bf16.msra.mxu0 0
        %1383 = vmatprep.subr.bf16.mxu0 0
        %1384 = vmatpush1.bf16.msra.mxu0 0
        %1385 = vmatprep.subr.bf16.mxu0 0
        %1386 = vmatpush1.bf16.msra.mxu0 0
        %1387 = vmatprep.subr.bf16.mxu0 0
        %1388 = vmatpush1.bf16.msra.mxu0 0
        %1389 = vmatprep.mubr.bf16.mxu0 0
        %1390 = vmatmul.mubr.bf16.gmra.mrb[0].mxu0 %v1107
        %v1391 = vpop.f32.mrb[0].mxu0
        %v1392 = vadd.f32 0.0, %v1391
        %v1393 = vpop.f32.mrb[0].mxu0
        %v1394 = vpop.f32.mrb[0].mxu0
        %v1395 = vadd.f32 0.0, %v1394
        %v1396 = vpop.f32.mrb[0].mxu0
        %1397 = vmatprep.mubr.bf16.mxu0 0
        %1398 = vmatmul.mubr.bf16.gmra.mrb[0].mxu0 %v1110
        %v1399 = vpop.f32.mrb[0].mxu0
        %v1400 = vadd.f32 0.0, %v1399
        %v1401 = vpop.f32.mrb[0].mxu0
        %v1402 = vpop.f32.mrb[0].mxu0
        %v1403 = vadd.f32 0.0, %v1402
        %v1404 = vpop.f32.mrb[0].mxu0
        %1405 = vmatprep.mubr.bf16.mxu0 0
        %1406 = vmatmul.mubr.bf16.gmra.mrb[0].mxu0 %v1113
        %v1407 = vpop.f32.mrb[0].mxu0
        %v1408 = vadd.f32 0.0, %v1407
        %v1409 = vpop.f32.mrb[0].mxu0
        %v1410 = vpop.f32.mrb[0].mxu0
        %v1411 = vadd.f32 0.0, %v1410
        %v1412 = vpop.f32.mrb[0].mxu0
        %1413 = vmatprep.mubr.bf16.mxu0 0
        %1414 = vmatmul.mubr.bf16.gmra.mrb[0].mxu0 %v1116
        %v1415 = vpop.f32.mrb[0].mxu0
        %v1416 = vadd.f32 0.0, %v1415
        %v1417 = vpop.f32.mrb[0].mxu0
        %v1418 = vpop.f32.mrb[0].mxu0
        %v1419 = vadd.f32 0.0, %v1418
        %v1420 = vpop.f32.mrb[0].mxu0
        %1421 = vmatprep.mubr.bf16.mxu0 0
        %1422 = vmatmul.mubr.bf16.gmra.mrb[0].mxu0 %v1119
        %v1423 = vpop.f32.mrb[0].mxu0
        %v1424 = vadd.f32 0.0, %v1423
        %v1425 = vpop.f32.mrb[0].mxu0
        %v1426 = vpop.f32.mrb[0].mxu0
        %v1427 = vadd.f32 0.0, %v1426
        %v1428 = vpop.f32.mrb[0].mxu0
        %1429 = vmatprep.mubr.bf16.mxu0 0
        %1430 = vmatmul.mubr.bf16.gmra.mrb[0].mxu0 %v1122
        %v1431 = vpop.f32.mrb[0].mxu0
        %v1432 = vadd.f32 0.0, %v1431
        %v1433 = vpop.f32.mrb[0].mxu0
        %v1434 = vpop.f32.mrb[0].mxu0
        %v1435 = vadd.f32 0.0, %v1434
        %v1436 = vpop.f32.mrb[0].mxu0
        %1437 = vmatprep.mubr.bf16.mxu0 0
        %1438 = vmatmul.mubr.bf16.gmra.mrb[0].mxu0 %v1125
        %v1439 = vpop.f32.mrb[0].mxu0
        %v1440 = vadd.f32 0.0, %v1439
        %v1441 = vpop.f32.mrb[0].mxu0
        %v1442 = vpop.f32.mrb[0].mxu0
        %v1443 = vadd.f32 0.0, %v1442
        %v1444 = vpop.f32.mrb[0].mxu0
        %1445 = vmatprep.mubr.bf16.mxu0 0
        %1446 = vmatmul.mubr.bf16.gmra.mrb[0].mxu0 %v1128
        %v1447 = vpop.f32.mrb[0].mxu0
        %v1448 = vadd.f32 0.0, %v1447
        %v1449 = vpop.f32.mrb[0].mxu0
        %v1450 = vpop.f32.mrb[0].mxu0
        %v1451 = vadd.f32 0.0, %v1450
        %v1452 = vpop.f32.mrb[0].mxu0
        %1453 = vmatprep.mubr.bf16.mxu0 0
        %1454 = vmatmul.mubr.bf16.gmra.mrb[0].mxu0 %v1131
        %v1455 = vpop.f32.mrb[0].mxu0
        %v1456 = vadd.f32 0.0, %v1455
        %v1457 = vpop.f32.mrb[0].mxu0
        %v1458 = vpop.f32.mrb[0].mxu0
        %v1459 = vadd.f32 0.0, %v1458
        %v1460 = vpop.f32.mrb[0].mxu0
        %1461 = vmatprep.mubr.bf16.mxu0 0
        %1462 = vmatmul.mubr.bf16.gmra.mrb[0].mxu0 %v1134
        %v1463 = vpop.f32.mrb[0].mxu0
        %v1464 = vadd.f32 0.0, %v1463
        %v1465 = vpop.f32.mrb[0].mxu0
        %v1466 = vpop.f32.mrb[0].mxu0
        %v1467 = vadd.f32 0.0, %v1466
        %v1468 = vpop.f32.mrb[0].mxu0
        %1469 = vmatprep.mubr.bf16.mxu0 0
        %1470 = vmatmul.mubr.bf16.gmra.mrb[0].mxu0 %v1137
        %v1471 = vpop.f32.mrb[0].mxu0
        %v1472 = vadd.f32 0.0, %v1471
        %v1473 = vpop.f32.mrb[0].mxu0
        %v1474 = vpop.f32.mrb[0].mxu0
        %v1475 = vadd.f32 0.0, %v1474
        %v1476 = vpop.f32.mrb[0].mxu0
        %1477 = vmatprep.mubr.bf16.mxu0 0
        %1478 = vmatmul.mubr.bf16.gmra.mrb[0].mxu0 %v1140
        %v1479 = vpop.f32.mrb[0].mxu0
        %v1480 = vadd.f32 0.0, %v1479
        %v1481 = vpop.f32.mrb[0].mxu0
        %v1482 = vpop.f32.mrb[0].mxu0
        %v1483 = vadd.f32 0.0, %v1482
        %v1484 = vpop.f32.mrb[0].mxu0
        %1485 = vmatprep.mubr.bf16.mxu0 0
        %1486 = vmatmul.mubr.bf16.gmra.mrb[0].mxu0 %v1143
        %v1487 = vpop.f32.mrb[0].mxu0
        %v1488 = vadd.f32 0.0, %v1487
        %v1489 = vpop.f32.mrb[0].mxu0
        %v1490 = vpop.f32.mrb[0].mxu0
        %v1491 = vadd.f32 0.0, %v1490
        %v1492 = vpop.f32.mrb[0].mxu0
        %1493 = vmatprep.mubr.bf16.mxu0 0
        %1494 = vmatmul.mubr.bf16.gmra.mrb[0].mxu0 %v1146
        %v1495 = vpop.f32.mrb[0].mxu0
        %v1496 = vadd.f32 0.0, %v1495
        %v1497 = vpop.f32.mrb[0].mxu0
        %v1498 = vpop.f32.mrb[0].mxu0
        %v1499 = vadd.f32 0.0, %v1498
        %v1500 = vpop.f32.mrb[0].mxu0
        %1501 = vmatprep.mubr.bf16.mxu0 0
        %1502 = vmatmul.mubr.bf16.gmra.mrb[0].mxu0 %v1149
        %v1503 = vpop.f32.mrb[0].mxu0
        %v1504 = vadd.f32 0.0, %v1503
        %v1505 = vpop.f32.mrb[0].mxu0
        %v1506 = vpop.f32.mrb[0].mxu0
        %v1507 = vadd.f32 0.0, %v1506
        %v1508 = vpop.f32.mrb[0].mxu0
        %1509 = vmatprep.mubr.bf16.mxu0 0
        %1510 = vmatmul.mubr.bf16.gmra.mrb[0].mxu0 %v1352
        %v1511 = vpop.f32.mrb[0].mxu0
        %v1512 = vadd.f32 0.0, %v1511
        %v1513 = vpop.f32.mrb[0].mxu0
        %v1514 = vpop.f32.mrb[0].mxu0
        %v1515 = vadd.f32 0.0, %v1514
        %v1516 = vpop.f32.mrb[0].mxu0
        %1517 = vdwg.mxu0
        %v1518 = vadd.f32 %v1315, %v1392
        %v1519 = vadd.f32 %v1316, %v1395
        %v1520 = vadd.f32 %v1317, %v1400
        %v1521 = vadd.f32 %v1318, %v1403
        %v1522 = vadd.f32 %v1319, %v1408
        %v1523 = vadd.f32 %v1320, %v1411
        %v1524 = vadd.f32 %v1321, %v1416
        %v1525 = vadd.f32 %v1322, %v1419
        %v1526 = vadd.f32 %v1323, %v1424
        %v1527 = vadd.f32 %v1324, %v1427
        %v1528 = vadd.f32 %v1325, %v1432
        %v1529 = vadd.f32 %v1326, %v1435
        %v1530 = vadd.f32 %v1327, %v1440
        %v1531 = vadd.f32 %v1328, %v1443
        %v1532 = vadd.f32 %v1329, %v1448
        %v1533 = vadd.f32 %v1330, %v1451
        %v1534 = vadd.f32 %v1331, %v1456
        %v1535 = vadd.f32 %v1332, %v1459
        %v1536 = vadd.f32 %v1333, %v1464
        %v1537 = vadd.f32 %v1334, %v1467
        %v1538 = vadd.f32 %v1335, %v1472
        %v1539 = vadd.f32 %v1336, %v1475
        %v1540 = vadd.f32 %v1337, %v1480
        %v1541 = vadd.f32 %v1338, %v1483
        %v1542 = vadd.f32 %v1339, %v1488
        %v1543 = vadd.f32 %v1340, %v1491
        %v1544 = vadd.f32 %v1341, %v1496
        %v1545 = vadd.f32 %v1342, %v1499
        %v1546 = vadd.f32 %v1343, %v1504
        %v1547 = vadd.f32 %v1344, %v1507
        %v1548 = vadd.f32 %v1345, %v1512
        %v1549 = vadd.f32 %v1346, %v1515
        %s1550 = scalar_lea.vmem %s2, 16
        %v1551 = vld [vmem:[%s1550] sm:$0xf]
        %vm1552 = vsmask.f32 6400
        %v1553 = vrot.slane %v537, 1
        %v1554 = vrot.slane %v533, 2
        %v1555 = vor.u32 %v1553, %v1554
        %v1556 = vrot.slane %v545, 1
        %v1557 = vrot.slane %v541, 2
        %v1558 = vor.u32 %v1556, %v1557
        %v1559 = vsel %vm1552, %v1555, %v1558
        %v1560 = vrot.slane %v553, 1
        %v1561 = vrot.slane %v549, 2
        %v1562 = vor.u32 %v1560, %v1561
        %v1563 = vsel %vm1552, %v1558, %v1562
        %v1564 = vrot.slane %v561, 1
        %v1565 = vrot.slane %v557, 2
        %v1566 = vor.u32 %v1564, %v1565
        %v1567 = vsel %vm1552, %v1562, %v1566
        %v1568 = vrot.slane %v569, 1
        %v1569 = vrot.slane %v565, 2
        %v1570 = vor.u32 %v1568, %v1569
        %v1571 = vsel %vm1552, %v1566, %v1570
        %v1572 = vrot.slane %v577, 1
        %v1573 = vrot.slane %v573, 2
        %v1574 = vor.u32 %v1572, %v1573
        %v1575 = vsel %vm1552, %v1570, %v1574
        %v1576 = vrot.slane %v585, 1
        %v1577 = vrot.slane %v581, 2
        %v1578 = vor.u32 %v1576, %v1577
        %v1579 = vsel %vm1552, %v1574, %v1578
        %v1580 = vrot.slane %v593, 1
        %v1581 = vrot.slane %v589, 2
        %v1582 = vor.u32 %v1580, %v1581
        %v1583 = vsel %vm1552, %v1578, %v1582
        %v1584 = vrot.slane %v601, 1
        %v1585 = vrot.slane %v597, 2
        %v1586 = vor.u32 %v1584, %v1585
        %v1587 = vsel %vm1552, %v1582, %v1586
        %v1588 = vrot.slane %v609, 1
        %v1589 = vrot.slane %v605, 2
        %v1590 = vor.u32 %v1588, %v1589
        %v1591 = vsel %vm1552, %v1586, %v1590
        %v1592 = vrot.slane %v617, 1
        %v1593 = vrot.slane %v613, 2
        %v1594 = vor.u32 %v1592, %v1593
        %v1595 = vsel %vm1552, %v1590, %v1594
        %v1596 = vrot.slane %v625, 1
        %v1597 = vrot.slane %v621, 2
        %v1598 = vor.u32 %v1596, %v1597
        %v1599 = vsel %vm1552, %v1594, %v1598
        %v1600 = vrot.slane %v633, 1
        %v1601 = vrot.slane %v629, 2
        %v1602 = vor.u32 %v1600, %v1601
        %v1603 = vsel %vm1552, %v1598, %v1602
        %v1604 = vrot.slane %v641, 1
        %v1605 = vrot.slane %v637, 2
        %v1606 = vor.u32 %v1604, %v1605
        %v1607 = vsel %vm1552, %v1602, %v1606
        %v1608 = vrot.slane %v649, 1
        %v1609 = vrot.slane %v645, 2
        %v1610 = vor.u32 %v1608, %v1609
        %v1611 = vsel %vm1552, %v1606, %v1610
        %v1612 = vshrl.u32 %v518, 16
        %v1614 = vrot.slane %v1612, 1
        %v1615 = vrot.slane %v653, 2
        %v1616 = vor.u32 %v1614, %v1615
        %v1617 = vsel %vm1552, %v1610, %v1616
        %v1619 = vshrl.u32 %v519, 16
        %v1621 = vrot.slane %v1619, 1
        %v1622 = vshll.u32 %v519, 16
        %v1624 = vrot.slane %v1622, 2
        %v1625 = vor.u32 %v1621, %v1624
        %v1626 = vsel %vm1552, %v1616, %v1625
        %v1628 = vsel %vm657, %v1559, 0
        %v1631 = vsel %vm657, %v1563, 0
        %v1634 = vsel %vm657, %v1567, 0
        %v1637 = vsel %vm657, %v1571, 0
        %v1640 = vsel %vm657, %v1575, 0
        %v1643 = vsel %vm657, %v1579, 0
        %v1646 = vsel %vm657, %v1583, 0
        %v1649 = vsel %vm657, %v1587, 0
        %v1652 = vsel %vm657, %v1591, 0
        %v1655 = vsel %vm657, %v1595, 0
        %v1658 = vsel %vm657, %v1599, 0
        %v1661 = vsel %vm657, %v1603, 0
        %v1664 = vsel %vm657, %v1607, 0
        %v1667 = vsel %vm657, %v1611, 0
        %v1670 = vsel %vm657, %v1617, 0
        %v1673 = vsel %vm657, %v1626, 0
        %v1676 = vsel %vm706, %v1551, 0
        %1678 = vmatprep.subr.bf16.mxu0 0
        %1679 = vmatpush1.bf16.msra.mxu0 %v1676
        %1680 = vmatprep.subr.bf16.mxu0 0
        %1681 = vmatpush1.bf16.msra.mxu0 0
        %1682 = vmatprep.subr.bf16.mxu0 0
        %1683 = vmatpush1.bf16.msra.mxu0 0
        %1684 = vmatprep.subr.bf16.mxu0 0
        %1685 = vmatpush1.bf16.msra.mxu0 0
        %1686 = vmatprep.subr.bf16.mxu0 0
        %1687 = vmatpush1.bf16.msra.mxu0 0
        %1688 = vmatprep.subr.bf16.mxu0 0
        %1689 = vmatpush1.bf16.msra.mxu0 0
        %1690 = vmatprep.subr.bf16.mxu0 0
        %1691 = vmatpush1.bf16.msra.mxu0 0
        %1692 = vmatprep.subr.bf16.mxu0 0
        %1693 = vmatpush1.bf16.msra.mxu0 0
        %1694 = vmatprep.subr.bf16.mxu0 0
        %1695 = vmatpush1.bf16.msra.mxu0 0
        %1696 = vmatprep.subr.bf16.mxu0 0
        %1697 = vmatpush1.bf16.msra.mxu0 0
        %1698 = vmatprep.subr.bf16.mxu0 0
        %1699 = vmatpush1.bf16.msra.mxu0 0
        %1700 = vmatprep.subr.bf16.mxu0 0
        %1701 = vmatpush1.bf16.msra.mxu0 0
        %1702 = vmatprep.subr.bf16.mxu0 0
        %1703 = vmatpush1.bf16.msra.mxu0 0
        %1704 = vmatprep.subr.bf16.mxu0 0
        %1705 = vmatpush1.bf16.msra.mxu0 0
        %1706 = vmatprep.subr.bf16.mxu0 0
        %1707 = vmatpush1.bf16.msra.mxu0 0
        %1708 = vmatprep.subr.bf16.mxu0 0
        %1709 = vmatpush1.bf16.msra.mxu0 0
        %1710 = vmatprep.mubr.bf16.mxu0 0
        %1711 = vmatmul.mubr.bf16.gmra.mrb[0].mxu0 %v1628
        %v1712 = vpop.f32.mrb[0].mxu0
        %v1713 = vadd.f32 0.0, %v1712
        %v1714 = vpop.f32.mrb[0].mxu0
        %v1715 = vpop.f32.mrb[0].mxu0
        %v1716 = vadd.f32 0.0, %v1715
        %v1717 = vpop.f32.mrb[0].mxu0
        %1718 = vmatprep.mubr.bf16.mxu0 0
        %1719 = vmatmul.mubr.bf16.gmra.mrb[0].mxu0 %v1631
        %v1720 = vpop.f32.mrb[0].mxu0
        %v1721 = vadd.f32 0.0, %v1720
        %v1722 = vpop.f32.mrb[0].mxu0
        %v1723 = vpop.f32.mrb[0].mxu0
        %v1724 = vadd.f32 0.0, %v1723
        %v1725 = vpop.f32.mrb[0].mxu0
        %1726 = vmatprep.mubr.bf16.mxu0 0
        %1727 = vmatmul.mubr.bf16.gmra.mrb[0].mxu0 %v1634
        %v1728 = vpop.f32.mrb[0].mxu0
        %v1729 = vadd.f32 0.0, %v1728
        %v1730 = vpop.f32.mrb[0].mxu0
        %v1731 = vpop.f32.mrb[0].mxu0
        %v1732 = vadd.f32 0.0, %v1731
        %v1733 = vpop.f32.mrb[0].mxu0
        %1734 = vmatprep.mubr.bf16.mxu0 0
        %1735 = vmatmul.mubr.bf16.gmra.mrb[0].mxu0 %v1637
        %v1736 = vpop.f32.mrb[0].mxu0
        %v1737 = vadd.f32 0.0, %v1736
        %v1738 = vpop.f32.mrb[0].mxu0
        %v1739 = vpop.f32.mrb[0].mxu0
        %v1740 = vadd.f32 0.0, %v1739
        %v1741 = vpop.f32.mrb[0].mxu0
        %1742 = vmatprep.mubr.bf16.mxu0 0
        %1743 = vmatmul.mubr.bf16.gmra.mrb[0].mxu0 %v1640
        %v1744 = vpop.f32.mrb[0].mxu0
        %v1745 = vadd.f32 0.0, %v1744
        %v1746 = vpop.f32.mrb[0].mxu0
        %v1747 = vpop.f32.mrb[0].mxu0
        %v1748 = vadd.f32 0.0, %v1747
        %v1749 = vpop.f32.mrb[0].mxu0
        %1750 = vmatprep.mubr.bf16.mxu0 0
        %1751 = vmatmul.mubr.bf16.gmra.mrb[0].mxu0 %v1643
        %v1752 = vpop.f32.mrb[0].mxu0
        %v1753 = vadd.f32 0.0, %v1752
        %v1754 = vpop.f32.mrb[0].mxu0
        %v1755 = vpop.f32.mrb[0].mxu0
        %v1756 = vadd.f32 0.0, %v1755
        %v1757 = vpop.f32.mrb[0].mxu0
        %1758 = vmatprep.mubr.bf16.mxu0 0
        %1759 = vmatmul.mubr.bf16.gmra.mrb[0].mxu0 %v1646
        %v1760 = vpop.f32.mrb[0].mxu0
        %v1761 = vadd.f32 0.0, %v1760
        %v1762 = vpop.f32.mrb[0].mxu0
        %v1763 = vpop.f32.mrb[0].mxu0
        %v1764 = vadd.f32 0.0, %v1763
        %v1765 = vpop.f32.mrb[0].mxu0
        %1766 = vmatprep.mubr.bf16.mxu0 0
        %1767 = vmatmul.mubr.bf16.gmra.mrb[0].mxu0 %v1649
        %v1768 = vpop.f32.mrb[0].mxu0
        %v1769 = vadd.f32 0.0, %v1768
        %v1770 = vpop.f32.mrb[0].mxu0
        %v1771 = vpop.f32.mrb[0].mxu0
        %v1772 = vadd.f32 0.0, %v1771
        %v1773 = vpop.f32.mrb[0].mxu0
        %1774 = vmatprep.mubr.bf16.mxu0 0
        %1775 = vmatmul.mubr.bf16.gmra.mrb[0].mxu0 %v1652
        %v1776 = vpop.f32.mrb[0].mxu0
        %v1777 = vadd.f32 0.0, %v1776
        %v1778 = vpop.f32.mrb[0].mxu0
        %v1779 = vpop.f32.mrb[0].mxu0
        %v1780 = vadd.f32 0.0, %v1779
        %v1781 = vpop.f32.mrb[0].mxu0
        %1782 = vmatprep.mubr.bf16.mxu0 0
        %1783 = vmatmul.mubr.bf16.gmra.mrb[0].mxu0 %v1655
        %v1784 = vpop.f32.mrb[0].mxu0
        %v1785 = vadd.f32 0.0, %v1784
        %v1786 = vpop.f32.mrb[0].mxu0
        %v1787 = vpop.f32.mrb[0].mxu0
        %v1788 = vadd.f32 0.0, %v1787
        %v1789 = vpop.f32.mrb[0].mxu0
        %1790 = vmatprep.mubr.bf16.mxu0 0
        %1791 = vmatmul.mubr.bf16.gmra.mrb[0].mxu0 %v1658
        %v1792 = vpop.f32.mrb[0].mxu0
        %v1793 = vadd.f32 0.0, %v1792
        %v1794 = vpop.f32.mrb[0].mxu0
        %v1795 = vpop.f32.mrb[0].mxu0
        %v1796 = vadd.f32 0.0, %v1795
        %v1797 = vpop.f32.mrb[0].mxu0
        %1798 = vmatprep.mubr.bf16.mxu0 0
        %1799 = vmatmul.mubr.bf16.gmra.mrb[0].mxu0 %v1661
        %v1800 = vpop.f32.mrb[0].mxu0
        %v1801 = vadd.f32 0.0, %v1800
        %v1802 = vpop.f32.mrb[0].mxu0
        %v1803 = vpop.f32.mrb[0].mxu0
        %v1804 = vadd.f32 0.0, %v1803
        %v1805 = vpop.f32.mrb[0].mxu0
        %1806 = vmatprep.mubr.bf16.mxu0 0
        %1807 = vmatmul.mubr.bf16.gmra.mrb[0].mxu0 %v1664
        %v1808 = vpop.f32.mrb[0].mxu0
        %v1809 = vadd.f32 0.0, %v1808
        %v1810 = vpop.f32.mrb[0].mxu0
        %v1811 = vpop.f32.mrb[0].mxu0
        %v1812 = vadd.f32 0.0, %v1811
        %v1813 = vpop.f32.mrb[0].mxu0
        %1814 = vmatprep.mubr.bf16.mxu0 0
        %1815 = vmatmul.mubr.bf16.gmra.mrb[0].mxu0 %v1667
        %v1816 = vpop.f32.mrb[0].mxu0
        %v1817 = vadd.f32 0.0, %v1816
        %v1818 = vpop.f32.mrb[0].mxu0
        %v1819 = vpop.f32.mrb[0].mxu0
        %v1820 = vadd.f32 0.0, %v1819
        %v1821 = vpop.f32.mrb[0].mxu0
        %1822 = vmatprep.mubr.bf16.mxu0 0
        %1823 = vmatmul.mubr.bf16.gmra.mrb[0].mxu0 %v1670
        %v1824 = vpop.f32.mrb[0].mxu0
        %v1825 = vadd.f32 0.0, %v1824
        %v1826 = vpop.f32.mrb[0].mxu0
        %v1827 = vpop.f32.mrb[0].mxu0
        %v1828 = vadd.f32 0.0, %v1827
        %v1829 = vpop.f32.mrb[0].mxu0
        %1830 = vmatprep.mubr.bf16.mxu0 0
        %1831 = vmatmul.mubr.bf16.gmra.mrb[0].mxu0 %v1673
        %v1832 = vpop.f32.mrb[0].mxu0
        %v1833 = vadd.f32 0.0, %v1832
        %v1834 = vpop.f32.mrb[0].mxu0
        %v1835 = vpop.f32.mrb[0].mxu0
        %v1836 = vadd.f32 0.0, %v1835
        %v1837 = vpop.f32.mrb[0].mxu0
        %1838 = vdwg.mxu0
        %v1839 = vadd.f32 %v1518, %v1713
        %v1840 = vadd.f32 %v1519, %v1716
        %v1841 = vadd.f32 %v1520, %v1721
        %v1842 = vadd.f32 %v1521, %v1724
        %v1843 = vadd.f32 %v1522, %v1729
        %v1844 = vadd.f32 %v1523, %v1732
        %v1845 = vadd.f32 %v1524, %v1737
        %v1846 = vadd.f32 %v1525, %v1740
        %v1847 = vadd.f32 %v1526, %v1745
        %v1848 = vadd.f32 %v1527, %v1748
        %v1849 = vadd.f32 %v1528, %v1753
        %v1850 = vadd.f32 %v1529, %v1756
        %v1851 = vadd.f32 %v1530, %v1761
        %v1852 = vadd.f32 %v1531, %v1764
        %v1853 = vadd.f32 %v1532, %v1769
        %v1854 = vadd.f32 %v1533, %v1772
        %v1855 = vadd.f32 %v1534, %v1777
        %v1856 = vadd.f32 %v1535, %v1780
        %v1857 = vadd.f32 %v1536, %v1785
        %v1858 = vadd.f32 %v1537, %v1788
        %v1859 = vadd.f32 %v1538, %v1793
        %v1860 = vadd.f32 %v1539, %v1796
        %v1861 = vadd.f32 %v1540, %v1801
        %v1862 = vadd.f32 %v1541, %v1804
        %v1863 = vadd.f32 %v1542, %v1809
        %v1864 = vadd.f32 %v1543, %v1812
        %v1865 = vadd.f32 %v1544, %v1817
        %v1866 = vadd.f32 %v1545, %v1820
        %v1867 = vadd.f32 %v1546, %v1825
        %v1868 = vadd.f32 %v1547, %v1828
        %v1869 = vadd.f32 %v1548, %v1833
        %v1870 = vadd.f32 %v1549, %v1836
        %s1871 = scalar_lea.vmem %s2, 20
        %v1872 = vld [vmem:[%s1871] sm:$0xf]
        %vm1873 = vcmask 1045504
        %v1874 = vrot.slane %v491, 2
        %v1875 = vrot.slane %v492, 2
        %v1876 = vsel %vm1873, %v1874, %v1875
        %v1877 = vrot.slane %v493, 2
        %v1878 = vsel %vm1873, %v1875, %v1877
        %v1879 = vrot.slane %v494, 2
        %v1880 = vsel %vm1873, %v1877, %v1879
        %v1881 = vrot.slane %v495, 2
        %v1882 = vsel %vm1873, %v1879, %v1881
        %v1883 = vrot.slane %v496, 2
        %v1884 = vsel %vm1873, %v1881, %v1883
        %v1885 = vrot.slane %v497, 2
        %v1886 = vsel %vm1873, %v1883, %v1885
        %v1887 = vrot.slane %v498, 2
        %v1888 = vsel %vm1873, %v1885, %v1887
        %v1889 = vrot.slane %v499, 2
        %v1890 = vsel %vm1873, %v1887, %v1889
        %v1891 = vrot.slane %v500, 2
        %v1892 = vsel %vm1873, %v1889, %v1891
        %v1893 = vrot.slane %v501, 2
        %v1894 = vsel %vm1873, %v1891, %v1893
        %v1895 = vrot.slane %v502, 2
        %v1896 = vsel %vm1873, %v1893, %v1895
        %v1897 = vrot.slane %v503, 2
        %v1898 = vsel %vm1873, %v1895, %v1897
        %v1899 = vrot.slane %v504, 2
        %v1900 = vsel %vm1873, %v1897, %v1899
        %v1901 = vrot.slane %v505, 2
        %v1902 = vsel %vm1873, %v1899, %v1901
        %v1903 = vrot.slane %v518, 2
        %v1904 = vsel %vm1873, %v1901, %v1903
        %v1905 = vrot.slane %v519, 2
        %v1906 = vsel %vm1873, %v1903, %v1905
        %v1908 = vsel %vm657, %v1876, 0
        %v1911 = vsel %vm657, %v1878, 0
        %v1914 = vsel %vm657, %v1880, 0
        %v1917 = vsel %vm657, %v1882, 0
        %v1920 = vsel %vm657, %v1884, 0
        %v1923 = vsel %vm657, %v1886, 0
        %v1926 = vsel %vm657, %v1888, 0
        %v1929 = vsel %vm657, %v1890, 0
        %v1932 = vsel %vm657, %v1892, 0
        %v1935 = vsel %vm657, %v1894, 0
        %v1938 = vsel %vm657, %v1896, 0
        %v1941 = vsel %vm657, %v1898, 0
        %v1944 = vsel %vm657, %v1900, 0
        %v1947 = vsel %vm657, %v1902, 0
        %v1950 = vsel %vm657, %v1904, 0
        %v1953 = vsel %vm657, %v1906, 0
        %v1956 = vsel %vm706, %v1872, 0
        %1958 = vmatprep.subr.bf16.mxu0 0
        %1959 = vmatpush1.bf16.msra.mxu0 %v1956
        %1960 = vmatprep.subr.bf16.mxu0 0
        %1961 = vmatpush1.bf16.msra.mxu0 0
        %1962 = vmatprep.subr.bf16.mxu0 0
        %1963 = vmatpush1.bf16.msra.mxu0 0
        %1964 = vmatprep.subr.bf16.mxu0 0
        %1965 = vmatpush1.bf16.msra.mxu0 0
        %1966 = vmatprep.subr.bf16.mxu0 0
        %1967 = vmatpush1.bf16.msra.mxu0 0
        %1968 = vmatprep.subr.bf16.mxu0 0
        %1969 = vmatpush1.bf16.msra.mxu0 0
        %1970 = vmatprep.subr.bf16.mxu0 0
        %1971 = vmatpush1.bf16.msra.mxu0 0
        %1972 = vmatprep.subr.bf16.mxu0 0
        %1973 = vmatpush1.bf16.msra.mxu0 0
        %1974 = vmatprep.subr.bf16.mxu0 0
        %1975 = vmatpush1.bf16.msra.mxu0 0
        %1976 = vmatprep.subr.bf16.mxu0 0
        %1977 = vmatpush1.bf16.msra.mxu0 0
        %1978 = vmatprep.subr.bf16.mxu0 0
        %1979 = vmatpush1.bf16.msra.mxu0 0
        %1980 = vmatprep.subr.bf16.mxu0 0
        %1981 = vmatpush1.bf16.msra.mxu0 0
        %1982 = vmatprep.subr.bf16.mxu0 0
        %1983 = vmatpush1.bf16.msra.mxu0 0
        %1984 = vmatprep.subr.bf16.mxu0 0
        %1985 = vmatpush1.bf16.msra.mxu0 0
        %1986 = vmatprep.subr.bf16.mxu0 0
        %1987 = vmatpush1.bf16.msra.mxu0 0
        %1988 = vmatprep.subr.bf16.mxu0 0
        %1989 = vmatpush1.bf16.msra.mxu0 0
        %1990 = vmatprep.mubr.bf16.mxu0 0
        %1991 = vmatmul.mubr.bf16.gmra.mrb[0].mxu0 %v1908
        %v1992 = vpop.f32.mrb[0].mxu0
        %v1993 = vadd.f32 0.0, %v1992
        %v1994 = vpop.f32.mrb[0].mxu0
        %v1995 = vpop.f32.mrb[0].mxu0
        %v1996 = vadd.f32 0.0, %v1995
        %v1997 = vpop.f32.mrb[0].mxu0
        %1998 = vmatprep.mubr.bf16.mxu0 0
        %1999 = vmatmul.mubr.bf16.gmra.mrb[0].mxu0 %v1911
        %v2000 = vpop.f32.mrb[0].mxu0
        %v2001 = vadd.f32 0.0, %v2000
        %v2002 = vpop.f32.mrb[0].mxu0
        %v2003 = vpop.f32.mrb[0].mxu0
        %v2004 = vadd.f32 0.0, %v2003
        %v2005 = vpop.f32.mrb[0].mxu0
        %2006 = vmatprep.mubr.bf16.mxu0 0
        %2007 = vmatmul.mubr.bf16.gmra.mrb[0].mxu0 %v1914
        %v2008 = vpop.f32.mrb[0].mxu0
        %v2009 = vadd.f32 0.0, %v2008
        %v2010 = vpop.f32.mrb[0].mxu0
        %v2011 = vpop.f32.mrb[0].mxu0
        %v2012 = vadd.f32 0.0, %v2011
        %v2013 = vpop.f32.mrb[0].mxu0
        %2014 = vmatprep.mubr.bf16.mxu0 0
        %2015 = vmatmul.mubr.bf16.gmra.mrb[0].mxu0 %v1917
        %v2016 = vpop.f32.mrb[0].mxu0
        %v2017 = vadd.f32 0.0, %v2016
        %v2018 = vpop.f32.mrb[0].mxu0
        %v2019 = vpop.f32.mrb[0].mxu0
        %v2020 = vadd.f32 0.0, %v2019
        %v2021 = vpop.f32.mrb[0].mxu0
        %2022 = vmatprep.mubr.bf16.mxu0 0
        %2023 = vmatmul.mubr.bf16.gmra.mrb[0].mxu0 %v1920
        %v2024 = vpop.f32.mrb[0].mxu0
        %v2025 = vadd.f32 0.0, %v2024
        %v2026 = vpop.f32.mrb[0].mxu0
        %v2027 = vpop.f32.mrb[0].mxu0
        %v2028 = vadd.f32 0.0, %v2027
        %v2029 = vpop.f32.mrb[0].mxu0
        %2030 = vmatprep.mubr.bf16.mxu0 0
        %2031 = vmatmul.mubr.bf16.gmra.mrb[0].mxu0 %v1923
        %v2032 = vpop.f32.mrb[0].mxu0
        %v2033 = vadd.f32 0.0, %v2032
        %v2034 = vpop.f32.mrb[0].mxu0
        %v2035 = vpop.f32.mrb[0].mxu0
        %v2036 = vadd.f32 0.0, %v2035
        %v2037 = vpop.f32.mrb[0].mxu0
        %2038 = vmatprep.mubr.bf16.mxu0 0
        %2039 = vmatmul.mubr.bf16.gmra.mrb[0].mxu0 %v1926
        %v2040 = vpop.f32.mrb[0].mxu0
        %v2041 = vadd.f32 0.0, %v2040
        %v2042 = vpop.f32.mrb[0].mxu0
        %v2043 = vpop.f32.mrb[0].mxu0
        %v2044 = vadd.f32 0.0, %v2043
        %v2045 = vpop.f32.mrb[0].mxu0
        %2046 = vmatprep.mubr.bf16.mxu0 0
        %2047 = vmatmul.mubr.bf16.gmra.mrb[0].mxu0 %v1929
        %v2048 = vpop.f32.mrb[0].mxu0
        %v2049 = vadd.f32 0.0, %v2048
        %v2050 = vpop.f32.mrb[0].mxu0
        %v2051 = vpop.f32.mrb[0].mxu0
        %v2052 = vadd.f32 0.0, %v2051
        %v2053 = vpop.f32.mrb[0].mxu0
        %2054 = vmatprep.mubr.bf16.mxu0 0
        %2055 = vmatmul.mubr.bf16.gmra.mrb[0].mxu0 %v1932
        %v2056 = vpop.f32.mrb[0].mxu0
        %v2057 = vadd.f32 0.0, %v2056
        %v2058 = vpop.f32.mrb[0].mxu0
        %v2059 = vpop.f32.mrb[0].mxu0
        %v2060 = vadd.f32 0.0, %v2059
        %v2061 = vpop.f32.mrb[0].mxu0
        %2062 = vmatprep.mubr.bf16.mxu0 0
        %2063 = vmatmul.mubr.bf16.gmra.mrb[0].mxu0 %v1935
        %v2064 = vpop.f32.mrb[0].mxu0
        %v2065 = vadd.f32 0.0, %v2064
        %v2066 = vpop.f32.mrb[0].mxu0
        %v2067 = vpop.f32.mrb[0].mxu0
        %v2068 = vadd.f32 0.0, %v2067
        %v2069 = vpop.f32.mrb[0].mxu0
        %2070 = vmatprep.mubr.bf16.mxu0 0
        %2071 = vmatmul.mubr.bf16.gmra.mrb[0].mxu0 %v1938
        %v2072 = vpop.f32.mrb[0].mxu0
        %v2073 = vadd.f32 0.0, %v2072
        %v2074 = vpop.f32.mrb[0].mxu0
        %v2075 = vpop.f32.mrb[0].mxu0
        %v2076 = vadd.f32 0.0, %v2075
        %v2077 = vpop.f32.mrb[0].mxu0
        %2078 = vmatprep.mubr.bf16.mxu0 0
        %2079 = vmatmul.mubr.bf16.gmra.mrb[0].mxu0 %v1941
        %v2080 = vpop.f32.mrb[0].mxu0
        %v2081 = vadd.f32 0.0, %v2080
        %v2082 = vpop.f32.mrb[0].mxu0
        %v2083 = vpop.f32.mrb[0].mxu0
        %v2084 = vadd.f32 0.0, %v2083
        %v2085 = vpop.f32.mrb[0].mxu0
        %2086 = vmatprep.mubr.bf16.mxu0 0
        %2087 = vmatmul.mubr.bf16.gmra.mrb[0].mxu0 %v1944
        %v2088 = vpop.f32.mrb[0].mxu0
        %v2089 = vadd.f32 0.0, %v2088
        %v2090 = vpop.f32.mrb[0].mxu0
        %v2091 = vpop.f32.mrb[0].mxu0
        %v2092 = vadd.f32 0.0, %v2091
        %v2093 = vpop.f32.mrb[0].mxu0
        %2094 = vmatprep.mubr.bf16.mxu0 0
        %2095 = vmatmul.mubr.bf16.gmra.mrb[0].mxu0 %v1947
        %v2096 = vpop.f32.mrb[0].mxu0
        %v2097 = vadd.f32 0.0, %v2096
        %v2098 = vpop.f32.mrb[0].mxu0
        %v2099 = vpop.f32.mrb[0].mxu0
        %v2100 = vadd.f32 0.0, %v2099
        %v2101 = vpop.f32.mrb[0].mxu0
        %2102 = vmatprep.mubr.bf16.mxu0 0
        %2103 = vmatmul.mubr.bf16.gmra.mrb[0].mxu0 %v1950
        %v2104 = vpop.f32.mrb[0].mxu0
        %v2105 = vadd.f32 0.0, %v2104
        %v2106 = vpop.f32.mrb[0].mxu0
        %v2107 = vpop.f32.mrb[0].mxu0
        %v2108 = vadd.f32 0.0, %v2107
        %v2109 = vpop.f32.mrb[0].mxu0
        %2110 = vmatprep.mubr.bf16.mxu0 0
        %2111 = vmatmul.mubr.bf16.gmra.mrb[0].mxu0 %v1953
        %v2112 = vpop.f32.mrb[0].mxu0
        %v2113 = vadd.f32 0.0, %v2112
        %v2114 = vpop.f32.mrb[0].mxu0
        %v2115 = vpop.f32.mrb[0].mxu0
        %v2116 = vadd.f32 0.0, %v2115
        %v2117 = vpop.f32.mrb[0].mxu0
        %2118 = vdwg.mxu0
        %v2119 = vadd.f32 %v1839, %v1993
        %v2120 = vadd.f32 %v1840, %v1996
        %v2121 = vadd.f32 %v1841, %v2001
        %v2122 = vadd.f32 %v1842, %v2004
        %v2123 = vadd.f32 %v1843, %v2009
        %v2124 = vadd.f32 %v1844, %v2012
        %v2125 = vadd.f32 %v1845, %v2017
        %v2126 = vadd.f32 %v1846, %v2020
        %v2127 = vadd.f32 %v1847, %v2025
        %v2128 = vadd.f32 %v1848, %v2028
        %v2129 = vadd.f32 %v1849, %v2033
        %v2130 = vadd.f32 %v1850, %v2036
        %v2131 = vadd.f32 %v1851, %v2041
        %v2132 = vadd.f32 %v1852, %v2044
        %v2133 = vadd.f32 %v1853, %v2049
        %v2134 = vadd.f32 %v1854, %v2052
        %v2135 = vadd.f32 %v1855, %v2057
        %v2136 = vadd.f32 %v1856, %v2060
        %v2137 = vadd.f32 %v1857, %v2065
        %v2138 = vadd.f32 %v1858, %v2068
        %v2139 = vadd.f32 %v1859, %v2073
        %v2140 = vadd.f32 %v1860, %v2076
        %v2141 = vadd.f32 %v1861, %v2081
        %v2142 = vadd.f32 %v1862, %v2084
        %v2143 = vadd.f32 %v1863, %v2089
        %v2144 = vadd.f32 %v1864, %v2092
        %v2145 = vadd.f32 %v1865, %v2097
        %v2146 = vadd.f32 %v1866, %v2100
        %v2147 = vadd.f32 %v1867, %v2105
        %v2148 = vadd.f32 %v1868, %v2108
        %v2149 = vadd.f32 %v1869, %v2113
        %v2150 = vadd.f32 %v1870, %v2116
        %s2151 = scalar_lea.vmem %s2, 24
        %v2152 = vld [vmem:[%s2151] sm:$0xf]
        %v2153 = vrot.slane %v520, 2
        %v2154 = vsel %vm1873, %v1905, %v2153
        %v2156 = vsel %vm657, %v2154, 0
        %v2159 = vsel %vm706, %v2152, 0
        %2161 = vmatprep.subr.bf16.mxu0 0
        %2162 = vmatpush1.bf16.msra.mxu0 %v2159
        %2163 = vmatprep.subr.bf16.mxu0 0
        %2164 = vmatpush1.bf16.msra.mxu0 0
        %2165 = vmatprep.subr.bf16.mxu0 0
        %2166 = vmatpush1.bf16.msra.mxu0 0
        %2167 = vmatprep.subr.bf16.mxu0 0
        %2168 = vmatpush1.bf16.msra.mxu0 0
        %2169 = vmatprep.subr.bf16.mxu0 0
        %2170 = vmatpush1.bf16.msra.mxu0 0
        %2171 = vmatprep.subr.bf16.mxu0 0
        %2172 = vmatpush1.bf16.msra.mxu0 0
        %2173 = vmatprep.subr.bf16.mxu0 0
        %2174 = vmatpush1.bf16.msra.mxu0 0
        %2175 = vmatprep.subr.bf16.mxu0 0
        %2176 = vmatpush1.bf16.msra.mxu0 0
        %2177 = vmatprep.subr.bf16.mxu0 0
        %2178 = vmatpush1.bf16.msra.mxu0 0
        %2179 = vmatprep.subr.bf16.mxu0 0
        %2180 = vmatpush1.bf16.msra.mxu0 0
        %2181 = vmatprep.subr.bf16.mxu0 0
        %2182 = vmatpush1.bf16.msra.mxu0 0
        %2183 = vmatprep.subr.bf16.mxu0 0
        %2184 = vmatpush1.bf16.msra.mxu0 0
        %2185 = vmatprep.subr.bf16.mxu0 0
        %2186 = vmatpush1.bf16.msra.mxu0 0
        %2187 = vmatprep.subr.bf16.mxu0 0
        %2188 = vmatpush1.bf16.msra.mxu0 0
        %2189 = vmatprep.subr.bf16.mxu0 0
        %2190 = vmatpush1.bf16.msra.mxu0 0
        %2191 = vmatprep.subr.bf16.mxu0 0
        %2192 = vmatpush1.bf16.msra.mxu0 0
        %2193 = vmatprep.mubr.bf16.mxu0 0
        %2194 = vmatmul.mubr.bf16.gmra.mrb[0].mxu0 %v1911
        %v2195 = vpop.f32.mrb[0].mxu0
        %v2196 = vadd.f32 0.0, %v2195
        %v2197 = vpop.f32.mrb[0].mxu0
        %v2198 = vpop.f32.mrb[0].mxu0
        %v2199 = vadd.f32 0.0, %v2198
        %v2200 = vpop.f32.mrb[0].mxu0
        %2201 = vmatprep.mubr.bf16.mxu0 0
        %2202 = vmatmul.mubr.bf16.gmra.mrb[0].mxu0 %v1914
        %v2203 = vpop.f32.mrb[0].mxu0
        %v2204 = vadd.f32 0.0, %v2203
        %v2205 = vpop.f32.mrb[0].mxu0
        %v2206 = vpop.f32.mrb[0].mxu0
        %v2207 = vadd.f32 0.0, %v2206
        %v2208 = vpop.f32.mrb[0].mxu0
        %2209 = vmatprep.mubr.bf16.mxu0 0
        %2210 = vmatmul.mubr.bf16.gmra.mrb[0].mxu0 %v1917
        %v2211 = vpop.f32.mrb[0].mxu0
        %v2212 = vadd.f32 0.0, %v2211
        %v2213 = vpop.f32.mrb[0].mxu0
        %v2214 = vpop.f32.mrb[0].mxu0
        %v2215 = vadd.f32 0.0, %v2214
        %v2216 = vpop.f32.mrb[0].mxu0
        %2217 = vmatprep.mubr.bf16.mxu0 0
        %2218 = vmatmul.mubr.bf16.gmra.mrb[0].mxu0 %v1920
        %v2219 = vpop.f32.mrb[0].mxu0
        %v2220 = vadd.f32 0.0, %v2219
        %v2221 = vpop.f32.mrb[0].mxu0
        %v2222 = vpop.f32.mrb[0].mxu0
        %v2223 = vadd.f32 0.0, %v2222
        %v2224 = vpop.f32.mrb[0].mxu0
        %2225 = vmatprep.mubr.bf16.mxu0 0
        %2226 = vmatmul.mubr.bf16.gmra.mrb[0].mxu0 %v1923
        %v2227 = vpop.f32.mrb[0].mxu0
        %v2228 = vadd.f32 0.0, %v2227
        %v2229 = vpop.f32.mrb[0].mxu0
        %v2230 = vpop.f32.mrb[0].mxu0
        %v2231 = vadd.f32 0.0, %v2230
        %v2232 = vpop.f32.mrb[0].mxu0
        %2233 = vmatprep.mubr.bf16.mxu0 0
        %2234 = vmatmul.mubr.bf16.gmra.mrb[0].mxu0 %v1926
        %v2235 = vpop.f32.mrb[0].mxu0
        %v2236 = vadd.f32 0.0, %v2235
        %v2237 = vpop.f32.mrb[0].mxu0
        %v2238 = vpop.f32.mrb[0].mxu0
        %v2239 = vadd.f32 0.0, %v2238
        %v2240 = vpop.f32.mrb[0].mxu0
        %2241 = vmatprep.mubr.bf16.mxu0 0
        %2242 = vmatmul.mubr.bf16.gmra.mrb[0].mxu0 %v1929
        %v2243 = vpop.f32.mrb[0].mxu0
        %v2244 = vadd.f32 0.0, %v2243
        %v2245 = vpop.f32.mrb[0].mxu0
        %v2246 = vpop.f32.mrb[0].mxu0
        %v2247 = vadd.f32 0.0, %v2246
        %v2248 = vpop.f32.mrb[0].mxu0
        %2249 = vmatprep.mubr.bf16.mxu0 0
        %2250 = vmatmul.mubr.bf16.gmra.mrb[0].mxu0 %v1932
        %v2251 = vpop.f32.mrb[0].mxu0
        %v2252 = vadd.f32 0.0, %v2251
        %v2253 = vpop.f32.mrb[0].mxu0
        %v2254 = vpop.f32.mrb[0].mxu0
        %v2255 = vadd.f32 0.0, %v2254
        %v2256 = vpop.f32.mrb[0].mxu0
        %2257 = vmatprep.mubr.bf16.mxu0 0
        %2258 = vmatmul.mubr.bf16.gmra.mrb[0].mxu0 %v1935
        %v2259 = vpop.f32.mrb[0].mxu0
        %v2260 = vadd.f32 0.0, %v2259
        %v2261 = vpop.f32.mrb[0].mxu0
        %v2262 = vpop.f32.mrb[0].mxu0
        %v2263 = vadd.f32 0.0, %v2262
        %v2264 = vpop.f32.mrb[0].mxu0
        %2265 = vmatprep.mubr.bf16.mxu0 0
        %2266 = vmatmul.mubr.bf16.gmra.mrb[0].mxu0 %v1938
        %v2267 = vpop.f32.mrb[0].mxu0
        %v2268 = vadd.f32 0.0, %v2267
        %v2269 = vpop.f32.mrb[0].mxu0
        %v2270 = vpop.f32.mrb[0].mxu0
        %v2271 = vadd.f32 0.0, %v2270
        %v2272 = vpop.f32.mrb[0].mxu0
        %2273 = vmatprep.mubr.bf16.mxu0 0
        %2274 = vmatmul.mubr.bf16.gmra.mrb[0].mxu0 %v1941
        %v2275 = vpop.f32.mrb[0].mxu0
        %v2276 = vadd.f32 0.0, %v2275
        %v2277 = vpop.f32.mrb[0].mxu0
        %v2278 = vpop.f32.mrb[0].mxu0
        %v2279 = vadd.f32 0.0, %v2278
        %v2280 = vpop.f32.mrb[0].mxu0
        %2281 = vmatprep.mubr.bf16.mxu0 0
        %2282 = vmatmul.mubr.bf16.gmra.mrb[0].mxu0 %v1944
        %v2283 = vpop.f32.mrb[0].mxu0
        %v2284 = vadd.f32 0.0, %v2283
        %v2285 = vpop.f32.mrb[0].mxu0
        %v2286 = vpop.f32.mrb[0].mxu0
        %v2287 = vadd.f32 0.0, %v2286
        %v2288 = vpop.f32.mrb[0].mxu0
        %2289 = vmatprep.mubr.bf16.mxu0 0
        %2290 = vmatmul.mubr.bf16.gmra.mrb[0].mxu0 %v1947
        %v2291 = vpop.f32.mrb[0].mxu0
        %v2292 = vadd.f32 0.0, %v2291
        %v2293 = vpop.f32.mrb[0].mxu0
        %v2294 = vpop.f32.mrb[0].mxu0
        %v2295 = vadd.f32 0.0, %v2294
        %v2296 = vpop.f32.mrb[0].mxu0
        %2297 = vmatprep.mubr.bf16.mxu0 0
        %2298 = vmatmul.mubr.bf16.gmra.mrb[0].mxu0 %v1950
        %v2299 = vpop.f32.mrb[0].mxu0
        %v2300 = vadd.f32 0.0, %v2299
        %v2301 = vpop.f32.mrb[0].mxu0
        %v2302 = vpop.f32.mrb[0].mxu0
        %v2303 = vadd.f32 0.0, %v2302
        %v2304 = vpop.f32.mrb[0].mxu0
        %2305 = vmatprep.mubr.bf16.mxu0 0
        %2306 = vmatmul.mubr.bf16.gmra.mrb[0].mxu0 %v1953
        %v2307 = vpop.f32.mrb[0].mxu0
        %v2308 = vadd.f32 0.0, %v2307
        %v2309 = vpop.f32.mrb[0].mxu0
        %v2310 = vpop.f32.mrb[0].mxu0
        %v2311 = vadd.f32 0.0, %v2310
        %v2312 = vpop.f32.mrb[0].mxu0
        %2313 = vmatprep.mubr.bf16.mxu0 0
        %2314 = vmatmul.mubr.bf16.gmra.mrb[0].mxu0 %v2156
        %v2315 = vpop.f32.mrb[0].mxu0
        %v2316 = vadd.f32 0.0, %v2315
        %v2317 = vpop.f32.mrb[0].mxu0
        %v2318 = vpop.f32.mrb[0].mxu0
        %v2319 = vadd.f32 0.0, %v2318
        %v2320 = vpop.f32.mrb[0].mxu0
        %2321 = vdwg.mxu0
        %v2322 = vadd.f32 %v2119, %v2196
        %v2323 = vadd.f32 %v2120, %v2199
        %v2324 = vadd.f32 %v2121, %v2204
        %v2325 = vadd.f32 %v2122, %v2207
        %v2326 = vadd.f32 %v2123, %v2212
        %v2327 = vadd.f32 %v2124, %v2215
        %v2328 = vadd.f32 %v2125, %v2220
        %v2329 = vadd.f32 %v2126, %v2223
        %v2330 = vadd.f32 %v2127, %v2228
        %v2331 = vadd.f32 %v2128, %v2231
        %v2332 = vadd.f32 %v2129, %v2236
        %v2333 = vadd.f32 %v2130, %v2239
        %v2334 = vadd.f32 %v2131, %v2244
        %v2335 = vadd.f32 %v2132, %v2247
        %v2336 = vadd.f32 %v2133, %v2252
        %v2337 = vadd.f32 %v2134, %v2255
        %v2338 = vadd.f32 %v2135, %v2260
        %v2339 = vadd.f32 %v2136, %v2263
        %v2340 = vadd.f32 %v2137, %v2268
        %v2341 = vadd.f32 %v2138, %v2271
        %v2342 = vadd.f32 %v2139, %v2276
        %v2343 = vadd.f32 %v2140, %v2279
        %v2344 = vadd.f32 %v2141, %v2284
        %v2345 = vadd.f32 %v2142, %v2287
        %v2346 = vadd.f32 %v2143, %v2292
        %v2347 = vadd.f32 %v2144, %v2295
        %v2348 = vadd.f32 %v2145, %v2300
        %v2349 = vadd.f32 %v2146, %v2303
        %v2350 = vadd.f32 %v2147, %v2308
        %v2351 = vadd.f32 %v2148, %v2311
        %v2352 = vadd.f32 %v2149, %v2316
        %v2353 = vadd.f32 %v2150, %v2319
        %s2354 = scalar_lea.vmem %s2, 28
        %v2355 = vld [vmem:[%s2354] sm:$0xf]
        %vm2356 = vsmask.f32 5376
        %v2357 = vrot.slane %v545, 2
        %v2358 = vrot.slane %v541, 3
        %v2359 = vor.u32 %v2357, %v2358
        %v2360 = vrot.slane %v553, 2
        %v2361 = vrot.slane %v549, 3
        %v2362 = vor.u32 %v2360, %v2361
        %v2363 = vsel %vm2356, %v2359, %v2362
        %v2364 = vrot.slane %v561, 2
        %v2365 = vrot.slane %v557, 3
        %v2366 = vor.u32 %v2364, %v2365
        %v2367 = vsel %vm2356, %v2362, %v2366
        %v2368 = vrot.slane %v569, 2
        %v2369 = vrot.slane %v565, 3
        %v2370 = vor.u32 %v2368, %v2369
        %v2371 = vsel %vm2356, %v2366, %v2370
        %v2372 = vrot.slane %v577, 2
        %v2373 = vrot.slane %v573, 3
        %v2374 = vor.u32 %v2372, %v2373
        %v2375 = vsel %vm2356, %v2370, %v2374
        %v2376 = vrot.slane %v585, 2
        %v2377 = vrot.slane %v581, 3
        %v2378 = vor.u32 %v2376, %v2377
        %v2379 = vsel %vm2356, %v2374, %v2378
        %v2380 = vrot.slane %v593, 2
        %v2381 = vrot.slane %v589, 3
        %v2382 = vor.u32 %v2380, %v2381
        %v2383 = vsel %vm2356, %v2378, %v2382
        %v2384 = vrot.slane %v601, 2
        %v2385 = vrot.slane %v597, 3
        %v2386 = vor.u32 %v2384, %v2385
        %v2387 = vsel %vm2356, %v2382, %v2386
        %v2388 = vrot.slane %v609, 2
        %v2389 = vrot.slane %v605, 3
        %v2390 = vor.u32 %v2388, %v2389
        %v2391 = vsel %vm2356, %v2386, %v2390
        %v2392 = vrot.slane %v617, 2
        %v2393 = vrot.slane %v613, 3
        %v2394 = vor.u32 %v2392, %v2393
        %v2395 = vsel %vm2356, %v2390, %v2394
        %v2396 = vrot.slane %v625, 2
        %v2397 = vrot.slane %v621, 3
        %v2398 = vor.u32 %v2396, %v2397
        %v2399 = vsel %vm2356, %v2394, %v2398
        %v2400 = vrot.slane %v633, 2
        %v2401 = vrot.slane %v629, 3
        %v2402 = vor.u32 %v2400, %v2401
        %v2403 = vsel %vm2356, %v2398, %v2402
        %v2404 = vrot.slane %v641, 2
        %v2405 = vrot.slane %v637, 3
        %v2406 = vor.u32 %v2404, %v2405
        %v2407 = vsel %vm2356, %v2402, %v2406
        %v2408 = vrot.slane %v649, 2
        %v2409 = vrot.slane %v645, 3
        %v2410 = vor.u32 %v2408, %v2409
        %v2411 = vsel %vm2356, %v2406, %v2410
        %v2412 = vrot.slane %v1612, 2
        %v2413 = vrot.slane %v653, 3
        %v2414 = vor.u32 %v2412, %v2413
        %v2415 = vsel %vm2356, %v2410, %v2414
        %v2416 = vrot.slane %v1619, 2
        %v2417 = vrot.slane %v1622, 3
        %v2418 = vor.u32 %v2416, %v2417
        %v2419 = vsel %vm2356, %v2414, %v2418
        %v2421 = vshrl.u32 %v520, 16
        %v2423 = vrot.slane %v2421, 2
        %v2424 = vshll.u32 %v520, 16
        %v2426 = vrot.slane %v2424, 3
        %v2427 = vor.u32 %v2423, %v2426
        %v2428 = vsel %vm2356, %v2418, %v2427
        %v2430 = vsel %vm657, %v2363, 0
        %v2433 = vsel %vm657, %v2367, 0
        %v2436 = vsel %vm657, %v2371, 0
        %v2439 = vsel %vm657, %v2375, 0
        %v2442 = vsel %vm657, %v2379, 0
        %v2445 = vsel %vm657, %v2383, 0
        %v2448 = vsel %vm657, %v2387, 0
        %v2451 = vsel %vm657, %v2391, 0
        %v2454 = vsel %vm657, %v2395, 0
        %v2457 = vsel %vm657, %v2399, 0
        %v2460 = vsel %vm657, %v2403, 0
        %v2463 = vsel %vm657, %v2407, 0
        %v2466 = vsel %vm657, %v2411, 0
        %v2469 = vsel %vm657, %v2415, 0
        %v2472 = vsel %vm657, %v2419, 0
        %v2475 = vsel %vm657, %v2428, 0
        %v2478 = vsel %vm706, %v2355, 0
        %2480 = vmatprep.subr.bf16.mxu0 0
        %2481 = vmatpush1.bf16.msra.mxu0 %v2478
        %2482 = vmatprep.subr.bf16.mxu0 0
        %2483 = vmatpush1.bf16.msra.mxu0 0
        %2484 = vmatprep.subr.bf16.mxu0 0
        %2485 = vmatpush1.bf16.msra.mxu0 0
        %2486 = vmatprep.subr.bf16.mxu0 0
        %2487 = vmatpush1.bf16.msra.mxu0 0
        %2488 = vmatprep.subr.bf16.mxu0 0
        %2489 = vmatpush1.bf16.msra.mxu0 0
        %2490 = vmatprep.subr.bf16.mxu0 0
        %2491 = vmatpush1.bf16.msra.mxu0 0
        %2492 = vmatprep.subr.bf16.mxu0 0
        %2493 = vmatpush1.bf16.msra.mxu0 0
        %2494 = vmatprep.subr.bf16.mxu0 0
        %2495 = vmatpush1.bf16.msra.mxu0 0
        %2496 = vmatprep.subr.bf16.mxu0 0
        %2497 = vmatpush1.bf16.msra.mxu0 0
        %2498 = vmatprep.subr.bf16.mxu0 0
        %2499 = vmatpush1.bf16.msra.mxu0 0
        %2500 = vmatprep.subr.bf16.mxu0 0
        %2501 = vmatpush1.bf16.msra.mxu0 0
        %2502 = vmatprep.subr.bf16.mxu0 0
        %2503 = vmatpush1.bf16.msra.mxu0 0
        %2504 = vmatprep.subr.bf16.mxu0 0
        %2505 = vmatpush1.bf16.msra.mxu0 0
        %2506 = vmatprep.subr.bf16.mxu0 0
        %2507 = vmatpush1.bf16.msra.mxu0 0
        %2508 = vmatprep.subr.bf16.mxu0 0
        %2509 = vmatpush1.bf16.msra.mxu0 0
        %2510 = vmatprep.subr.bf16.mxu0 0
        %2511 = vmatpush1.bf16.msra.mxu0 0
        %2512 = vmatprep.mubr.bf16.mxu0 0
        %2513 = vmatmul.mubr.bf16.gmra.mrb[0].mxu0 %v2430
        %v2514 = vpop.f32.mrb[0].mxu0
        %v2515 = vadd.f32 0.0, %v2514
        %v2516 = vpop.f32.mrb[0].mxu0
        %v2517 = vpop.f32.mrb[0].mxu0
        %v2518 = vadd.f32 0.0, %v2517
        %v2519 = vpop.f32.mrb[0].mxu0
        %2520 = vmatprep.mubr.bf16.mxu0 0
        %2521 = vmatmul.mubr.bf16.gmra.mrb[0].mxu0 %v2433
        %v2522 = vpop.f32.mrb[0].mxu0
        %v2523 = vadd.f32 0.0, %v2522
        %v2524 = vpop.f32.mrb[0].mxu0
        %v2525 = vpop.f32.mrb[0].mxu0
        %v2526 = vadd.f32 0.0, %v2525
        %v2527 = vpop.f32.mrb[0].mxu0
        %2528 = vmatprep.mubr.bf16.mxu0 0
        %2529 = vmatmul.mubr.bf16.gmra.mrb[0].mxu0 %v2436
        %v2530 = vpop.f32.mrb[0].mxu0
        %v2531 = vadd.f32 0.0, %v2530
        %v2532 = vpop.f32.mrb[0].mxu0
        %v2533 = vpop.f32.mrb[0].mxu0
        %v2534 = vadd.f32 0.0, %v2533
        %v2535 = vpop.f32.mrb[0].mxu0
        %2536 = vmatprep.mubr.bf16.mxu0 0
        %2537 = vmatmul.mubr.bf16.gmra.mrb[0].mxu0 %v2439
        %v2538 = vpop.f32.mrb[0].mxu0
        %v2539 = vadd.f32 0.0, %v2538
        %v2540 = vpop.f32.mrb[0].mxu0
        %v2541 = vpop.f32.mrb[0].mxu0
        %v2542 = vadd.f32 0.0, %v2541
        %v2543 = vpop.f32.mrb[0].mxu0
        %2544 = vmatprep.mubr.bf16.mxu0 0
        %2545 = vmatmul.mubr.bf16.gmra.mrb[0].mxu0 %v2442
        %v2546 = vpop.f32.mrb[0].mxu0
        %v2547 = vadd.f32 0.0, %v2546
        %v2548 = vpop.f32.mrb[0].mxu0
        %v2549 = vpop.f32.mrb[0].mxu0
        %v2550 = vadd.f32 0.0, %v2549
        %v2551 = vpop.f32.mrb[0].mxu0
        %2552 = vmatprep.mubr.bf16.mxu0 0
        %2553 = vmatmul.mubr.bf16.gmra.mrb[0].mxu0 %v2445
        %v2554 = vpop.f32.mrb[0].mxu0
        %v2555 = vadd.f32 0.0, %v2554
        %v2556 = vpop.f32.mrb[0].mxu0
        %v2557 = vpop.f32.mrb[0].mxu0
        %v2558 = vadd.f32 0.0, %v2557
        %v2559 = vpop.f32.mrb[0].mxu0
        %2560 = vmatprep.mubr.bf16.mxu0 0
        %2561 = vmatmul.mubr.bf16.gmra.mrb[0].mxu0 %v2448
        %v2562 = vpop.f32.mrb[0].mxu0
        %v2563 = vadd.f32 0.0, %v2562
        %v2564 = vpop.f32.mrb[0].mxu0
        %v2565 = vpop.f32.mrb[0].mxu0
        %v2566 = vadd.f32 0.0, %v2565
        %v2567 = vpop.f32.mrb[0].mxu0
        %2568 = vmatprep.mubr.bf16.mxu0 0
        %2569 = vmatmul.mubr.bf16.gmra.mrb[0].mxu0 %v2451
        %v2570 = vpop.f32.mrb[0].mxu0
        %v2571 = vadd.f32 0.0, %v2570
        %v2572 = vpop.f32.mrb[0].mxu0
        %v2573 = vpop.f32.mrb[0].mxu0
        %v2574 = vadd.f32 0.0, %v2573
        %v2575 = vpop.f32.mrb[0].mxu0
        %2576 = vmatprep.mubr.bf16.mxu0 0
        %2577 = vmatmul.mubr.bf16.gmra.mrb[0].mxu0 %v2454
        %v2578 = vpop.f32.mrb[0].mxu0
        %v2579 = vadd.f32 0.0, %v2578
        %v2580 = vpop.f32.mrb[0].mxu0
        %v2581 = vpop.f32.mrb[0].mxu0
        %v2582 = vadd.f32 0.0, %v2581
        %v2583 = vpop.f32.mrb[0].mxu0
        %2584 = vmatprep.mubr.bf16.mxu0 0
        %2585 = vmatmul.mubr.bf16.gmra.mrb[0].mxu0 %v2457
        %v2586 = vpop.f32.mrb[0].mxu0
        %v2587 = vadd.f32 0.0, %v2586
        %v2588 = vpop.f32.mrb[0].mxu0
        %v2589 = vpop.f32.mrb[0].mxu0
        %v2590 = vadd.f32 0.0, %v2589
        %v2591 = vpop.f32.mrb[0].mxu0
        %2592 = vmatprep.mubr.bf16.mxu0 0
        %2593 = vmatmul.mubr.bf16.gmra.mrb[0].mxu0 %v2460
        %v2594 = vpop.f32.mrb[0].mxu0
        %v2595 = vadd.f32 0.0, %v2594
        %v2596 = vpop.f32.mrb[0].mxu0
        %v2597 = vpop.f32.mrb[0].mxu0
        %v2598 = vadd.f32 0.0, %v2597
        %v2599 = vpop.f32.mrb[0].mxu0
        %2600 = vmatprep.mubr.bf16.mxu0 0
        %2601 = vmatmul.mubr.bf16.gmra.mrb[0].mxu0 %v2463
        %v2602 = vpop.f32.mrb[0].mxu0
        %v2603 = vadd.f32 0.0, %v2602
        %v2604 = vpop.f32.mrb[0].mxu0
        %v2605 = vpop.f32.mrb[0].mxu0
        %v2606 = vadd.f32 0.0, %v2605
        %v2607 = vpop.f32.mrb[0].mxu0
        %2608 = vmatprep.mubr.bf16.mxu0 0
        %2609 = vmatmul.mubr.bf16.gmra.mrb[0].mxu0 %v2466
        %v2610 = vpop.f32.mrb[0].mxu0
        %v2611 = vadd.f32 0.0, %v2610
        %v2612 = vpop.f32.mrb[0].mxu0
        %v2613 = vpop.f32.mrb[0].mxu0
        %v2614 = vadd.f32 0.0, %v2613
        %v2615 = vpop.f32.mrb[0].mxu0
        %2616 = vmatprep.mubr.bf16.mxu0 0
        %2617 = vmatmul.mubr.bf16.gmra.mrb[0].mxu0 %v2469
        %v2618 = vpop.f32.mrb[0].mxu0
        %v2619 = vadd.f32 0.0, %v2618
        %v2620 = vpop.f32.mrb[0].mxu0
        %v2621 = vpop.f32.mrb[0].mxu0
        %v2622 = vadd.f32 0.0, %v2621
        %v2623 = vpop.f32.mrb[0].mxu0
        %2624 = vmatprep.mubr.bf16.mxu0 0
        %2625 = vmatmul.mubr.bf16.gmra.mrb[0].mxu0 %v2472
        %v2626 = vpop.f32.mrb[0].mxu0
        %v2627 = vadd.f32 0.0, %v2626
        %v2628 = vpop.f32.mrb[0].mxu0
        %v2629 = vpop.f32.mrb[0].mxu0
        %v2630 = vadd.f32 0.0, %v2629
        %v2631 = vpop.f32.mrb[0].mxu0
        %2632 = vmatprep.mubr.bf16.mxu0 0
        %2633 = vmatmul.mubr.bf16.gmra.mrb[0].mxu0 %v2475
        %v2634 = vpop.f32.mrb[0].mxu0
        %v2635 = vadd.f32 0.0, %v2634
        %v2636 = vpop.f32.mrb[0].mxu0
        %v2637 = vpop.f32.mrb[0].mxu0
        %v2638 = vadd.f32 0.0, %v2637
        %v2639 = vpop.f32.mrb[0].mxu0
        %2640 = vdwg.mxu0
        %v2641 = vadd.f32 %v2322, %v2515
        %v2642 = vadd.f32 %v2323, %v2518
        %v2643 = vadd.f32 %v2324, %v2523
        %v2644 = vadd.f32 %v2325, %v2526
        %v2645 = vadd.f32 %v2326, %v2531
        %v2646 = vadd.f32 %v2327, %v2534
        %v2647 = vadd.f32 %v2328, %v2539
        %v2648 = vadd.f32 %v2329, %v2542
        %v2649 = vadd.f32 %v2330, %v2547
        %v2650 = vadd.f32 %v2331, %v2550
        %v2651 = vadd.f32 %v2332, %v2555
        %v2652 = vadd.f32 %v2333, %v2558
        %v2653 = vadd.f32 %v2334, %v2563
        %v2654 = vadd.f32 %v2335, %v2566
        %v2655 = vadd.f32 %v2336, %v2571
        %v2656 = vadd.f32 %v2337, %v2574
        %v2657 = vadd.f32 %v2338, %v2579
        %v2658 = vadd.f32 %v2339, %v2582
        %v2659 = vadd.f32 %v2340, %v2587
        %v2660 = vadd.f32 %v2341, %v2590
        %v2661 = vadd.f32 %v2342, %v2595
        %v2662 = vadd.f32 %v2343, %v2598
        %v2663 = vadd.f32 %v2344, %v2603
        %v2664 = vadd.f32 %v2345, %v2606
        %v2665 = vadd.f32 %v2346, %v2611
        %v2666 = vadd.f32 %v2347, %v2614
        %v2667 = vadd.f32 %v2348, %v2619
        %v2668 = vadd.f32 %v2349, %v2622
        %v2669 = vadd.f32 %v2350, %v2627
        %v2670 = vadd.f32 %v2351, %v2630
        %v2671 = vadd.f32 %v2352, %v2635
        %v2672 = vadd.f32 %v2353, %v2638
        %s2673 = scalar_lea.vmem %s2, 32
        %v2674 = vld [vmem:[%s2673] sm:$0xf]
        %vm2675 = vcmask 1044480
        %v2676 = vrot.slane %v492, 3
        %v2677 = vrot.slane %v493, 3
        %v2678 = vsel %vm2675, %v2676, %v2677
        %v2679 = vrot.slane %v494, 3
        %v2680 = vsel %vm2675, %v2677, %v2679
        %v2681 = vrot.slane %v495, 3
        %v2682 = vsel %vm2675, %v2679, %v2681
        %v2683 = vrot.slane %v496, 3
        %v2684 = vsel %vm2675, %v2681, %v2683
        %v2685 = vrot.slane %v497, 3
        %v2686 = vsel %vm2675, %v2683, %v2685
        %v2687 = vrot.slane %v498, 3
        %v2688 = vsel %vm2675, %v2685, %v2687
        %v2689 = vrot.slane %v499, 3
        %v2690 = vsel %vm2675, %v2687, %v2689
        %v2691 = vrot.slane %v500, 3
        %v2692 = vsel %vm2675, %v2689, %v2691
        %v2693 = vrot.slane %v501, 3
        %v2694 = vsel %vm2675, %v2691, %v2693
        %v2695 = vrot.slane %v502, 3
        %v2696 = vsel %vm2675, %v2693, %v2695
        %v2697 = vrot.slane %v503, 3
        %v2698 = vsel %vm2675, %v2695, %v2697
        %v2699 = vrot.slane %v504, 3
        %v2700 = vsel %vm2675, %v2697, %v2699
        %v2701 = vrot.slane %v505, 3
        %v2702 = vsel %vm2675, %v2699, %v2701
        %v2703 = vrot.slane %v518, 3
        %v2704 = vsel %vm2675, %v2701, %v2703
        %v2705 = vrot.slane %v519, 3
        %v2706 = vsel %vm2675, %v2703, %v2705
        %v2707 = vrot.slane %v520, 3
        %v2708 = vsel %vm2675, %v2705, %v2707
        %v2710 = vsel %vm657, %v2678, 0
        %v2713 = vsel %vm657, %v2680, 0
        %v2716 = vsel %vm657, %v2682, 0
        %v2719 = vsel %vm657, %v2684, 0
        %v2722 = vsel %vm657, %v2686, 0
        %v2725 = vsel %vm657, %v2688, 0
        %v2728 = vsel %vm657, %v2690, 0
        %v2731 = vsel %vm657, %v2692, 0
        %v2734 = vsel %vm657, %v2694, 0
        %v2737 = vsel %vm657, %v2696, 0
        %v2740 = vsel %vm657, %v2698, 0
        %v2743 = vsel %vm657, %v2700, 0
        %v2746 = vsel %vm657, %v2702, 0
        %v2749 = vsel %vm657, %v2704, 0
        %v2752 = vsel %vm657, %v2706, 0
        %v2755 = vsel %vm657, %v2708, 0
        %v2758 = vsel %vm706, %v2674, 0
        %2760 = vmatprep.subr.bf16.mxu0 0
        %2761 = vmatpush1.bf16.msra.mxu0 %v2758
        %2762 = vmatprep.subr.bf16.mxu0 0
        %2763 = vmatpush1.bf16.msra.mxu0 0
        %2764 = vmatprep.subr.bf16.mxu0 0
        %2765 = vmatpush1.bf16.msra.mxu0 0
        %2766 = vmatprep.subr.bf16.mxu0 0
        %2767 = vmatpush1.bf16.msra.mxu0 0
        %2768 = vmatprep.subr.bf16.mxu0 0
        %2769 = vmatpush1.bf16.msra.mxu0 0
        %2770 = vmatprep.subr.bf16.mxu0 0
        %2771 = vmatpush1.bf16.msra.mxu0 0
        %2772 = vmatprep.subr.bf16.mxu0 0
        %2773 = vmatpush1.bf16.msra.mxu0 0
        %2774 = vmatprep.subr.bf16.mxu0 0
        %2775 = vmatpush1.bf16.msra.mxu0 0
        %2776 = vmatprep.subr.bf16.mxu0 0
        %2777 = vmatpush1.bf16.msra.mxu0 0
        %2778 = vmatprep.subr.bf16.mxu0 0
        %2779 = vmatpush1.bf16.msra.mxu0 0
        %2780 = vmatprep.subr.bf16.mxu0 0
        %2781 = vmatpush1.bf16.msra.mxu0 0
        %2782 = vmatprep.subr.bf16.mxu0 0
        %2783 = vmatpush1.bf16.msra.mxu0 0
        %2784 = vmatprep.subr.bf16.mxu0 0
        %2785 = vmatpush1.bf16.msra.mxu0 0
        %2786 = vmatprep.subr.bf16.mxu0 0
        %2787 = vmatpush1.bf16.msra.mxu0 0
        %2788 = vmatprep.subr.bf16.mxu0 0
        %2789 = vmatpush1.bf16.msra.mxu0 0
        %2790 = vmatprep.subr.bf16.mxu0 0
        %2791 = vmatpush1.bf16.msra.mxu0 0
        %2792 = vmatprep.mubr.bf16.mxu0 0
        %2793 = vmatmul.mubr.bf16.gmra.mrb[0].mxu0 %v2710
        %v2794 = vpop.f32.mrb[0].mxu0
        %v2795 = vadd.f32 0.0, %v2794
        %v2796 = vpop.f32.mrb[0].mxu0
        %v2797 = vpop.f32.mrb[0].mxu0
        %v2798 = vadd.f32 0.0, %v2797
        %v2799 = vpop.f32.mrb[0].mxu0
        %2800 = vmatprep.mubr.bf16.mxu0 0
        %2801 = vmatmul.mubr.bf16.gmra.mrb[0].mxu0 %v2713
        %v2802 = vpop.f32.mrb[0].mxu0
        %v2803 = vadd.f32 0.0, %v2802
        %v2804 = vpop.f32.mrb[0].mxu0
        %v2805 = vpop.f32.mrb[0].mxu0
        %v2806 = vadd.f32 0.0, %v2805
        %v2807 = vpop.f32.mrb[0].mxu0
        %2808 = vmatprep.mubr.bf16.mxu0 0
        %2809 = vmatmul.mubr.bf16.gmra.mrb[0].mxu0 %v2716
        %v2810 = vpop.f32.mrb[0].mxu0
        %v2811 = vadd.f32 0.0, %v2810
        %v2812 = vpop.f32.mrb[0].mxu0
        %v2813 = vpop.f32.mrb[0].mxu0
        %v2814 = vadd.f32 0.0, %v2813
        %v2815 = vpop.f32.mrb[0].mxu0
        %2816 = vmatprep.mubr.bf16.mxu0 0
        %2817 = vmatmul.mubr.bf16.gmra.mrb[0].mxu0 %v2719
        %v2818 = vpop.f32.mrb[0].mxu0
        %v2819 = vadd.f32 0.0, %v2818
        %v2820 = vpop.f32.mrb[0].mxu0
        %v2821 = vpop.f32.mrb[0].mxu0
        %v2822 = vadd.f32 0.0, %v2821
        %v2823 = vpop.f32.mrb[0].mxu0
        %2824 = vmatprep.mubr.bf16.mxu0 0
        %2825 = vmatmul.mubr.bf16.gmra.mrb[0].mxu0 %v2722
        %v2826 = vpop.f32.mrb[0].mxu0
        %v2827 = vadd.f32 0.0, %v2826
        %v2828 = vpop.f32.mrb[0].mxu0
        %v2829 = vpop.f32.mrb[0].mxu0
        %v2830 = vadd.f32 0.0, %v2829
        %v2831 = vpop.f32.mrb[0].mxu0
        %2832 = vmatprep.mubr.bf16.mxu0 0
        %2833 = vmatmul.mubr.bf16.gmra.mrb[0].mxu0 %v2725
        %v2834 = vpop.f32.mrb[0].mxu0
        %v2835 = vadd.f32 0.0, %v2834
        %v2836 = vpop.f32.mrb[0].mxu0
        %v2837 = vpop.f32.mrb[0].mxu0
        %v2838 = vadd.f32 0.0, %v2837
        %v2839 = vpop.f32.mrb[0].mxu0
        %2840 = vmatprep.mubr.bf16.mxu0 0
        %2841 = vmatmul.mubr.bf16.gmra.mrb[0].mxu0 %v2728
        %v2842 = vpop.f32.mrb[0].mxu0
        %v2843 = vadd.f32 0.0, %v2842
        %v2844 = vpop.f32.mrb[0].mxu0
        %v2845 = vpop.f32.mrb[0].mxu0
        %v2846 = vadd.f32 0.0, %v2845
        %v2847 = vpop.f32.mrb[0].mxu0
        %2848 = vmatprep.mubr.bf16.mxu0 0
        %2849 = vmatmul.mubr.bf16.gmra.mrb[0].mxu0 %v2731
        %v2850 = vpop.f32.mrb[0].mxu0
        %v2851 = vadd.f32 0.0, %v2850
        %v2852 = vpop.f32.mrb[0].mxu0
        %v2853 = vpop.f32.mrb[0].mxu0
        %v2854 = vadd.f32 0.0, %v2853
        %v2855 = vpop.f32.mrb[0].mxu0
        %2856 = vmatprep.mubr.bf16.mxu0 0
        %2857 = vmatmul.mubr.bf16.gmra.mrb[0].mxu0 %v2734
        %v2858 = vpop.f32.mrb[0].mxu0
        %v2859 = vadd.f32 0.0, %v2858
        %v2860 = vpop.f32.mrb[0].mxu0
        %v2861 = vpop.f32.mrb[0].mxu0
        %v2862 = vadd.f32 0.0, %v2861
        %v2863 = vpop.f32.mrb[0].mxu0
        %2864 = vmatprep.mubr.bf16.mxu0 0
        %2865 = vmatmul.mubr.bf16.gmra.mrb[0].mxu0 %v2737
        %v2866 = vpop.f32.mrb[0].mxu0
        %v2867 = vadd.f32 0.0, %v2866
        %v2868 = vpop.f32.mrb[0].mxu0
        %v2869 = vpop.f32.mrb[0].mxu0
        %v2870 = vadd.f32 0.0, %v2869
        %v2871 = vpop.f32.mrb[0].mxu0
        %2872 = vmatprep.mubr.bf16.mxu0 0
        %2873 = vmatmul.mubr.bf16.gmra.mrb[0].mxu0 %v2740
        %v2874 = vpop.f32.mrb[0].mxu0
        %v2875 = vadd.f32 0.0, %v2874
        %v2876 = vpop.f32.mrb[0].mxu0
        %v2877 = vpop.f32.mrb[0].mxu0
        %v2878 = vadd.f32 0.0, %v2877
        %v2879 = vpop.f32.mrb[0].mxu0
        %2880 = vmatprep.mubr.bf16.mxu0 0
        %2881 = vmatmul.mubr.bf16.gmra.mrb[0].mxu0 %v2743
        %v2882 = vpop.f32.mrb[0].mxu0
        %v2883 = vadd.f32 0.0, %v2882
        %v2884 = vpop.f32.mrb[0].mxu0
        %v2885 = vpop.f32.mrb[0].mxu0
        %v2886 = vadd.f32 0.0, %v2885
        %v2887 = vpop.f32.mrb[0].mxu0
        %2888 = vmatprep.mubr.bf16.mxu0 0
        %2889 = vmatmul.mubr.bf16.gmra.mrb[0].mxu0 %v2746
        %v2890 = vpop.f32.mrb[0].mxu0
        %v2891 = vadd.f32 0.0, %v2890
        %v2892 = vpop.f32.mrb[0].mxu0
        %v2893 = vpop.f32.mrb[0].mxu0
        %v2894 = vadd.f32 0.0, %v2893
        %v2895 = vpop.f32.mrb[0].mxu0
        %2896 = vmatprep.mubr.bf16.mxu0 0
        %2897 = vmatmul.mubr.bf16.gmra.mrb[0].mxu0 %v2749
        %v2898 = vpop.f32.mrb[0].mxu0
        %v2899 = vadd.f32 0.0, %v2898
        %v2900 = vpop.f32.mrb[0].mxu0
        %v2901 = vpop.f32.mrb[0].mxu0
        %v2902 = vadd.f32 0.0, %v2901
        %v2903 = vpop.f32.mrb[0].mxu0
        %2904 = vmatprep.mubr.bf16.mxu0 0
        %2905 = vmatmul.mubr.bf16.gmra.mrb[0].mxu0 %v2752
        %v2906 = vpop.f32.mrb[0].mxu0
        %v2907 = vadd.f32 0.0, %v2906
        %v2908 = vpop.f32.mrb[0].mxu0
        %v2909 = vpop.f32.mrb[0].mxu0
        %v2910 = vadd.f32 0.0, %v2909
        %v2911 = vpop.f32.mrb[0].mxu0
        %2912 = vmatprep.mubr.bf16.mxu0 0
        %2913 = vmatmul.mubr.bf16.gmra.mrb[0].mxu0 %v2755
        %v2914 = vpop.f32.mrb[0].mxu0
        %v2915 = vadd.f32 0.0, %v2914
        %v2916 = vpop.f32.mrb[0].mxu0
        %v2917 = vpop.f32.mrb[0].mxu0
        %v2918 = vadd.f32 0.0, %v2917
        %v2919 = vpop.f32.mrb[0].mxu0
        %2920 = vdwg.mxu0
        %v2921 = vadd.f32 %v2641, %v2795
        %v2922 = vadd.f32 %v2642, %v2798
        %v2923 = vadd.f32 %v2643, %v2803
        %v2924 = vadd.f32 %v2644, %v2806
        %v2925 = vadd.f32 %v2645, %v2811
        %v2926 = vadd.f32 %v2646, %v2814
        %v2927 = vadd.f32 %v2647, %v2819
        %v2928 = vadd.f32 %v2648, %v2822
        %v2929 = vadd.f32 %v2649, %v2827
        %v2930 = vadd.f32 %v2650, %v2830
        %v2931 = vadd.f32 %v2651, %v2835
        %v2932 = vadd.f32 %v2652, %v2838
        %v2933 = vadd.f32 %v2653, %v2843
        %v2934 = vadd.f32 %v2654, %v2846
        %v2935 = vadd.f32 %v2655, %v2851
        %v2936 = vadd.f32 %v2656, %v2854
        %v2937 = vadd.f32 %v2657, %v2859
        %v2938 = vadd.f32 %v2658, %v2862
        %v2939 = vadd.f32 %v2659, %v2867
        %v2940 = vadd.f32 %v2660, %v2870
        %v2941 = vadd.f32 %v2661, %v2875
        %v2942 = vadd.f32 %v2662, %v2878
        %v2943 = vadd.f32 %v2663, %v2883
        %v2944 = vadd.f32 %v2664, %v2886
        %v2945 = vadd.f32 %v2665, %v2891
        %v2946 = vadd.f32 %v2666, %v2894
        %v2947 = vadd.f32 %v2667, %v2899
        %v2948 = vadd.f32 %v2668, %v2902
        %v2949 = vadd.f32 %v2669, %v2907
        %v2950 = vadd.f32 %v2670, %v2910
        %v2951 = vadd.f32 %v2671, %v2915
        %v2952 = vadd.f32 %v2672, %v2918
        %v2953 = vpack.c.bf16 %v2922, %v2921
        %v2954 = vpack.c.bf16 %v2924, %v2923
        %v2955 = vpack.c.bf16 %v2926, %v2925
        %v2956 = vpack.c.bf16 %v2928, %v2927
        %v2957 = vpack.c.bf16 %v2930, %v2929
        %v2958 = vpack.c.bf16 %v2932, %v2931
        %v2959 = vpack.c.bf16 %v2934, %v2933
        %v2960 = vpack.c.bf16 %v2936, %v2935
        %v2961 = vpack.c.bf16 %v2938, %v2937
        %v2962 = vpack.c.bf16 %v2940, %v2939
        %v2963 = vpack.c.bf16 %v2942, %v2941
        %v2964 = vpack.c.bf16 %v2944, %v2943
        %v2965 = vpack.c.bf16 %v2946, %v2945
        %v2966 = vpack.c.bf16 %v2948, %v2947
        %v2967 = vpack.c.bf16 %v2950, %v2949
        %v2968 = vpack.c.bf16 %v2952, %v2951
        %v2985 = vunpack.c.l.b16 %v2953
        %v2986 = vunpack.c.h.b16 %v2953
        %v2987 = vunpack.c.l.b16 %v2954
        %v2988 = vunpack.c.h.b16 %v2954
        %v2989 = vunpack.c.l.b16 %v2955
        %v2990 = vunpack.c.h.b16 %v2955
        %v2991 = vunpack.c.l.b16 %v2956
        %v2992 = vunpack.c.h.b16 %v2956
        %v2993 = vunpack.c.l.b16 %v2957
        %v2994 = vunpack.c.h.b16 %v2957
        %v2995 = vunpack.c.l.b16 %v2958
        %v2996 = vunpack.c.h.b16 %v2958
        %v2997 = vunpack.c.l.b16 %v2959
        %v2998 = vunpack.c.h.b16 %v2959
        %v2999 = vunpack.c.l.b16 %v2960
        %v3000 = vunpack.c.h.b16 %v2960
        %v3001 = vunpack.c.l.b16 %v2961
        %v3002 = vunpack.c.h.b16 %v2961
        %v3003 = vunpack.c.l.b16 %v2962
        %v3004 = vunpack.c.h.b16 %v2962
        %v3005 = vunpack.c.l.b16 %v2963
        %v3006 = vunpack.c.h.b16 %v2963
        %v3007 = vunpack.c.l.b16 %v2964
        %v3008 = vunpack.c.h.b16 %v2964
        %v3009 = vunpack.c.l.b16 %v2965
        %v3010 = vunpack.c.h.b16 %v2965
        %v3011 = vunpack.c.l.b16 %v2966
        %v3012 = vunpack.c.h.b16 %v2966
        %v3013 = vunpack.c.l.b16 %v2967
        %v3014 = vunpack.c.h.b16 %v2967
        %v3015 = vunpack.c.l.b16 %v2968
        %v3016 = vunpack.c.h.b16 %v2968
        %v3017 = vpack.c.b16 %v2985, %v2985
        %v3018 = vpack.c.b16 %v2986, %v2986
        %v3019 = vpack.c.b16 %v2987, %v2987
        %v3020 = vpack.c.b16 %v2988, %v2988
        %v3021 = vpack.c.b16 %v2989, %v2989
        %v3022 = vpack.c.b16 %v2990, %v2990
        %v3023 = vpack.c.b16 %v2991, %v2991
        %v3024 = vpack.c.b16 %v2992, %v2992
        %v3025 = vpack.c.b16 %v2993, %v2993
        %v3026 = vpack.c.b16 %v2994, %v2994
        %v3027 = vpack.c.b16 %v2995, %v2995
        %v3028 = vpack.c.b16 %v2996, %v2996
        %v3029 = vpack.c.b16 %v2997, %v2997
        %v3030 = vpack.c.b16 %v2998, %v2998
        %v3031 = vpack.c.b16 %v2999, %v2999
        %v3032 = vpack.c.b16 %v3000, %v3000
        %v3033 = vpack.c.b16 %v3001, %v3001
        %v3034 = vpack.c.b16 %v3002, %v3002
        %v3035 = vpack.c.b16 %v3003, %v3003
        %v3036 = vpack.c.b16 %v3004, %v3004
        %v3037 = vpack.c.b16 %v3005, %v3005
        %v3038 = vpack.c.b16 %v3006, %v3006
        %v3039 = vpack.c.b16 %v3007, %v3007
        %v3040 = vpack.c.b16 %v3008, %v3008
        %v3041 = vpack.c.b16 %v3009, %v3009
        %v3042 = vpack.c.b16 %v3010, %v3010
        %v3043 = vpack.c.b16 %v3011, %v3011
        %v3044 = vpack.c.b16 %v3012, %v3012
        %v3045 = vpack.c.b16 %v3013, %v3013
        %v3046 = vpack.c.b16 %v3014, %v3014
        %v3047 = vpack.c.b16 %v3015, %v3015
        %v3048 = vpack.c.b16 %v3016, %v3016
        %3081 = vst [vmem:[%s337] sm:$0xf] %v3017
        %3082 = vst [vmem:[%s337 + $0x4] sm:$0xf] %v3018
        %3083 = vst [vmem:[%s337 + $0x8] sm:$0xf] %v3019
        %3084 = vst [vmem:[%s337 + $0xc] sm:$0xf] %v3020
        %3085 = vst [vmem:[%s337 + $0x10] sm:$0xf] %v3021
        %3086 = vst [vmem:[%s337 + $0x14] sm:$0xf] %v3022
        %3087 = vst [vmem:[%s337 + $0x18] sm:$0xf] %v3023
        %3088 = vst [vmem:[%s337 + $0x1c] sm:$0xf] %v3024
        %3089 = vst [vmem:[%s337 + $0x20] sm:$0xf] %v3025
        %3090 = vst [vmem:[%s337 + $0x24] sm:$0xf] %v3026
        %3091 = vst [vmem:[%s337 + $0x28] sm:$0xf] %v3027
        %3092 = vst [vmem:[%s337 + $0x2c] sm:$0xf] %v3028
        %3093 = vst [vmem:[%s337 + $0x30] sm:$0xf] %v3029
        %3094 = vst [vmem:[%s337 + $0x34] sm:$0xf] %v3030
        %3095 = vst [vmem:[%s337 + $0x38] sm:$0xf] %v3031
        %3096 = vst [vmem:[%s337 + $0x3c] sm:$0xf] %v3032
        %3097 = vst [vmem:[%s337 + $0x40] sm:$0xf] %v3033
        %3098 = vst [vmem:[%s337 + $0x44] sm:$0xf] %v3034
        %3099 = vst [vmem:[%s337 + $0x48] sm:$0xf] %v3035
        %3100 = vst [vmem:[%s337 + $0x4c] sm:$0xf] %v3036
        %3101 = vst [vmem:[%s337 + $0x50] sm:$0xf] %v3037
        %3102 = vst [vmem:[%s337 + $0x54] sm:$0xf] %v3038
        %3103 = vst [vmem:[%s337 + $0x58] sm:$0xf] %v3039
        %3104 = vst [vmem:[%s337 + $0x5c] sm:$0xf] %v3040
        %3105 = vst [vmem:[%s337 + $0x60] sm:$0xf] %v3041
        %3106 = vst [vmem:[%s337 + $0x64] sm:$0xf] %v3042
        %3107 = vst [vmem:[%s337 + $0x68] sm:$0xf] %v3043
        %3108 = vst [vmem:[%s337 + $0x6c] sm:$0xf] %v3044
        %3109 = vst [vmem:[%s337 + $0x70] sm:$0xf] %v3045
        %3110 = vst [vmem:[%s337 + $0x74] sm:$0xf] %v3046
        %3111 = vst [vmem:[%s337 + $0x78] sm:$0xf] %v3047
        %3112 = vst [vmem:[%s337 + $0x7c] sm:$0xf] %v3048
        %p3113 = scmp.eq.s32.totalorder %s29, 0
        // Predicated region
        $region37: #{tpu_custom_call.1} parent=35 // pred_check
          %p3114 = pneg %p3113
        $region38: #{tpu_custom_call.1} parent=35 // pred_check_branch
          %3116 = sbr.rel (%p3114) target = $region40
        $region39: #{tpu_custom_call.1} parent=35 // pred_region
          %3117 = vst [vmem:[%s343] sm:$0x1] 0.0
          %3118 = vst [vmem:[%s349] sm:$0x1] 0.0
        $region40: #{tpu_custom_call.1} parent=35 // pred_fallthru
          _
        %v3119 = vld [vmem:[%s380] sm:$0xff]
        %v3120 = vld [vmem:[%s380 + $0x8] sm:$0xff]
        %v3121 = vld [vmem:[%s380 + $0x10] sm:$0xff]
        %v3122 = vld [vmem:[%s380 + $0x18] sm:$0xff]
        %v3123 = vld [vmem:[%s380 + $0x20] sm:$0xff]
        %v3124 = vld [vmem:[%s380 + $0x28] sm:$0xff]
        %v3125 = vld [vmem:[%s380 + $0x30] sm:$0xff]
        %v3126 = vld [vmem:[%s380 + $0x38] sm:$0xff]
        %v3127 = vld [vmem:[%s380 + $0x40] sm:$0xff]
        %v3128 = vld [vmem:[%s380 + $0x48] sm:$0xff]
        %v3129 = vld [vmem:[%s380 + $0x50] sm:$0xff]
        %v3130 = vld [vmem:[%s380 + $0x58] sm:$0xff]
        %v3131 = vld [vmem:[%s380 + $0x60] sm:$0xff]
        %v3132 = vld [vmem:[%s380 + $0x68] sm:$0xff]
        %v3133 = vld [vmem:[%s380 + $0x70] sm:$0xff]
        %v3134 = vld [vmem:[%s380 + $0x78] sm:$0xff]
        %v3135 = vld [vmem:[%s380 + $0x80] sm:$0xff]
        %v3136 = vld [vmem:[%s380 + $0x88] sm:$0xff]
        %v3137 = vld [vmem:[%s380 + $0x90] sm:$0xff]
        %v3138 = vld [vmem:[%s380 + $0x98] sm:$0xff]
        %v3139 = vld [vmem:[%s380 + $0xa0] sm:$0xff]
        %v3140 = vld [vmem:[%s380 + $0xa8] sm:$0xff]
        %v3141 = vld [vmem:[%s380 + $0xb0] sm:$0xff]
        %v3142 = vld [vmem:[%s380 + $0xb8] sm:$0xff]
        %v3143 = vld [vmem:[%s380 + $0xc0] sm:$0xff]
        %v3144 = vld [vmem:[%s380 + $0xc8] sm:$0xff]
        %v3145 = vld [vmem:[%s380 + $0xd0] sm:$0xff]
        %v3146 = vld [vmem:[%s380 + $0xd8] sm:$0xff]
        %v3147 = vld [vmem:[%s380 + $0xe0] sm:$0xff]
        %v3148 = vld [vmem:[%s380 + $0xe8] sm:$0xff]
        %v3149 = vld [vmem:[%s380 + $0xf0] sm:$0xff]
        %v3150 = vld [vmem:[%s380 + $0xf8] sm:$0xff]
        %3152 = vset.pattern.permute.xlu0 0
        %3153 = vperm.xlu0 %3152, %v3119
        %v3154 = vpop.permute.xlu0 %3153
        %3157 = vset.pattern.permute.xlu0 0
        %3158 = vperm.xlu0 %3157, %v3120
        %v3159 = vpop.permute.xlu0 %3158
        %3162 = vset.pattern.permute.xlu0 0
        %3163 = vperm.xlu0 %3162, %v3121
        %v3164 = vpop.permute.xlu0 %3163
        %3167 = vset.pattern.permute.xlu0 0
        %3168 = vperm.xlu0 %3167, %v3122
        %v3169 = vpop.permute.xlu0 %3168
        %3172 = vset.pattern.permute.xlu0 0
        %3173 = vperm.xlu0 %3172, %v3123
        %v3174 = vpop.permute.xlu0 %3173
        %3177 = vset.pattern.permute.xlu0 0
        %3178 = vperm.xlu0 %3177, %v3124
        %v3179 = vpop.permute.xlu0 %3178
        %3182 = vset.pattern.permute.xlu0 0
        %3183 = vperm.xlu0 %3182, %v3125
        %v3184 = vpop.permute.xlu0 %3183
        %3187 = vset.pattern.permute.xlu0 0
        %3188 = vperm.xlu0 %3187, %v3126
        %v3189 = vpop.permute.xlu0 %3188
        %3192 = vset.pattern.permute.xlu0 0
        %3193 = vperm.xlu0 %3192, %v3127
        %v3194 = vpop.permute.xlu0 %3193
        %3197 = vset.pattern.permute.xlu0 0
        %3198 = vperm.xlu0 %3197, %v3128
        %v3199 = vpop.permute.xlu0 %3198
        %3202 = vset.pattern.permute.xlu0 0
        %3203 = vperm.xlu0 %3202, %v3129
        %v3204 = vpop.permute.xlu0 %3203
        %3207 = vset.pattern.permute.xlu0 0
        %3208 = vperm.xlu0 %3207, %v3130
        %v3209 = vpop.permute.xlu0 %3208
        %3212 = vset.pattern.permute.xlu0 0
        %3213 = vperm.xlu0 %3212, %v3131
        %v3214 = vpop.permute.xlu0 %3213
        %3217 = vset.pattern.permute.xlu0 0
        %3218 = vperm.xlu0 %3217, %v3132
        %v3219 = vpop.permute.xlu0 %3218
        %3222 = vset.pattern.permute.xlu0 0
        %3223 = vperm.xlu0 %3222, %v3133
        %v3224 = vpop.permute.xlu0 %3223
        %3227 = vset.pattern.permute.xlu0 0
        %3228 = vperm.xlu0 %3227, %v3134
        %v3229 = vpop.permute.xlu0 %3228
        %3232 = vset.pattern.permute.xlu0 0
        %3233 = vperm.xlu0 %3232, %v3135
        %v3234 = vpop.permute.xlu0 %3233
        %3237 = vset.pattern.permute.xlu0 0
        %3238 = vperm.xlu0 %3237, %v3136
        %v3239 = vpop.permute.xlu0 %3238
        %3242 = vset.pattern.permute.xlu0 0
        %3243 = vperm.xlu0 %3242, %v3137
        %v3244 = vpop.permute.xlu0 %3243
        %3247 = vset.pattern.permute.xlu0 0
        %3248 = vperm.xlu0 %3247, %v3138
        %v3249 = vpop.permute.xlu0 %3248
        %3252 = vset.pattern.permute.xlu0 0
        %3253 = vperm.xlu0 %3252, %v3139
        %v3254 = vpop.permute.xlu0 %3253
        %3257 = vset.pattern.permute.xlu0 0
        %3258 = vperm.xlu0 %3257, %v3140
        %v3259 = vpop.permute.xlu0 %3258
        %3262 = vset.pattern.permute.xlu0 0
        %3263 = vperm.xlu0 %3262, %v3141
        %v3264 = vpop.permute.xlu0 %3263
        %3267 = vset.pattern.permute.xlu0 0
        %3268 = vperm.xlu0 %3267, %v3142
        %v3269 = vpop.permute.xlu0 %3268
        %3272 = vset.pattern.permute.xlu0 0
        %3273 = vperm.xlu0 %3272, %v3143
        %v3274 = vpop.permute.xlu0 %3273
        %3277 = vset.pattern.permute.xlu0 0
        %3278 = vperm.xlu0 %3277, %v3144
        %v3279 = vpop.permute.xlu0 %3278
        %3282 = vset.pattern.permute.xlu0 0
        %3283 = vperm.xlu0 %3282, %v3145
        %v3284 = vpop.permute.xlu0 %3283
        %3287 = vset.pattern.permute.xlu0 0
        %3288 = vperm.xlu0 %3287, %v3146
        %v3289 = vpop.permute.xlu0 %3288
        %3292 = vset.pattern.permute.xlu0 0
        %3293 = vperm.xlu0 %3292, %v3147
        %v3294 = vpop.permute.xlu0 %3293
        %3297 = vset.pattern.permute.xlu0 0
        %3298 = vperm.xlu0 %3297, %v3148
        %v3299 = vpop.permute.xlu0 %3298
        %3302 = vset.pattern.permute.xlu0 0
        %3303 = vperm.xlu0 %3302, %v3149
        %v3304 = vpop.permute.xlu0 %3303
        %3307 = vset.pattern.permute.xlu0 0
        %3308 = vperm.xlu0 %3307, %v3150
        %v3309 = vpop.permute.xlu0 %3308
        %v3311 = vmul.f32 %v2921, %v3154
        %v3312 = vmul.f32 %v2922, %v3159
        %v3313 = vmul.f32 %v2923, %v3164
        %v3314 = vmul.f32 %v2924, %v3169
        %v3315 = vmul.f32 %v2925, %v3174
        %v3316 = vmul.f32 %v2926, %v3179
        %v3317 = vmul.f32 %v2927, %v3184
        %v3318 = vmul.f32 %v2928, %v3189
        %v3319 = vmul.f32 %v2929, %v3194
        %v3320 = vmul.f32 %v2930, %v3199
        %v3321 = vmul.f32 %v2931, %v3204
        %v3322 = vmul.f32 %v2932, %v3209
        %v3323 = vmul.f32 %v2933, %v3214
        %v3324 = vmul.f32 %v2934, %v3219
        %v3325 = vmul.f32 %v2935, %v3224
        %v3326 = vmul.f32 %v2936, %v3229
        %v3327 = vmul.f32 %v2937, %v3234
        %v3328 = vmul.f32 %v2938, %v3239
        %v3329 = vmul.f32 %v2939, %v3244
        %v3330 = vmul.f32 %v2940, %v3249
        %v3331 = vmul.f32 %v2941, %v3254
        %v3332 = vmul.f32 %v2942, %v3259
        %v3333 = vmul.f32 %v2943, %v3264
        %v3334 = vmul.f32 %v2944, %v3269
        %v3335 = vmul.f32 %v2945, %v3274
        %v3336 = vmul.f32 %v2946, %v3279
        %v3337 = vmul.f32 %v2947, %v3284
        %v3338 = vmul.f32 %v2948, %v3289
        %v3339 = vmul.f32 %v2949, %v3294
        %v3340 = vmul.f32 %v2950, %v3299
        %v3341 = vmul.f32 %v2951, %v3304
        %v3342 = vmul.f32 %v2952, %v3309
        %v3343 = vld [vmem:[%s343] sm:$0x1]
        %v3344 = vadd.f32 %v3311, %v3312
        %v3345 = vadd.f32 %v3344, %v3313
        %v3346 = vadd.f32 %v3345, %v3314
        %v3347 = vadd.f32 %v3346, %v3315
        %v3348 = vadd.f32 %v3347, %v3316
        %v3349 = vadd.f32 %v3348, %v3317
        %v3350 = vadd.f32 %v3349, %v3318
        %v3351 = vadd.f32 %v3350, %v3319
        %v3352 = vadd.f32 %v3351, %v3320
        %v3353 = vadd.f32 %v3352, %v3321
        %v3354 = vadd.f32 %v3353, %v3322
        %v3355 = vadd.f32 %v3354, %v3323
        %v3356 = vadd.f32 %v3355, %v3324
        %v3357 = vadd.f32 %v3356, %v3325
        %v3358 = vadd.f32 %v3357, %v3326
        %v3359 = vadd.f32 %v3358, %v3327
        %v3360 = vadd.f32 %v3359, %v3328
        %v3361 = vadd.f32 %v3360, %v3329
        %v3362 = vadd.f32 %v3361, %v3330
        %v3363 = vadd.f32 %v3362, %v3331
        %v3364 = vadd.f32 %v3363, %v3332
        %v3365 = vadd.f32 %v3364, %v3333
        %v3366 = vadd.f32 %v3365, %v3334
        %v3367 = vadd.f32 %v3366, %v3335
        %v3368 = vadd.f32 %v3367, %v3336
        %v3369 = vadd.f32 %v3368, %v3337
        %v3370 = vadd.f32 %v3369, %v3338
        %v3371 = vadd.f32 %v3370, %v3339
        %v3372 = vadd.f32 %v3371, %v3340
        %v3373 = vadd.f32 %v3372, %v3341
        %v3374 = vadd.f32 %v3373, %v3342
        %v3375 = vrot.slane %v3374, 4
        %v3376 = vadd.f32 %v3374, %v3375
        %v3377 = vrot.slane %v3376, 2
        %v3378 = vadd.f32 %v3376, %v3377
        %v3379 = vrot.slane %v3378, 1
        %v3380 = vadd.f32 %v3378, %v3379
        %v3381 = vadd.f32 %v3343, %v3380
        %3382 = vst [vmem:[%s343] sm:$0x1] %v3381
        %v3383 = vld [vmem:[%s349] sm:$0x1]
        %v3384 = vmul.f32 %v3311, %v2921
        %v3385 = vmul.f32 %v3312, %v2922
        %v3386 = vmul.f32 %v3313, %v2923
        %v3387 = vmul.f32 %v3314, %v2924
        %v3388 = vmul.f32 %v3315, %v2925
        %v3389 = vmul.f32 %v3316, %v2926
        %v3390 = vmul.f32 %v3317, %v2927
        %v3391 = vmul.f32 %v3318, %v2928
        %v3392 = vmul.f32 %v3319, %v2929
        %v3393 = vmul.f32 %v3320, %v2930
        %v3394 = vmul.f32 %v3321, %v2931
        %v3395 = vmul.f32 %v3322, %v2932
        %v3396 = vmul.f32 %v3323, %v2933
        %v3397 = vmul.f32 %v3324, %v2934
        %v3398 = vmul.f32 %v3325, %v2935
        %v3399 = vmul.f32 %v3326, %v2936
        %v3400 = vmul.f32 %v3327, %v2937
        %v3401 = vmul.f32 %v3328, %v2938
        %v3402 = vmul.f32 %v3329, %v2939
        %v3403 = vmul.f32 %v3330, %v2940
        %v3404 = vmul.f32 %v3331, %v2941
        %v3405 = vmul.f32 %v3332, %v2942
        %v3406 = vmul.f32 %v3333, %v2943
        %v3407 = vmul.f32 %v3334, %v2944
        %v3408 = vmul.f32 %v3335, %v2945
        %v3409 = vmul.f32 %v3336, %v2946
        %v3410 = vmul.f32 %v3337, %v2947
        %v3411 = vmul.f32 %v3338, %v2948
        %v3412 = vmul.f32 %v3339, %v2949
        %v3413 = vmul.f32 %v3340, %v2950
        %v3414 = vmul.f32 %v3341, %v2951
        %v3415 = vmul.f32 %v3342, %v2952
        %v3416 = vadd.f32 %v3384, %v3385
        %v3417 = vadd.f32 %v3416, %v3386
        %v3418 = vadd.f32 %v3417, %v3387
        %v3419 = vadd.f32 %v3418, %v3388
        %v3420 = vadd.f32 %v3419, %v3389
        %v3421 = vadd.f32 %v3420, %v3390
        %v3422 = vadd.f32 %v3421, %v3391
        %v3423 = vadd.f32 %v3422, %v3392
        %v3424 = vadd.f32 %v3423, %v3393
        %v3425 = vadd.f32 %v3424, %v3394
        %v3426 = vadd.f32 %v3425, %v3395
        %v3427 = vadd.f32 %v3426, %v3396
        %v3428 = vadd.f32 %v3427, %v3397
        %v3429 = vadd.f32 %v3428, %v3398
        %v3430 = vadd.f32 %v3429, %v3399
        %v3431 = vadd.f32 %v3430, %v3400
        %v3432 = vadd.f32 %v3431, %v3401
        %v3433 = vadd.f32 %v3432, %v3402
        %v3434 = vadd.f32 %v3433, %v3403
        %v3435 = vadd.f32 %v3434, %v3404
        %v3436 = vadd.f32 %v3435, %v3405
        %v3437 = vadd.f32 %v3436, %v3406
        %v3438 = vadd.f32 %v3437, %v3407
        %v3439 = vadd.f32 %v3438, %v3408
        %v3440 = vadd.f32 %v3439, %v3409
        %v3441 = vadd.f32 %v3440, %v3410
        %v3442 = vadd.f32 %v3441, %v3411
        %v3443 = vadd.f32 %v3442, %v3412
        %v3444 = vadd.f32 %v3443, %v3413
        %v3445 = vadd.f32 %v3444, %v3414
        %v3446 = vadd.f32 %v3445, %v3415
        %v3447 = vrot.slane %v3446, 4
        %v3448 = vadd.f32 %v3446, %v3447
        %v3449 = vrot.slane %v3448, 2
        %v3450 = vadd.f32 %v3448, %v3449
        %v3451 = vrot.slane %v3450, 1
        %v3452 = vadd.f32 %v3450, %v3451
        %v3453 = vadd.f32 %v3383, %v3452
        %3454 = vst [vmem:[%s349] sm:$0x1] %v3453
        %s3455 = sand.u32 %s163, 1
        %s3456 = scalar_lea.sflag [#allocation3], %s3455
        %s3457 = sand.u32 %s163, 1
        %s3458 = smul.addr %s3457, 128
        %s3459 = scalar_lea.vmem [#allocation2], %s3458
        %s3460 = sand.u32 %s24, 1
        %s3461 = scalar_lea.sflag [#allocation5], %s3460
        %s3462 = sand.u32 %s189, 1
        %s3463 = scalar_lea.vmem [#allocation4], %s3462
        %s3464 = sand.u32 %s24, 1
        %s3465 = scalar_lea.sflag [#allocation5], %s3464
        %s3466 = sand.u32 %s215, 1
        %s3467 = scalar_lea.vmem [#allocation6], %s3466
        // Predicated region
        $region41: #{tpu_custom_call.1} parent=35 // pred_check
          %p3468 = pneg %p173
        $region42: #{tpu_custom_call.1} parent=35 // pred_check_branch
          %3470 = sbr.rel (%p3468) target = $region44
        $region43: #{tpu_custom_call.1} parent=35 // pred_region
          %s3471 = smul.u32 %s28, 2
          %s3472 = sadd.s32 %s3471, %s29
          %s3473 = smul.u32 32, %s3472
          %s3475 = ssub.s32 2048, 2048
          %3476 = vsyncadd %s3456, %s3475
          %s3477 = smul.addr %s3473, 64
          %s3478 = scalar_lea.hbm %s4, %s3477
          %s3479 = sshll.u32 %s3459, 4
          %s3480 = int_to_ptr.vmem [resolvable:$true] %s3479
          %3485 = dma.vmem_to_hbm [thread:$0]  %s3480, 2048, %s3478, %s3456, 64, 64, 4
        $region44: #{tpu_custom_call.1} parent=35 // pred_fallthru
          _
        // Predicated region
        $region45: #{tpu_custom_call.1} parent=35 // pred_check
          %p3486 = pneg %p199
        $region46: #{tpu_custom_call.1} parent=35 // pred_check_branch
          %3488 = sbr.rel (%p3486) target = $region48
        $region47: #{tpu_custom_call.1} parent=35 // pred_region
          %s3490 = ssub.s32 16, 16
          %3491 = vsyncadd %s3461, %s3490
          %s3492 = smul.addr %s28, 16
          %s3493 = scalar_lea.hbm %s5, %s3492
          %s3495 = sshll.u32 %s3463, 4
          %s3496 = int_to_ptr.vmem [resolvable:$true] %s3495
          %3498 = dma.vmem_to_hbm [thread:$0]  %s3496, 16, %s3493, %s3461
        $region48: #{tpu_custom_call.1} parent=35 // pred_fallthru
          _
        // Predicated region
        $region49: #{tpu_custom_call.1} parent=35 // pred_check
          %p3499 = pneg %p225
        $region50: #{tpu_custom_call.1} parent=35 // pred_check_branch
          %3501 = sbr.rel (%p3499) target = $region52
        $region51: #{tpu_custom_call.1} parent=35 // pred_region
          %s3503 = ssub.s32 16, 16
          %3504 = vsyncadd %s3465, %s3503
          %s3505 = smul.addr %s28, 16
          %s3506 = scalar_lea.hbm %s6, %s3505
          %s3508 = sshll.u32 %s3467, 4
          %s3509 = int_to_ptr.vmem [resolvable:$true] %s3508
          %3511 = dma.vmem_to_hbm [thread:$0]  %s3509, 16, %s3506, %s3465
        $region52: #{tpu_custom_call.1} parent=35 // pred_fallthru
          _
      $region36: #{tpu_custom_call.1} parent=5 // pred_fallthru
        _
      %p3512 = scmp.le.s32.totalorder 2, %s19
      // Predicated region
      $region53: #{tpu_custom_call.1} parent=5 // pred_check
        %p3513 = pneg %p3512
      $region54: #{tpu_custom_call.1} parent=5 // pred_check_branch
        %3515 = sbr.rel (%p3513) target = $region56
      $region55: #{tpu_custom_call.1} parent=5 // pred_region
        %s3516 = ssub.s32 %s19, 2
        // Predicated region
        $region57: #{tpu_custom_call.1} parent=55 // pred_check
          %p3517 = pneg %p179
        $region58: #{tpu_custom_call.1} parent=55 // pred_check_branch
          %3519 = sbr.rel (%p3517) target = $region60
        $region59: #{tpu_custom_call.1} parent=55 // pred_region
          %s3520 = sand.u32 %s164, 1
          %s3521 = scalar_lea.sflag [#allocation3], %s3520
          %s3522 = sand.u32 %s164, 1
          %s3523 = smul.addr %s3522, 128
          %s3524 = scalar_lea.vmem [#allocation2], %s3523
          %3525 = dma.done %s3521, 2048
        $region60: #{tpu_custom_call.1} parent=55 // pred_fallthru
          _
        // Predicated region
        $region61: #{tpu_custom_call.1} parent=55 // pred_check
          %p3526 = pneg %p205
        $region62: #{tpu_custom_call.1} parent=55 // pred_check_branch
          %3528 = sbr.rel (%p3526) target = $region64
        $region63: #{tpu_custom_call.1} parent=55 // pred_region
          %s3529 = sand.u32 %s25, 1
          %s3530 = scalar_lea.sflag [#allocation5], %s3529
          %s3531 = sand.u32 %s190, 1
          %s3532 = scalar_lea.vmem [#allocation4], %s3531
          %3533 = dma.done %s3530, 16
        $region64: #{tpu_custom_call.1} parent=55 // pred_fallthru
          _
        // Predicated region
        $region65: #{tpu_custom_call.1} parent=55 // pred_check
          %p3534 = pneg %p231
        $region66: #{tpu_custom_call.1} parent=55 // pred_check_branch
          %3536 = sbr.rel (%p3534) target = $region68
        $region67: #{tpu_custom_call.1} parent=55 // pred_region
          %s3537 = sand.u32 %s25, 1
          %s3538 = scalar_lea.sflag [#allocation5], %s3537
          %s3539 = sand.u32 %s216, 1
          %s3540 = scalar_lea.vmem [#allocation6], %s3539
          %3541 = dma.done %s3538, 16
        $region68: #{tpu_custom_call.1} parent=55 // pred_fallthru
          _
      $region56: #{tpu_custom_call.1} parent=5 // pred_fallthru
        _
    $region6: #{tpu_custom_call.1} parent=1 // loop_footer
      %s23 = sadd.s32 1, %s19
    $region7: #{tpu_custom_call.1} parent=1 // loop_footer_branch
      %18 = sbr.rel target = $region3
    $region8: #{tpu_custom_call.1} parent=1 // loop_exit
      _
    %3542 = vsyncpa [#allocation3], 1
    %s3543 = scalar_lea.sflag [#allocation3], 1
    %3544 = vsyncpa %s3543, 1
    %3545 = vsyncpa [#allocation5], 1
    %s3546 = scalar_lea.sflag [#allocation5], 1
    %3547 = vsyncpa %s3546, 1

</llo_original>
